<compile_context>
chip_gen: v6e
topology: v6e:2x2x1
jax: 0.10.0
libtpu: 0.0.40
codegen_flags: <defaults>
</compile_context>

<pallas_src>
import functools

import jax
import jax.numpy as jnp
from jax import lax
from jax.experimental import pallas as pl
from jax.experimental.pallas import tpu as pltpu


# ----------------------------------------------------------------------------
# In-kernel helpers (values are channel-major, lane-flattened (C, Bt*H*W)).
# ----------------------------------------------------------------------------
def _tap(x, d, size):
    """t[:, p] = x[:, p + d] via a static XLU lane rotate.

    Wrap-around only lands on lattice positions that are never read when
    producing valid outputs, so those lanes may hold garbage.
    """
    if d == 0:
        return x
    # pltpu.roll follows jnp.roll semantics (out[p] = in[(p - shift) % n]),
    # so shift = size - d yields out[p] = in[p + d].
    return pltpu.roll(x, size - d, 1)


def _conv3x3_flat(x, w_ref, b_ref, conv_idx, cin, cout, dil, row, size):
    """3x3 VALID conv on the dilated flat lattice.

    x:   (cin, size) f32, flat layout with row stride `row`, dilation `dil`.
    out: (cout, size) f32; valid only at lattice positions that stay inside
         the valid window (invalid lanes hold garbage, never read).
    """
    acc = None
    for t in range(9):
        dy, dx = divmod(t, 3)
        d = dil * (dy * row + dx)
        tap = _tap(x, d, size).astype(jnp.bfloat16)           # bf16 MXU operand
        w = w_ref[conv_idx * 9 + t, :cout, :cin]               # (cout, cin) bf16
        part = jnp.dot(w, tap, preferred_element_type=jnp.float32)
        acc = part if acc is None else acc + part
    return acc + b_ref[conv_idx, :cout, :]                     # f32 bias, lane bcast


def _encoder_kernel(x_ref, w_ref, b_ref, *out_refs, chs, row, size):
    n_blocks = len(chs) - 1
    x = x_ref[...].astype(jnp.float32)                         # (C0, Bt*H*W)
    dil = 1
    for blk in range(n_blocks):
        cin, cout = chs[blk], chs[blk + 1]
        y = _conv3x3_flat(x, w_ref, b_ref, 2 * blk, cin, cout, dil, row, size)
        y = jnp.maximum(y, 0.0)                                # ReLU (f32 VPU)
        y = _conv3x3_flat(y, w_ref, b_ref, 2 * blk + 1, cout, cout, dil, row, size)
        # Lane-dense (>=256 lanes), unmasked store of the block feature map.
        out_refs[blk][...] = y.astype(out_refs[blk].dtype)
        if blk < n_blocks - 1:
            # Fused 2x2 / stride-2 max-pool: max over the 4 corners of each
            # window, in place on the dilated lattice (3 rolls + 3 maxes,
            # no reshapes / no lane compaction).  Next block runs at 2*dil.
            x = jnp.maximum(
                jnp.maximum(y, _tap(y, dil, size)),
                jnp.maximum(_tap(y, dil * row, size), _tap(y, dil * (row + 1), size)),
            )
            dil *= 2
        # (The pool after the last block is discarded by the reference
        #  forward, so it is skipped; semantics are identical.)


# ----------------------------------------------------------------------------
# Wrapper: pack weights, tile the batch, one pallas_call, unpack to NCHW.
# ----------------------------------------------------------------------------
def encoder_forward(x_nchw, params, *, batch_tile=None):
    """x_nchw: (N, C0, H, W) f32.  params: list of (w1, b1, w2, b2), w in HWIO.

    Returns the list of per-block feature maps in NCHW, matching the PyTorch
    Encoder.forward output list.
    """
    N, C0, H, W = x_nchw.shape
    n_blocks = len(params)
    chs = (C0,) + tuple(w1.shape[-1] for (w1, _, _, _) in params)
    n_convs = 2 * n_blocks
    cmax = max(chs)

    # Batch tiling: fold Bt images into the matmul lane axis; keep the
    # "parallel" grid even so it balances across v7x's two TensorCores.
    if batch_tile is None:
        batch_tile = N // 2 if (N % 2 == 0 and N >= 2) else 1
    Bt = batch_tile
    assert N % Bt == 0, (N, Bt)
    size = Bt * H * W

    # Pack all conv weights into ONE bf16 slab (tap-major, zero-padded to
    # cmax x cmax) and all biases into ONE f32 slab -> 3 input pipelines.
    w_slab = jnp.zeros((n_convs * 9, cmax, cmax), jnp.float32)
    b_slab = jnp.zeros((n_convs, cmax, 1), jnp.float32)
    ci = 0
    for (w1, b1, w2, b2) in params:
        for w, b in ((w1, b1), (w2, b2)):
            cin, cout = int(w.shape[2]), int(w.shape[3])
            # HWIO (3,3,cin,cout) -> (tap, cout, cin), tap = dy*3 + dx.
            wt = jnp.transpose(w, (0, 1, 3, 2)).reshape(9, cout, cin)
            w_slab = w_slab.at[ci * 9:(ci + 1) * 9, :cout, :cin].set(wt)
            b_slab = b_slab.at[ci, :cout, 0].set(b)
            ci += 1
    w_slab = w_slab.astype(jnp.bfloat16)

    # Lane-flattened, channel-major input: (C0, N*H*W).
    x_flat = jnp.transpose(x_nchw, (1, 0, 2, 3)).reshape(C0, N * H * W)

    in_specs = [
        pl.BlockSpec((C0, size), lambda n: (0, n)),
        pl.BlockSpec((n_convs * 9, cmax, cmax), lambda n: (0, 0, 0)),
        pl.BlockSpec((n_convs, cmax, 1), lambda n: (0, 0, 0)),
    ]
    out_specs = [
        pl.BlockSpec((chs[b + 1], size), lambda n: (0, n)) for b in range(n_blocks)
    ]
    out_shape = [
        jax.ShapeDtypeStruct((chs[b + 1], N * H * W), x_nchw.dtype)
        for b in range(n_blocks)
    ]

    kernel = functools.partial(_encoder_kernel, chs=chs, row=W, size=size)
    outs = pl.pallas_call(
        kernel,
        out_shape=out_shape,
        grid=(N // Bt,),
        in_specs=in_specs,
        out_specs=out_specs,
        compiler_params=pltpu.CompilerParams(
            dimension_semantics=("parallel",),
            vmem_limit_bytes=32 * 1024 * 1024,   # explicit; v7x-safe
        ),
    )(x_flat, w_slab, b_slab)

    # Unpack: block b's valid outputs live on the original HxW lattice with
    # dilation 2**b; strided-slice + transpose back to NCHW (cheap XLA ops).
    ftrs = []
    s, h, w = 1, H, W
    for b, y in enumerate(outs):
        hb, wb = h - 4, w - 4
        y = y.reshape(chs[b + 1], N, H, W)
        y = y[:, :, 0:s * (hb - 1) + 1:s, 0:s * (wb - 1) + 1:s]  # (Cout, N, hb, wb)
        ftrs.append(jnp.transpose(y, (1, 0, 2, 3)))               # NCHW
        h, w, s = hb // 2, wb // 2, 2 * s
    return ftrs


# ----------------------------------------------------------------------------
# Deterministic parameter init + pure-JAX reference for validation.
# ----------------------------------------------------------------------------
def init_params(key, chs):
    params = []
    for i in range(len(chs) - 1):
        cin, cout = chs[i], chs[i + 1]
        key, k1, k2, k3, k4 = jax.random.split(key, 5)
        w1 = 0.1 * jax.random.normal(k1, (3, 3, cin, cout), jnp.float32)
        b1 = 0.1 * jax.random.normal(k2, (cout,), jnp.float32)
        w2 = 0.1 * jax.random.normal(k3, (3, 3, cout, cout), jnp.float32)
        b2 = 0.1 * jax.random.normal(k4, (cout,), jnp.float32)
        params.append((w1, b1, w2, b2))
    return params


def _conv_ref(x_nchw, w_hwio, b):
    w_oihw = jnp.transpose(w_hwio, (3, 2, 0, 1))
    y = lax.conv_general_dilated(
        x_nchw, w_oihw, (1, 1), "VALID",
        dimension_numbers=("NCHW", "OIHW", "NCHW"))
    return y + b[None, :, None, None]


def encoder_ref(x_nchw, params):
    x = x_nchw
    ftrs = []
    for (w1, b1, w2, b2) in params:
        x = jnp.maximum(_conv_ref(x, w1, b1), 0.0)
        x = _conv_ref(x, w2, b2)
        ftrs.append(x)
        x = lax.reduce_window(x, -jnp.inf, lax.max,
                              (1, 1, 2, 2), (1, 1, 2, 2), "VALID")
    return ftrs


if __name__ == "__main__":
    key = jax.random.PRNGKey(0)
    kx, kp = jax.random.split(key)

    # Small config consistent with the module: chs=(4, 8, 16), 16x16 input.
    chs = (4, 8, 16)
    x = jax.random.normal(kx, (2, chs[0], 16, 16), jnp.float32)  # NCHW
    params = init_params(kp, chs)

    ftrs = encoder_forward(x, params)
    ftrs = [jax.block_until_ready(f) for f in ftrs]

    refs = encoder_ref(x, params)
    assert len(ftrs) == len(refs)
    for f, r in zip(ftrs, refs):
        assert f.shape == r.shape, (f.shape, r.shape)
        # bf16 MXU operands (explicit) with f32 accumulation -> 2e-2 tolerance.
        assert jnp.allclose(f, r, atol=2e-2, rtol=2e-2), float(
            jnp.max(jnp.abs(f - r)))

    print("KERNEL_OK")
</pallas_src>

<mosaic_0001>
module attributes {stable_mosaic.version = 11 : i64} {
  func.func @_encoder_kernel(%arg0: i32, %arg1: memref<4x256xf32, #tpu.memory_space<vmem>>, %arg2: memref<36x16x16xbf16, #tpu.memory_space<vmem>>, %arg3: memref<4x16x1xf32, #tpu.memory_space<vmem>>, %arg4: memref<8x256xf32, #tpu.memory_space<vmem>>, %arg5: memref<16x256xf32, #tpu.memory_space<vmem>>) attributes {dimension_semantics = [#tpu.dimension_semantics<parallel>], iteration_bounds = array<i64: 2>, scalar_prefetch = 0 : i64, scratch_operands = 0 : i64, tpu.core_type = #tpu.core_type<tc>, window_params = [{transform_indices = @transform_0, window_bounds = array<i64: 4, 256>}, {pipeline_mode = #tpu.pipeline_mode<synchronous>, transform_indices = @transform_1, window_bounds = array<i64: 36, 16, 16>}, {pipeline_mode = #tpu.pipeline_mode<synchronous>, transform_indices = @transform_2, window_bounds = array<i64: 4, 16, 1>}, {transform_indices = @transform_3, window_bounds = array<i64: 8, 256>}, {transform_indices = @transform_4, window_bounds = array<i64: 16, 256>}]} {
    %c0 = arith.constant 0 : index
    %c0_0 = arith.constant 0 : index
    %0 = vector.load %arg1[%c0, %c0_0] : memref<4x256xf32, #tpu.memory_space<vmem>>, vector<4x256xf32>
    %1 = arith.truncf %0 : vector<4x256xf32> to vector<4x256xbf16>
    %c0_1 = arith.constant 0 : index
    %c0_2 = arith.constant 0 : index
    %c0_3 = arith.constant 0 : index
    %2 = vector.load %arg2[%c0_1, %c0_2, %c0_3] : memref<36x16x16xbf16, #tpu.memory_space<vmem>>, vector<1x8x4xbf16>
    %3 = vector.shape_cast %2 : vector<1x8x4xbf16> to vector<8x4xbf16>
    %cst = arith.constant dense<0.000000e+00> : vector<8x256xf32>
    %4 = tpu.matmul %3, %1, %cst {dimension_numbers = #tpu.dot_dimension_numbers<[1], [0], [0], [1], [0, 0, 1, 1], [], []>} : vector<8x4xbf16>, vector<4x256xbf16>, vector<8x256xf32> -> vector<8x256xf32>
    %c255_i32 = arith.constant 255 : i32
    %5 = tpu.dynamic_rotate %0 by %c255_i32 dim 1 : vector<4x256xf32>, i32 -> vector<4x256xf32>
    %6 = arith.truncf %5 : vector<4x256xf32> to vector<4x256xbf16>
    %c1 = arith.constant 1 : index
    %c0_4 = arith.constant 0 : index
    %c0_5 = arith.constant 0 : index
    %7 = vector.load %arg2[%c1, %c0_4, %c0_5] : memref<36x16x16xbf16, #tpu.memory_space<vmem>>, vector<1x8x4xbf16>
    %8 = vector.shape_cast %7 : vector<1x8x4xbf16> to vector<8x4xbf16>
    %cst_6 = arith.constant dense<0.000000e+00> : vector<8x256xf32>
    %9 = tpu.matmul %8, %6, %cst_6 {dimension_numbers = #tpu.dot_dimension_numbers<[1], [0], [0], [1], [0, 0, 1, 1], [], []>} : vector<8x4xbf16>, vector<4x256xbf16>, vector<8x256xf32> -> vector<8x256xf32>
    %10 = arith.addf %4, %9 : vector<8x256xf32>
    %c254_i32 = arith.constant 254 : i32
    %11 = tpu.dynamic_rotate %0 by %c254_i32 dim 1 : vector<4x256xf32>, i32 -> vector<4x256xf32>
    %12 = arith.truncf %11 : vector<4x256xf32> to vector<4x256xbf16>
    %c2 = arith.constant 2 : index
    %c0_7 = arith.constant 0 : index
    %c0_8 = arith.constant 0 : index
    %13 = vector.load %arg2[%c2, %c0_7, %c0_8] : memref<36x16x16xbf16, #tpu.memory_space<vmem>>, vector<1x8x4xbf16>
    %14 = vector.shape_cast %13 : vector<1x8x4xbf16> to vector<8x4xbf16>
    %cst_9 = arith.constant dense<0.000000e+00> : vector<8x256xf32>
    %15 = tpu.matmul %14, %12, %cst_9 {dimension_numbers = #tpu.dot_dimension_numbers<[1], [0], [0], [1], [0, 0, 1, 1], [], []>} : vector<8x4xbf16>, vector<4x256xbf16>, vector<8x256xf32> -> vector<8x256xf32>
    %16 = arith.addf %10, %15 : vector<8x256xf32>
    %c240_i32 = arith.constant 240 : i32
    %17 = tpu.dynamic_rotate %0 by %c240_i32 dim 1 : vector<4x256xf32>, i32 -> vector<4x256xf32>
    %18 = arith.truncf %17 : vector<4x256xf32> to vector<4x256xbf16>
    %c3 = arith.constant 3 : index
    %c0_10 = arith.constant 0 : index
    %c0_11 = arith.constant 0 : index
    %19 = vector.load %arg2[%c3, %c0_10, %c0_11] : memref<36x16x16xbf16, #tpu.memory_space<vmem>>, vector<1x8x4xbf16>
    %20 = vector.shape_cast %19 : vector<1x8x4xbf16> to vector<8x4xbf16>
    %cst_12 = arith.constant dense<0.000000e+00> : vector<8x256xf32>
    %21 = tpu.matmul %20, %18, %cst_12 {dimension_numbers = #tpu.dot_dimension_numbers<[1], [0], [0], [1], [0, 0, 1, 1], [], []>} : vector<8x4xbf16>, vector<4x256xbf16>, vector<8x256xf32> -> vector<8x256xf32>
    %22 = arith.addf %16, %21 : vector<8x256xf32>
    %c239_i32 = arith.constant 239 : i32
    %23 = tpu.dynamic_rotate %0 by %c239_i32 dim 1 : vector<4x256xf32>, i32 -> vector<4x256xf32>
    %24 = arith.truncf %23 : vector<4x256xf32> to vector<4x256xbf16>
    %c4 = arith.constant 4 : index
    %c0_13 = arith.constant 0 : index
    %c0_14 = arith.constant 0 : index
    %25 = vector.load %arg2[%c4, %c0_13, %c0_14] : memref<36x16x16xbf16, #tpu.memory_space<vmem>>, vector<1x8x4xbf16>
    %26 = vector.shape_cast %25 : vector<1x8x4xbf16> to vector<8x4xbf16>
    %cst_15 = arith.constant dense<0.000000e+00> : vector<8x256xf32>
    %27 = tpu.matmul %26, %24, %cst_15 {dimension_numbers = #tpu.dot_dimension_numbers<[1], [0], [0], [1], [0, 0, 1, 1], [], []>} : vector<8x4xbf16>, vector<4x256xbf16>, vector<8x256xf32> -> vector<8x256xf32>
    %28 = arith.addf %22, %27 : vector<8x256xf32>
    %c238_i32 = arith.constant 238 : i32
    %29 = tpu.dynamic_rotate %0 by %c238_i32 dim 1 : vector<4x256xf32>, i32 -> vector<4x256xf32>
    %30 = arith.truncf %29 : vector<4x256xf32> to vector<4x256xbf16>
    %c5 = arith.constant 5 : index
    %c0_16 = arith.constant 0 : index
    %c0_17 = arith.constant 0 : index
    %31 = vector.load %arg2[%c5, %c0_16, %c0_17] : memref<36x16x16xbf16, #tpu.memory_space<vmem>>, vector<1x8x4xbf16>
    %32 = vector.shape_cast %31 : vector<1x8x4xbf16> to vector<8x4xbf16>
    %cst_18 = arith.constant dense<0.000000e+00> : vector<8x256xf32>
    %33 = tpu.matmul %32, %30, %cst_18 {dimension_numbers = #tpu.dot_dimension_numbers<[1], [0], [0], [1], [0, 0, 1, 1], [], []>} : vector<8x4xbf16>, vector<4x256xbf16>, vector<8x256xf32> -> vector<8x256xf32>
    %34 = arith.addf %28, %33 : vector<8x256xf32>
    %c224_i32 = arith.constant 224 : i32
    %35 = tpu.dynamic_rotate %0 by %c224_i32 dim 1 : vector<4x256xf32>, i32 -> vector<4x256xf32>
    %36 = arith.truncf %35 : vector<4x256xf32> to vector<4x256xbf16>
    %c6 = arith.constant 6 : index
    %c0_19 = arith.constant 0 : index
    %c0_20 = arith.constant 0 : index
    %37 = vector.load %arg2[%c6, %c0_19, %c0_20] : memref<36x16x16xbf16, #tpu.memory_space<vmem>>, vector<1x8x4xbf16>
    %38 = vector.shape_cast %37 : vector<1x8x4xbf16> to vector<8x4xbf16>
    %cst_21 = arith.constant dense<0.000000e+00> : vector<8x256xf32>
    %39 = tpu.matmul %38, %36, %cst_21 {dimension_numbers = #tpu.dot_dimension_numbers<[1], [0], [0], [1], [0, 0, 1, 1], [], []>} : vector<8x4xbf16>, vector<4x256xbf16>, vector<8x256xf32> -> vector<8x256xf32>
    %40 = arith.addf %34, %39 : vector<8x256xf32>
    %c223_i32 = arith.constant 223 : i32
    %41 = tpu.dynamic_rotate %0 by %c223_i32 dim 1 : vector<4x256xf32>, i32 -> vector<4x256xf32>
    %42 = arith.truncf %41 : vector<4x256xf32> to vector<4x256xbf16>
    %c7 = arith.constant 7 : index
    %c0_22 = arith.constant 0 : index
    %c0_23 = arith.constant 0 : index
    %43 = vector.load %arg2[%c7, %c0_22, %c0_23] : memref<36x16x16xbf16, #tpu.memory_space<vmem>>, vector<1x8x4xbf16>
    %44 = vector.shape_cast %43 : vector<1x8x4xbf16> to vector<8x4xbf16>
    %cst_24 = arith.constant dense<0.000000e+00> : vector<8x256xf32>
    %45 = tpu.matmul %44, %42, %cst_24 {dimension_numbers = #tpu.dot_dimension_numbers<[1], [0], [0], [1], [0, 0, 1, 1], [], []>} : vector<8x4xbf16>, vector<4x256xbf16>, vector<8x256xf32> -> vector<8x256xf32>
    %46 = arith.addf %40, %45 : vector<8x256xf32>
    %c222_i32 = arith.constant 222 : i32
    %47 = tpu.dynamic_rotate %0 by %c222_i32 dim 1 : vector<4x256xf32>, i32 -> vector<4x256xf32>
    %48 = arith.truncf %47 : vector<4x256xf32> to vector<4x256xbf16>
    %c8 = arith.constant 8 : index
    %c0_25 = arith.constant 0 : index
    %c0_26 = arith.constant 0 : index
    %49 = vector.load %arg2[%c8, %c0_25, %c0_26] : memref<36x16x16xbf16, #tpu.memory_space<vmem>>, vector<1x8x4xbf16>
    %50 = vector.shape_cast %49 : vector<1x8x4xbf16> to vector<8x4xbf16>
    %cst_27 = arith.constant dense<0.000000e+00> : vector<8x256xf32>
    %51 = tpu.matmul %50, %48, %cst_27 {dimension_numbers = #tpu.dot_dimension_numbers<[1], [0], [0], [1], [0, 0, 1, 1], [], []>} : vector<8x4xbf16>, vector<4x256xbf16>, vector<8x256xf32> -> vector<8x256xf32>
    %52 = arith.addf %46, %51 : vector<8x256xf32>
    %c0_28 = arith.constant 0 : index
    %c0_29 = arith.constant 0 : index
    %c0_30 = arith.constant 0 : index
    %53 = vector.load %arg3[%c0_28, %c0_29, %c0_30] : memref<4x16x1xf32, #tpu.memory_space<vmem>>, vector<1x8x1xf32>
    %54 = vector.shape_cast %53 : vector<1x8x1xf32> to vector<8x1xf32>
    %55 = vector.broadcast %54 : vector<8x1xf32> to vector<8x256xf32>
    %56 = arith.addf %52, %55 : vector<8x256xf32>
    %cst_31 = arith.constant 0.000000e+00 : f32
    %57 = vector.broadcast %cst_31 : f32 to vector<8x256xf32>
    %58 = arith.maximumf %56, %57 : vector<8x256xf32>
    %59 = arith.truncf %58 : vector<8x256xf32> to vector<8x256xbf16>
    %c9 = arith.constant 9 : index
    %c0_32 = arith.constant 0 : index
    %c0_33 = arith.constant 0 : index
    %60 = vector.load %arg2[%c9, %c0_32, %c0_33] : memref<36x16x16xbf16, #tpu.memory_space<vmem>>, vector<1x8x8xbf16>
    %61 = vector.shape_cast %60 : vector<1x8x8xbf16> to vector<8x8xbf16>
    %cst_34 = arith.constant dense<0.000000e+00> : vector<8x256xf32>
    %62 = tpu.matmul %61, %59, %cst_34 {dimension_numbers = #tpu.dot_dimension_numbers<[1], [0], [0], [1], [0, 0, 1, 1], [], []>} : vector<8x8xbf16>, vector<8x256xbf16>, vector<8x256xf32> -> vector<8x256xf32>
    %c255_i32_35 = arith.constant 255 : i32
    %63 = tpu.dynamic_rotate %58 by %c255_i32_35 dim 1 : vector<8x256xf32>, i32 -> vector<8x256xf32>
    %64 = arith.truncf %63 : vector<8x256xf32> to vector<8x256xbf16>
    %c10 = arith.constant 10 : index
    %c0_36 = arith.constant 0 : index
    %c0_37 = arith.constant 0 : index
    %65 = vector.load %arg2[%c10, %c0_36, %c0_37] : memref<36x16x16xbf16, #tpu.memory_space<vmem>>, vector<1x8x8xbf16>
    %66 = vector.shape_cast %65 : vector<1x8x8xbf16> to vector<8x8xbf16>
    %cst_38 = arith.constant dense<0.000000e+00> : vector<8x256xf32>
    %67 = tpu.matmul %66, %64, %cst_38 {dimension_numbers = #tpu.dot_dimension_numbers<[1], [0], [0], [1], [0, 0, 1, 1], [], []>} : vector<8x8xbf16>, vector<8x256xbf16>, vector<8x256xf32> -> vector<8x256xf32>
    %68 = arith.addf %62, %67 : vector<8x256xf32>
    %c254_i32_39 = arith.constant 254 : i32
    %69 = tpu.dynamic_rotate %58 by %c254_i32_39 dim 1 : vector<8x256xf32>, i32 -> vector<8x256xf32>
    %70 = arith.truncf %69 : vector<8x256xf32> to vector<8x256xbf16>
    %c11 = arith.constant 11 : index
    %c0_40 = arith.constant 0 : index
    %c0_41 = arith.constant 0 : index
    %71 = vector.load %arg2[%c11, %c0_40, %c0_41] : memref<36x16x16xbf16, #tpu.memory_space<vmem>>, vector<1x8x8xbf16>
    %72 = vector.shape_cast %71 : vector<1x8x8xbf16> to vector<8x8xbf16>
    %cst_42 = arith.constant dense<0.000000e+00> : vector<8x256xf32>
    %73 = tpu.matmul %72, %70, %cst_42 {dimension_numbers = #tpu.dot_dimension_numbers<[1], [0], [0], [1], [0, 0, 1, 1], [], []>} : vector<8x8xbf16>, vector<8x256xbf16>, vector<8x256xf32> -> vector<8x256xf32>
    %74 = arith.addf %68, %73 : vector<8x256xf32>
    %c240_i32_43 = arith.constant 240 : i32
    %75 = tpu.dynamic_rotate %58 by %c240_i32_43 dim 1 : vector<8x256xf32>, i32 -> vector<8x256xf32>
    %76 = arith.truncf %75 : vector<8x256xf32> to vector<8x256xbf16>
    %c12 = arith.constant 12 : index
    %c0_44 = arith.constant 0 : index
    %c0_45 = arith.constant 0 : index
    %77 = vector.load %arg2[%c12, %c0_44, %c0_45] : memref<36x16x16xbf16, #tpu.memory_space<vmem>>, vector<1x8x8xbf16>
    %78 = vector.shape_cast %77 : vector<1x8x8xbf16> to vector<8x8xbf16>
    %cst_46 = arith.constant dense<0.000000e+00> : vector<8x256xf32>
    %79 = tpu.matmul %78, %76, %cst_46 {dimension_numbers = #tpu.dot_dimension_numbers<[1], [0], [0], [1], [0, 0, 1, 1], [], []>} : vector<8x8xbf16>, vector<8x256xbf16>, vector<8x256xf32> -> vector<8x256xf32>
    %80 = arith.addf %74, %79 : vector<8x256xf32>
    %c239_i32_47 = arith.constant 239 : i32
    %81 = tpu.dynamic_rotate %58 by %c239_i32_47 dim 1 : vector<8x256xf32>, i32 -> vector<8x256xf32>
    %82 = arith.truncf %81 : vector<8x256xf32> to vector<8x256xbf16>
    %c13 = arith.constant 13 : index
    %c0_48 = arith.constant 0 : index
    %c0_49 = arith.constant 0 : index
    %83 = vector.load %arg2[%c13, %c0_48, %c0_49] : memref<36x16x16xbf16, #tpu.memory_space<vmem>>, vector<1x8x8xbf16>
    %84 = vector.shape_cast %83 : vector<1x8x8xbf16> to vector<8x8xbf16>
    %cst_50 = arith.constant dense<0.000000e+00> : vector<8x256xf32>
    %85 = tpu.matmul %84, %82, %cst_50 {dimension_numbers = #tpu.dot_dimension_numbers<[1], [0], [0], [1], [0, 0, 1, 1], [], []>} : vector<8x8xbf16>, vector<8x256xbf16>, vector<8x256xf32> -> vector<8x256xf32>
    %86 = arith.addf %80, %85 : vector<8x256xf32>
    %c238_i32_51 = arith.constant 238 : i32
    %87 = tpu.dynamic_rotate %58 by %c238_i32_51 dim 1 : vector<8x256xf32>, i32 -> vector<8x256xf32>
    %88 = arith.truncf %87 : vector<8x256xf32> to vector<8x256xbf16>
    %c14 = arith.constant 14 : index
    %c0_52 = arith.constant 0 : index
    %c0_53 = arith.constant 0 : index
    %89 = vector.load %arg2[%c14, %c0_52, %c0_53] : memref<36x16x16xbf16, #tpu.memory_space<vmem>>, vector<1x8x8xbf16>
    %90 = vector.shape_cast %89 : vector<1x8x8xbf16> to vector<8x8xbf16>
    %cst_54 = arith.constant dense<0.000000e+00> : vector<8x256xf32>
    %91 = tpu.matmul %90, %88, %cst_54 {dimension_numbers = #tpu.dot_dimension_numbers<[1], [0], [0], [1], [0, 0, 1, 1], [], []>} : vector<8x8xbf16>, vector<8x256xbf16>, vector<8x256xf32> -> vector<8x256xf32>
    %92 = arith.addf %86, %91 : vector<8x256xf32>
    %c224_i32_55 = arith.constant 224 : i32
    %93 = tpu.dynamic_rotate %58 by %c224_i32_55 dim 1 : vector<8x256xf32>, i32 -> vector<8x256xf32>
    %94 = arith.truncf %93 : vector<8x256xf32> to vector<8x256xbf16>
    %c15 = arith.constant 15 : index
    %c0_56 = arith.constant 0 : index
    %c0_57 = arith.constant 0 : index
    %95 = vector.load %arg2[%c15, %c0_56, %c0_57] : memref<36x16x16xbf16, #tpu.memory_space<vmem>>, vector<1x8x8xbf16>
    %96 = vector.shape_cast %95 : vector<1x8x8xbf16> to vector<8x8xbf16>
    %cst_58 = arith.constant dense<0.000000e+00> : vector<8x256xf32>
    %97 = tpu.matmul %96, %94, %cst_58 {dimension_numbers = #tpu.dot_dimension_numbers<[1], [0], [0], [1], [0, 0, 1, 1], [], []>} : vector<8x8xbf16>, vector<8x256xbf16>, vector<8x256xf32> -> vector<8x256xf32>
    %98 = arith.addf %92, %97 : vector<8x256xf32>
    %c223_i32_59 = arith.constant 223 : i32
    %99 = tpu.dynamic_rotate %58 by %c223_i32_59 dim 1 : vector<8x256xf32>, i32 -> vector<8x256xf32>
    %100 = arith.truncf %99 : vector<8x256xf32> to vector<8x256xbf16>
    %c16 = arith.constant 16 : index
    %c0_60 = arith.constant 0 : index
    %c0_61 = arith.constant 0 : index
    %101 = vector.load %arg2[%c16, %c0_60, %c0_61] : memref<36x16x16xbf16, #tpu.memory_space<vmem>>, vector<1x8x8xbf16>
    %102 = vector.shape_cast %101 : vector<1x8x8xbf16> to vector<8x8xbf16>
    %cst_62 = arith.constant dense<0.000000e+00> : vector<8x256xf32>
    %103 = tpu.matmul %102, %100, %cst_62 {dimension_numbers = #tpu.dot_dimension_numbers<[1], [0], [0], [1], [0, 0, 1, 1], [], []>} : vector<8x8xbf16>, vector<8x256xbf16>, vector<8x256xf32> -> vector<8x256xf32>
    %104 = arith.addf %98, %103 : vector<8x256xf32>
    %c222_i32_63 = arith.constant 222 : i32
    %105 = tpu.dynamic_rotate %58 by %c222_i32_63 dim 1 : vector<8x256xf32>, i32 -> vector<8x256xf32>
    %106 = arith.truncf %105 : vector<8x256xf32> to vector<8x256xbf16>
    %c17 = arith.constant 17 : index
    %c0_64 = arith.constant 0 : index
    %c0_65 = arith.constant 0 : index
    %107 = vector.load %arg2[%c17, %c0_64, %c0_65] : memref<36x16x16xbf16, #tpu.memory_space<vmem>>, vector<1x8x8xbf16>
    %108 = vector.shape_cast %107 : vector<1x8x8xbf16> to vector<8x8xbf16>
    %cst_66 = arith.constant dense<0.000000e+00> : vector<8x256xf32>
    %109 = tpu.matmul %108, %106, %cst_66 {dimension_numbers = #tpu.dot_dimension_numbers<[1], [0], [0], [1], [0, 0, 1, 1], [], []>} : vector<8x8xbf16>, vector<8x256xbf16>, vector<8x256xf32> -> vector<8x256xf32>
    %110 = arith.addf %104, %109 : vector<8x256xf32>
    %c1_67 = arith.constant 1 : index
    %c0_68 = arith.constant 0 : index
    %c0_69 = arith.constant 0 : index
    %111 = vector.load %arg3[%c1_67, %c0_68, %c0_69] : memref<4x16x1xf32, #tpu.memory_space<vmem>>, vector<1x8x1xf32>
    %112 = vector.shape_cast %111 : vector<1x8x1xf32> to vector<8x1xf32>
    %113 = vector.broadcast %112 : vector<8x1xf32> to vector<8x256xf32>
    %114 = arith.addf %110, %113 : vector<8x256xf32>
    %c0_70 = arith.constant 0 : index
    %c0_71 = arith.constant 0 : index
    %115 = vector.load %arg4[%c0_70, %c0_71] : memref<8x256xf32, #tpu.memory_space<vmem>>, vector<8x256xf32>
    tpu.vector_store %arg4[%c0_70, %c0_71], %114 {strides = array<i32>} : memref<8x256xf32, #tpu.memory_space<vmem>>, vector<8x256xf32>,
    %c255_i32_72 = arith.constant 255 : i32
    %116 = tpu.dynamic_rotate %114 by %c255_i32_72 dim 1 : vector<8x256xf32>, i32 -> vector<8x256xf32>
    %117 = arith.maximumf %114, %116 : vector<8x256xf32>
    %c240_i32_73 = arith.constant 240 : i32
    %118 = tpu.dynamic_rotate %114 by %c240_i32_73 dim 1 : vector<8x256xf32>, i32 -> vector<8x256xf32>
    %c239_i32_74 = arith.constant 239 : i32
    %119 = tpu.dynamic_rotate %114 by %c239_i32_74 dim 1 : vector<8x256xf32>, i32 -> vector<8x256xf32>
    %120 = arith.maximumf %118, %119 : vector<8x256xf32>
    %121 = arith.maximumf %117, %120 : vector<8x256xf32>
    %122 = arith.truncf %121 : vector<8x256xf32> to vector<8x256xbf16>
    %c18 = arith.constant 18 : index
    %c0_75 = arith.constant 0 : index
    %c0_76 = arith.constant 0 : index
    %123 = vector.load %arg2[%c18, %c0_75, %c0_76] : memref<36x16x16xbf16, #tpu.memory_space<vmem>>, vector<1x16x8xbf16>
    %124 = vector.shape_cast %123 : vector<1x16x8xbf16> to vector<16x8xbf16>
    %cst_77 = arith.constant dense<0.000000e+00> : vector<16x256xf32>
    %125 = tpu.matmul %124, %122, %cst_77 {dimension_numbers = #tpu.dot_dimension_numbers<[1], [0], [0], [1], [0, 0, 1, 1], [], []>} : vector<16x8xbf16>, vector<8x256xbf16>, vector<16x256xf32> -> vector<16x256xf32>
    %c254_i32_78 = arith.constant 254 : i32
    %126 = tpu.dynamic_rotate %121 by %c254_i32_78 dim 1 : vector<8x256xf32>, i32 -> vector<8x256xf32>
    %127 = arith.truncf %126 : vector<8x256xf32> to vector<8x256xbf16>
    %c19 = arith.constant 19 : index
    %c0_79 = arith.constant 0 : index
    %c0_80 = arith.constant 0 : index
    %128 = vector.load %arg2[%c19, %c0_79, %c0_80] : memref<36x16x16xbf16, #tpu.memory_space<vmem>>, vector<1x16x8xbf16>
    %129 = vector.shape_cast %128 : vector<1x16x8xbf16> to vector<16x8xbf16>
    %cst_81 = arith.constant dense<0.000000e+00> : vector<16x256xf32>
    %130 = tpu.matmul %129, %127, %cst_81 {dimension_numbers = #tpu.dot_dimension_numbers<[1], [0], [0], [1], [0, 0, 1, 1], [], []>} : vector<16x8xbf16>, vector<8x256xbf16>, vector<16x256xf32> -> vector<16x256xf32>
    %131 = arith.addf %125, %130 : vector<16x256xf32>
    %c252_i32 = arith.constant 252 : i32
    %132 = tpu.dynamic_rotate %121 by %c252_i32 dim 1 : vector<8x256xf32>, i32 -> vector<8x256xf32>
    %133 = arith.truncf %132 : vector<8x256xf32> to vector<8x256xbf16>
    %c20 = arith.constant 20 : index
    %c0_82 = arith.constant 0 : index
    %c0_83 = arith.constant 0 : index
    %134 = vector.load %arg2[%c20, %c0_82, %c0_83] : memref<36x16x16xbf16, #tpu.memory_space<vmem>>, vector<1x16x8xbf16>
    %135 = vector.shape_cast %134 : vector<1x16x8xbf16> to vector<16x8xbf16>
    %cst_84 = arith.constant dense<0.000000e+00> : vector<16x256xf32>
    %136 = tpu.matmul %135, %133, %cst_84 {dimension_numbers = #tpu.dot_dimension_numbers<[1], [0], [0], [1], [0, 0, 1, 1], [], []>} : vector<16x8xbf16>, vector<8x256xbf16>, vector<16x256xf32> -> vector<16x256xf32>
    %137 = arith.addf %131, %136 : vector<16x256xf32>
    %c224_i32_85 = arith.constant 224 : i32
    %138 = tpu.dynamic_rotate %121 by %c224_i32_85 dim 1 : vector<8x256xf32>, i32 -> vector<8x256xf32>
    %139 = arith.truncf %138 : vector<8x256xf32> to vector<8x256xbf16>
    %c21 = arith.constant 21 : index
    %c0_86 = arith.constant 0 : index
    %c0_87 = arith.constant 0 : index
    %140 = vector.load %arg2[%c21, %c0_86, %c0_87] : memref<36x16x16xbf16, #tpu.memory_space<vmem>>, vector<1x16x8xbf16>
    %141 = vector.shape_cast %140 : vector<1x16x8xbf16> to vector<16x8xbf16>
    %cst_88 = arith.constant dense<0.000000e+00> : vector<16x256xf32>
    %142 = tpu.matmul %141, %139, %cst_88 {dimension_numbers = #tpu.dot_dimension_numbers<[1], [0], [0], [1], [0, 0, 1, 1], [], []>} : vector<16x8xbf16>, vector<8x256xbf16>, vector<16x256xf32> -> vector<16x256xf32>
    %143 = arith.addf %137, %142 : vector<16x256xf32>
    %c222_i32_89 = arith.constant 222 : i32
    %144 = tpu.dynamic_rotate %121 by %c222_i32_89 dim 1 : vector<8x256xf32>, i32 -> vector<8x256xf32>
    %145 = arith.truncf %144 : vector<8x256xf32> to vector<8x256xbf16>
    %c22 = arith.constant 22 : index
    %c0_90 = arith.constant 0 : index
    %c0_91 = arith.constant 0 : index
    %146 = vector.load %arg2[%c22, %c0_90, %c0_91] : memref<36x16x16xbf16, #tpu.memory_space<vmem>>, vector<1x16x8xbf16>
    %147 = vector.shape_cast %146 : vector<1x16x8xbf16> to vector<16x8xbf16>
    %cst_92 = arith.constant dense<0.000000e+00> : vector<16x256xf32>
    %148 = tpu.matmul %147, %145, %cst_92 {dimension_numbers = #tpu.dot_dimension_numbers<[1], [0], [0], [1], [0, 0, 1, 1], [], []>} : vector<16x8xbf16>, vector<8x256xbf16>, vector<16x256xf32> -> vector<16x256xf32>
    %149 = arith.addf %143, %148 : vector<16x256xf32>
    %c220_i32 = arith.constant 220 : i32
    %150 = tpu.dynamic_rotate %121 by %c220_i32 dim 1 : vector<8x256xf32>, i32 -> vector<8x256xf32>
    %151 = arith.truncf %150 : vector<8x256xf32> to vector<8x256xbf16>
    %c23 = arith.constant 23 : index
    %c0_93 = arith.constant 0 : index
    %c0_94 = arith.constant 0 : index
    %152 = vector.load %arg2[%c23, %c0_93, %c0_94] : memref<36x16x16xbf16, #tpu.memory_space<vmem>>, vector<1x16x8xbf16>
    %153 = vector.shape_cast %152 : vector<1x16x8xbf16> to vector<16x8xbf16>
    %cst_95 = arith.constant dense<0.000000e+00> : vector<16x256xf32>
    %154 = tpu.matmul %153, %151, %cst_95 {dimension_numbers = #tpu.dot_dimension_numbers<[1], [0], [0], [1], [0, 0, 1, 1], [], []>} : vector<16x8xbf16>, vector<8x256xbf16>, vector<16x256xf32> -> vector<16x256xf32>
    %155 = arith.addf %149, %154 : vector<16x256xf32>
    %c192_i32 = arith.constant 192 : i32
    %156 = tpu.dynamic_rotate %121 by %c192_i32 dim 1 : vector<8x256xf32>, i32 -> vector<8x256xf32>
    %157 = arith.truncf %156 : vector<8x256xf32> to vector<8x256xbf16>
    %c24 = arith.constant 24 : index
    %c0_96 = arith.constant 0 : index
    %c0_97 = arith.constant 0 : index
    %158 = vector.load %arg2[%c24, %c0_96, %c0_97] : memref<36x16x16xbf16, #tpu.memory_space<vmem>>, vector<1x16x8xbf16>
    %159 = vector.shape_cast %158 : vector<1x16x8xbf16> to vector<16x8xbf16>
    %cst_98 = arith.constant dense<0.000000e+00> : vector<16x256xf32>
    %160 = tpu.matmul %159, %157, %cst_98 {dimension_numbers = #tpu.dot_dimension_numbers<[1], [0], [0], [1], [0, 0, 1, 1], [], []>} : vector<16x8xbf16>, vector<8x256xbf16>, vector<16x256xf32> -> vector<16x256xf32>
    %161 = arith.addf %155, %160 : vector<16x256xf32>
    %c190_i32 = arith.constant 190 : i32
    %162 = tpu.dynamic_rotate %121 by %c190_i32 dim 1 : vector<8x256xf32>, i32 -> vector<8x256xf32>
    %163 = arith.truncf %162 : vector<8x256xf32> to vector<8x256xbf16>
    %c25 = arith.constant 25 : index
    %c0_99 = arith.constant 0 : index
    %c0_100 = arith.constant 0 : index
    %164 = vector.load %arg2[%c25, %c0_99, %c0_100] : memref<36x16x16xbf16, #tpu.memory_space<vmem>>, vector<1x16x8xbf16>
    %165 = vector.shape_cast %164 : vector<1x16x8xbf16> to vector<16x8xbf16>
    %cst_101 = arith.constant dense<0.000000e+00> : vector<16x256xf32>
    %166 = tpu.matmul %165, %163, %cst_101 {dimension_numbers = #tpu.dot_dimension_numbers<[1], [0], [0], [1], [0, 0, 1, 1], [], []>} : vector<16x8xbf16>, vector<8x256xbf16>, vector<16x256xf32> -> vector<16x256xf32>
    %167 = arith.addf %161, %166 : vector<16x256xf32>
    %c188_i32 = arith.constant 188 : i32
    %168 = tpu.dynamic_rotate %121 by %c188_i32 dim 1 : vector<8x256xf32>, i32 -> vector<8x256xf32>
    %169 = arith.truncf %168 : vector<8x256xf32> to vector<8x256xbf16>
    %c26 = arith.constant 26 : index
    %c0_102 = arith.constant 0 : index
    %c0_103 = arith.constant 0 : index
    %170 = vector.load %arg2[%c26, %c0_102, %c0_103] : memref<36x16x16xbf16, #tpu.memory_space<vmem>>, vector<1x16x8xbf16>
    %171 = vector.shape_cast %170 : vector<1x16x8xbf16> to vector<16x8xbf16>
    %cst_104 = arith.constant dense<0.000000e+00> : vector<16x256xf32>
    %172 = tpu.matmul %171, %169, %cst_104 {dimension_numbers = #tpu.dot_dimension_numbers<[1], [0], [0], [1], [0, 0, 1, 1], [], []>} : vector<16x8xbf16>, vector<8x256xbf16>, vector<16x256xf32> -> vector<16x256xf32>
    %173 = arith.addf %167, %172 : vector<16x256xf32>
    %c2_105 = arith.constant 2 : index
    %c0_106 = arith.constant 0 : index
    %c0_107 = arith.constant 0 : index
    %174 = vector.load %arg3[%c2_105, %c0_106, %c0_107] : memref<4x16x1xf32, #tpu.memory_space<vmem>>, vector<1x16x1xf32>
    %175 = vector.shape_cast %174 : vector<1x16x1xf32> to vector<16x1xf32>
    %176 = vector.broadcast %175 : vector<16x1xf32> to vector<16x256xf32>
    %177 = arith.addf %173, %176 : vector<16x256xf32>
    %cst_108 = arith.constant 0.000000e+00 : f32
    %178 = vector.broadcast %cst_108 : f32 to vector<16x256xf32>
    %179 = arith.maximumf %177, %178 : vector<16x256xf32>
    %180 = arith.truncf %179 : vector<16x256xf32> to vector<16x256xbf16>
    %c27 = arith.constant 27 : index
    %c0_109 = arith.constant 0 : index
    %c0_110 = arith.constant 0 : index
    %181 = vector.load %arg2[%c27, %c0_109, %c0_110] : memref<36x16x16xbf16, #tpu.memory_space<vmem>>, vector<1x16x16xbf16>
    %182 = vector.shape_cast %181 : vector<1x16x16xbf16> to vector<16x16xbf16>
    %cst_111 = arith.constant dense<0.000000e+00> : vector<16x256xf32>
    %183 = tpu.matmul %182, %180, %cst_111 {dimension_numbers = #tpu.dot_dimension_numbers<[1], [0], [0], [1], [0, 0, 1, 1], [], []>} : vector<16x16xbf16>, vector<16x256xbf16>, vector<16x256xf32> -> vector<16x256xf32>
    %c254_i32_112 = arith.constant 254 : i32
    %184 = tpu.dynamic_rotate %179 by %c254_i32_112 dim 1 : vector<16x256xf32>, i32 -> vector<16x256xf32>
    %185 = arith.truncf %184 : vector<16x256xf32> to vector<16x256xbf16>
    %c28 = arith.constant 28 : index
    %c0_113 = arith.constant 0 : index
    %c0_114 = arith.constant 0 : index
    %186 = vector.load %arg2[%c28, %c0_113, %c0_114] : memref<36x16x16xbf16, #tpu.memory_space<vmem>>, vector<1x16x16xbf16>
    %187 = vector.shape_cast %186 : vector<1x16x16xbf16> to vector<16x16xbf16>
    %cst_115 = arith.constant dense<0.000000e+00> : vector<16x256xf32>
    %188 = tpu.matmul %187, %185, %cst_115 {dimension_numbers = #tpu.dot_dimension_numbers<[1], [0], [0], [1], [0, 0, 1, 1], [], []>} : vector<16x16xbf16>, vector<16x256xbf16>, vector<16x256xf32> -> vector<16x256xf32>
    %189 = arith.addf %183, %188 : vector<16x256xf32>
    %c252_i32_116 = arith.constant 252 : i32
    %190 = tpu.dynamic_rotate %179 by %c252_i32_116 dim 1 : vector<16x256xf32>, i32 -> vector<16x256xf32>
    %191 = arith.truncf %190 : vector<16x256xf32> to vector<16x256xbf16>
    %c29 = arith.constant 29 : index
    %c0_117 = arith.constant 0 : index
    %c0_118 = arith.constant 0 : index
    %192 = vector.load %arg2[%c29, %c0_117, %c0_118] : memref<36x16x16xbf16, #tpu.memory_space<vmem>>, vector<1x16x16xbf16>
    %193 = vector.shape_cast %192 : vector<1x16x16xbf16> to vector<16x16xbf16>
    %cst_119 = arith.constant dense<0.000000e+00> : vector<16x256xf32>
    %194 = tpu.matmul %193, %191, %cst_119 {dimension_numbers = #tpu.dot_dimension_numbers<[1], [0], [0], [1], [0, 0, 1, 1], [], []>} : vector<16x16xbf16>, vector<16x256xbf16>, vector<16x256xf32> -> vector<16x256xf32>
    %195 = arith.addf %189, %194 : vector<16x256xf32>
    %c224_i32_120 = arith.constant 224 : i32
    %196 = tpu.dynamic_rotate %179 by %c224_i32_120 dim 1 : vector<16x256xf32>, i32 -> vector<16x256xf32>
    %197 = arith.truncf %196 : vector<16x256xf32> to vector<16x256xbf16>
    %c30 = arith.constant 30 : index
    %c0_121 = arith.constant 0 : index
    %c0_122 = arith.constant 0 : index
    %198 = vector.load %arg2[%c30, %c0_121, %c0_122] : memref<36x16x16xbf16, #tpu.memory_space<vmem>>, vector<1x16x16xbf16>
    %199 = vector.shape_cast %198 : vector<1x16x16xbf16> to vector<16x16xbf16>
    %cst_123 = arith.constant dense<0.000000e+00> : vector<16x256xf32>
    %200 = tpu.matmul %199, %197, %cst_123 {dimension_numbers = #tpu.dot_dimension_numbers<[1], [0], [0], [1], [0, 0, 1, 1], [], []>} : vector<16x16xbf16>, vector<16x256xbf16>, vector<16x256xf32> -> vector<16x256xf32>
    %201 = arith.addf %195, %200 : vector<16x256xf32>
    %c222_i32_124 = arith.constant 222 : i32
    %202 = tpu.dynamic_rotate %179 by %c222_i32_124 dim 1 : vector<16x256xf32>, i32 -> vector<16x256xf32>
    %203 = arith.truncf %202 : vector<16x256xf32> to vector<16x256xbf16>
    %c31 = arith.constant 31 : index
    %c0_125 = arith.constant 0 : index
    %c0_126 = arith.constant 0 : index
    %204 = vector.load %arg2[%c31, %c0_125, %c0_126] : memref<36x16x16xbf16, #tpu.memory_space<vmem>>, vector<1x16x16xbf16>
    %205 = vector.shape_cast %204 : vector<1x16x16xbf16> to vector<16x16xbf16>
    %cst_127 = arith.constant dense<0.000000e+00> : vector<16x256xf32>
    %206 = tpu.matmul %205, %203, %cst_127 {dimension_numbers = #tpu.dot_dimension_numbers<[1], [0], [0], [1], [0, 0, 1, 1], [], []>} : vector<16x16xbf16>, vector<16x256xbf16>, vector<16x256xf32> -> vector<16x256xf32>
    %207 = arith.addf %201, %206 : vector<16x256xf32>
    %c220_i32_128 = arith.constant 220 : i32
    %208 = tpu.dynamic_rotate %179 by %c220_i32_128 dim 1 : vector<16x256xf32>, i32 -> vector<16x256xf32>
    %209 = arith.truncf %208 : vector<16x256xf32> to vector<16x256xbf16>
    %c32 = arith.constant 32 : index
    %c0_129 = arith.constant 0 : index
    %c0_130 = arith.constant 0 : index
    %210 = vector.load %arg2[%c32, %c0_129, %c0_130] : memref<36x16x16xbf16, #tpu.memory_space<vmem>>, vector<1x16x16xbf16>
    %211 = vector.shape_cast %210 : vector<1x16x16xbf16> to vector<16x16xbf16>
    %cst_131 = arith.constant dense<0.000000e+00> : vector<16x256xf32>
    %212 = tpu.matmul %211, %209, %cst_131 {dimension_numbers = #tpu.dot_dimension_numbers<[1], [0], [0], [1], [0, 0, 1, 1], [], []>} : vector<16x16xbf16>, vector<16x256xbf16>, vector<16x256xf32> -> vector<16x256xf32>
    %213 = arith.addf %207, %212 : vector<16x256xf32>
    %c192_i32_132 = arith.constant 192 : i32
    %214 = tpu.dynamic_rotate %179 by %c192_i32_132 dim 1 : vector<16x256xf32>, i32 -> vector<16x256xf32>
    %215 = arith.truncf %214 : vector<16x256xf32> to vector<16x256xbf16>
    %c33 = arith.constant 33 : index
    %c0_133 = arith.constant 0 : index
    %c0_134 = arith.constant 0 : index
    %216 = vector.load %arg2[%c33, %c0_133, %c0_134] : memref<36x16x16xbf16, #tpu.memory_space<vmem>>, vector<1x16x16xbf16>
    %217 = vector.shape_cast %216 : vector<1x16x16xbf16> to vector<16x16xbf16>
    %cst_135 = arith.constant dense<0.000000e+00> : vector<16x256xf32>
    %218 = tpu.matmul %217, %215, %cst_135 {dimension_numbers = #tpu.dot_dimension_numbers<[1], [0], [0], [1], [0, 0, 1, 1], [], []>} : vector<16x16xbf16>, vector<16x256xbf16>, vector<16x256xf32> -> vector<16x256xf32>
    %219 = arith.addf %213, %218 : vector<16x256xf32>
    %c190_i32_136 = arith.constant 190 : i32
    %220 = tpu.dynamic_rotate %179 by %c190_i32_136 dim 1 : vector<16x256xf32>, i32 -> vector<16x256xf32>
    %221 = arith.truncf %220 : vector<16x256xf32> to vector<16x256xbf16>
    %c34 = arith.constant 34 : index
    %c0_137 = arith.constant 0 : index
    %c0_138 = arith.constant 0 : index
    %222 = vector.load %arg2[%c34, %c0_137, %c0_138] : memref<36x16x16xbf16, #tpu.memory_space<vmem>>, vector<1x16x16xbf16>
    %223 = vector.shape_cast %222 : vector<1x16x16xbf16> to vector<16x16xbf16>
    %cst_139 = arith.constant dense<0.000000e+00> : vector<16x256xf32>
    %224 = tpu.matmul %223, %221, %cst_139 {dimension_numbers = #tpu.dot_dimension_numbers<[1], [0], [0], [1], [0, 0, 1, 1], [], []>} : vector<16x16xbf16>, vector<16x256xbf16>, vector<16x256xf32> -> vector<16x256xf32>
    %225 = arith.addf %219, %224 : vector<16x256xf32>
    %c188_i32_140 = arith.constant 188 : i32
    %226 = tpu.dynamic_rotate %179 by %c188_i32_140 dim 1 : vector<16x256xf32>, i32 -> vector<16x256xf32>
    %227 = arith.truncf %226 : vector<16x256xf32> to vector<16x256xbf16>
    %c35 = arith.constant 35 : index
    %c0_141 = arith.constant 0 : index
    %c0_142 = arith.constant 0 : index
    %228 = vector.load %arg2[%c35, %c0_141, %c0_142] : memref<36x16x16xbf16, #tpu.memory_space<vmem>>, vector<1x16x16xbf16>
    %229 = vector.shape_cast %228 : vector<1x16x16xbf16> to vector<16x16xbf16>
    %cst_143 = arith.constant dense<0.000000e+00> : vector<16x256xf32>
    %230 = tpu.matmul %229, %227, %cst_143 {dimension_numbers = #tpu.dot_dimension_numbers<[1], [0], [0], [1], [0, 0, 1, 1], [], []>} : vector<16x16xbf16>, vector<16x256xbf16>, vector<16x256xf32> -> vector<16x256xf32>
    %231 = arith.addf %225, %230 : vector<16x256xf32>
    %c3_144 = arith.constant 3 : index
    %c0_145 = arith.constant 0 : index
    %c0_146 = arith.constant 0 : index
    %232 = vector.load %arg3[%c3_144, %c0_145, %c0_146] : memref<4x16x1xf32, #tpu.memory_space<vmem>>, vector<1x16x1xf32>
    %233 = vector.shape_cast %232 : vector<1x16x1xf32> to vector<16x1xf32>
    %234 = vector.broadcast %233 : vector<16x1xf32> to vector<16x256xf32>
    %235 = arith.addf %231, %234 : vector<16x256xf32>
    %c0_147 = arith.constant 0 : index
    %c0_148 = arith.constant 0 : index
    %236 = vector.load %arg5[%c0_147, %c0_148] : memref<16x256xf32, #tpu.memory_space<vmem>>, vector<16x256xf32>
    tpu.vector_store %arg5[%c0_147, %c0_148], %235 {strides = array<i32>} : memref<16x256xf32, #tpu.memory_space<vmem>>, vector<16x256xf32>,
    return
  }
  func.func @transform_0(%arg0: i32) -> (i32, i32) {
    %c0_i32 = arith.constant 0 : i32
    %c0_i32_0 = arith.constant 0 : i32
    return %c0_i32, %arg0 : i32, i32
  }
  func.func @transform_1(%arg0: i32) -> (i32, i32, i32) {
    %c0_i32 = arith.constant 0 : i32
    %c0_i32_0 = arith.constant 0 : i32
    %c0_i32_1 = arith.constant 0 : i32
    %c0_i32_2 = arith.constant 0 : i32
    return %c0_i32, %c0_i32_0, %c0_i32_1 : i32, i32, i32
  }
  func.func @transform_2(%arg0: i32) -> (i32, i32, i32) {
    %c0_i32 = arith.constant 0 : i32
    %c0_i32_0 = arith.constant 0 : i32
    %c0_i32_1 = arith.constant 0 : i32
    %c0_i32_2 = arith.constant 0 : i32
    return %c0_i32, %c0_i32_0, %c0_i32_1 : i32, i32, i32
  }
  func.func @transform_3(%arg0: i32) -> (i32, i32) {
    %c0_i32 = arith.constant 0 : i32
    %c0_i32_0 = arith.constant 0 : i32
    return %c0_i32, %arg0 : i32, i32
  }
  func.func @transform_4(%arg0: i32) -> (i32, i32) {
    %c0_i32 = arith.constant 0 : i32
    %c0_i32_0 = arith.constant 0 : i32
    return %c0_i32, %arg0 : i32, i32
  }
}

</mosaic_0001>

<llo_original>
// kernel: tpu_custom_call.1
$region0: #{tpu_custom_call.1}
  #allocation0 [shape = 'u32[]', space=smem, size = 0x4, offset = 0x4, fixed_abs, tag = 'smem constant byte address 0x4 - core index']
  #allocation1 [shape = 'u32[144,128]{1,0:T(1,128)}', space=vmem, size = 0x12000, scoped, tag = 'internal scratch']
  %s0 = inlined_call_operand.vmem [shape: f32[4,512], index: 0, kind: input, shape index: {}]
  %s1 = inlined_call_operand.vmem [shape: bf16[36,16,16], index: 1, kind: input, shape index: {}]
  %s2 = inlined_call_operand.vmem [shape: f32[4,16,1], index: 2, kind: input, shape index: {}]
  %s3 = inlined_call_operand.hbm [shape: f32[8,512], index: 3, kind: output, shape index: {0}]
  %s4 = inlined_call_operand.hbm [shape: f32[16,512], index: 4, kind: output, shape index: {1}]
  %5 = xla_tuple %s3, %s4
  %s6 = sld [smem:[#allocation0]]
  $region53: #{tpu_custom_call.1} parent=0
    _
  %s8 = ssub.s32 1, %s6
  %s9 = scalar_select 0, %s8, %s6
  $region1: #{tpu_custom_call.1} parent=0
    #allocation2 [shape = 'u8[16384]{0}', space=vmem, size = 0x4000, scoped, tag = 'output window, operand 0']
    #allocation3 [shape = 's32[2]{0}', space=sflag, size = 0x8, scoped, tag = 'scoped memory for tpu_custom_call.1']
    #allocation4 [shape = 'u8[32768]{0}', space=vmem, size = 0x8000, scoped, tag = 'output window, operand 1']
    #allocation5 [shape = 's32[2]{0}', space=sflag, size = 0x8, scoped, tag = 'scoped memory for tpu_custom_call.1']
    %10 = vsyncpa [#allocation3], 0
    %s11 = scalar_lea.sflag [#allocation3], 1
    %12 = vsyncpa %s11, 0
    %13 = vsyncpa [#allocation5], 0
    %s14 = scalar_lea.sflag [#allocation5], 1
    %15 = vsyncpa %s14, 0
    loop: start=0, step=1, limit=4
    $region2: #{tpu_custom_call.1} parent=1 // loop_pre_header
      _
    $region3: #{tpu_custom_call.1} parent=1 // loop_header
      %s17 = sphi 0, %s21
      %p18 = scmp.ge.s32.totalorder %s17, 4
      %s27 = sphi 0, %s29
      %s30 = sphi 0, %s27
      %s31 = sphi 0, %s30
      %s47 = sphi 0, %s31
      %s51 = sphi 0, %s51
      %s53 = sphi 0, %s51
      %s54 = sphi 0, %s53
      %s68 = sphi 0, %s54
      %s72 = sphi 0, %s72
      %s74 = sphi 0, %s72
      %s75 = sphi 0, %s74
      %s89 = sphi 0, %s75
      %s95 = sphi 0, %s97
      %s98 = sphi 0, %s95
      %s99 = sphi 0, %s98
      %s115 = sphi 0, %s99
      %s121 = sphi 0, %s123
      %s124 = sphi 0, %s121
      %s125 = sphi 0, %s124
      %s141 = sphi 0, %s125
    $region4: #{tpu_custom_call.1} parent=1 // loop_header_branch
      %20 = sbr.rel (%p18) target = $region8
    $region5: #{tpu_custom_call.1} parent=1 // loop_body
      %s22 = ssub.s32 %s17, 1
      %s23 = ssub.s32 %s17, 2
      %s24 = sadd.s32 %s17, 1
      %s25 = ssub.s32 %s17, %s24
      %p26 = scmp.eq.s32.totalorder %s25, 0
      %s28 = sadd.s32 %s27, 1
      %s29 = scalar_select %p26, %s27, %s28
      %p32 = pneg %p26
      %p33 = scmp.eq.s32.totalorder %s17, 1
      %p34 = por %p32, %p33
      %p35 = scmp.ne.s32.totalorder %s27, %s30
      %p36 = scmp.eq.s32.totalorder %s17, 0
      %p37 = por %p35, %p36
      %p38 = scmp.ne.s32.totalorder %s27, %s30
      %p39 = scmp.eq.s32.totalorder %s22, 1
      %p40 = por %p38, %p39
      %p41 = scmp.ne.s32.totalorder %s30, %s31
      %p42 = scmp.eq.s32.totalorder %s22, 0
      %p43 = por %p41, %p42
      %p44 = scmp.ne.s32.totalorder %s30, %s31
      %p45 = scmp.eq.s32.totalorder %s23, 1
      %p46 = por %p44, %p45
      %p48 = scmp.ne.s32.totalorder %s31, %s47
      %p49 = scmp.eq.s32.totalorder %s23, 0
      %p50 = por %p48, %p49
      %s52 = sadd.s32 %s51, 1
      %p55 = scmp.eq.s32.totalorder %s17, 1
      %p56 = scmp.ne.s32.totalorder %s51, %s53
      %p57 = scmp.eq.s32.totalorder %s17, 0
      %p58 = por %p56, %p57
      %p59 = scmp.ne.s32.totalorder %s51, %s53
      %p60 = scmp.eq.s32.totalorder %s22, 1
      %p61 = por %p59, %p60
      %p62 = scmp.ne.s32.totalorder %s53, %s54
      %p63 = scmp.eq.s32.totalorder %s22, 0
      %p64 = por %p62, %p63
      %p65 = scmp.ne.s32.totalorder %s53, %s54
      %p66 = scmp.eq.s32.totalorder %s23, 1
      %p67 = por %p65, %p66
      %p69 = scmp.ne.s32.totalorder %s54, %s68
      %p70 = scmp.eq.s32.totalorder %s23, 0
      %p71 = por %p69, %p70
      %s73 = sadd.s32 %s72, 1
      %p76 = scmp.eq.s32.totalorder %s17, 1
      %p77 = scmp.ne.s32.totalorder %s72, %s74
      %p78 = scmp.eq.s32.totalorder %s17, 0
      %p79 = por %p77, %p78
      %p80 = scmp.ne.s32.totalorder %s72, %s74
      %p81 = scmp.eq.s32.totalorder %s22, 1
      %p82 = por %p80, %p81
      %p83 = scmp.ne.s32.totalorder %s74, %s75
      %p84 = scmp.eq.s32.totalorder %s22, 0
      %p85 = por %p83, %p84
      %p86 = scmp.ne.s32.totalorder %s74, %s75
      %p87 = scmp.eq.s32.totalorder %s23, 1
      %p88 = por %p86, %p87
      %p90 = scmp.ne.s32.totalorder %s75, %s89
      %p91 = scmp.eq.s32.totalorder %s23, 0
      %p92 = por %p90, %p91
      %s93 = ssub.s32 %s17, %s24
      %p94 = scmp.eq.s32.totalorder %s93, 0
      %s96 = sadd.s32 %s95, 1
      %s97 = scalar_select %p94, %s95, %s96
      %p100 = pneg %p94
      %p101 = scmp.eq.s32.totalorder %s17, 1
      %p102 = por %p100, %p101
      %p103 = scmp.ne.s32.totalorder %s95, %s98
      %p104 = scmp.eq.s32.totalorder %s17, 0
      %p105 = por %p103, %p104
      %p106 = scmp.ne.s32.totalorder %s95, %s98
      %p107 = scmp.eq.s32.totalorder %s22, 1
      %p108 = por %p106, %p107
      %p109 = scmp.ne.s32.totalorder %s98, %s99
      %p110 = scmp.eq.s32.totalorder %s22, 0
      %p111 = por %p109, %p110
      %p112 = scmp.ne.s32.totalorder %s98, %s99
      %p113 = scmp.eq.s32.totalorder %s23, 1
      %p114 = por %p112, %p113
      %p116 = scmp.ne.s32.totalorder %s99, %s115
      %p117 = scmp.eq.s32.totalorder %s23, 0
      %p118 = por %p116, %p117
      %s119 = ssub.s32 %s17, %s24
      %p120 = scmp.eq.s32.totalorder %s119, 0
      %s122 = sadd.s32 %s121, 1
      %s123 = scalar_select %p120, %s121, %s122
      %p126 = pneg %p120
      %p127 = scmp.eq.s32.totalorder %s17, 1
      %p128 = por %p126, %p127
      %p129 = scmp.ne.s32.totalorder %s121, %s124
      %p130 = scmp.eq.s32.totalorder %s17, 0
      %p131 = por %p129, %p130
      %p132 = scmp.ne.s32.totalorder %s121, %s124
      %p133 = scmp.eq.s32.totalorder %s22, 1
      %p134 = por %p132, %p133
      %p135 = scmp.ne.s32.totalorder %s124, %s125
      %p136 = scmp.eq.s32.totalorder %s22, 0
      %p137 = por %p135, %p136
      %p138 = scmp.ne.s32.totalorder %s124, %s125
      %p139 = scmp.eq.s32.totalorder %s23, 1
      %p140 = por %p138, %p139
      %p142 = scmp.ne.s32.totalorder %s125, %s141
      %p143 = scmp.eq.s32.totalorder %s23, 0
      %p144 = por %p142, %p143
      %p145 = scmp.le.s32.totalorder 1, %s17
      %p146 = scmp.lt.s32.totalorder %s17, 3
      %p147 = pnand %p145, %p146
      %p148 = pneg %p147
      // Predicated region
      $region9: #{tpu_custom_call.1} parent=5 // pred_check
        _
      $region10: #{tpu_custom_call.1} parent=5 // pred_check_branch
        %150 = sbr.rel (%p147) target = $region12
      $region11: #{tpu_custom_call.1} parent=5 // pred_region
        %s151 = ssub.s32 %s17, 1
        // Predicated region
        $region13: #{tpu_custom_call.1} parent=11 // pred_check
          %p152 = pneg %p64
        $region14: #{tpu_custom_call.1} parent=11 // pred_check_branch
          %154 = sbr.rel (%p152) target = $region16
        $region15: #{tpu_custom_call.1} parent=11 // pred_region
          _
        $region16: #{tpu_custom_call.1} parent=11 // pred_fallthru
          _
        // Predicated region
        $region17: #{tpu_custom_call.1} parent=11 // pred_check
          %p155 = pneg %p85
        $region18: #{tpu_custom_call.1} parent=11 // pred_check_branch
          %157 = sbr.rel (%p155) target = $region20
        $region19: #{tpu_custom_call.1} parent=11 // pred_region
          _
        $region20: #{tpu_custom_call.1} parent=11 // pred_fallthru
          _
      $region12: #{tpu_custom_call.1} parent=5 // pred_fallthru
        _
      %p158 = scmp.lt.s32.totalorder %s17, 2
      // Predicated region
      $region21: #{tpu_custom_call.1} parent=5 // pred_check
        %p159 = pneg %p158
      $region22: #{tpu_custom_call.1} parent=5 // pred_check_branch
        %161 = sbr.rel (%p159) target = $region24
      $region23: #{tpu_custom_call.1} parent=5 // pred_region
        // Predicated region
        $region25: #{tpu_custom_call.1} parent=23 // pred_check
          %p162 = pneg %p37
        $region26: #{tpu_custom_call.1} parent=23 // pred_check_branch
          %164 = sbr.rel (%p162) target = $region28
        $region27: #{tpu_custom_call.1} parent=23 // pred_region
          %s165 = smul.u32 2, %s17
          %p166 = scmp.lt.s32.totalorder %s165, 3
          %s167 = scalar_select %p166, %s165, 3
          %s168 = smul.addr %s167, 4
          %s169 = scalar_lea.vmem %s0, %s168
          %s170 = smul.u32 2, %s17
        $region28: #{tpu_custom_call.1} parent=23 // pred_fallthru
          _
      $region24: #{tpu_custom_call.1} parent=5 // pred_fallthru
        _
      %p171 = scmp.le.s32.totalorder 1, %s17
      %p172 = scmp.lt.s32.totalorder %s17, 3
      %p173 = pnand %p171, %p172
      %p174 = pneg %p173
      // Predicated region
      $region29: #{tpu_custom_call.1} parent=5 // pred_check
        _
      $region30: #{tpu_custom_call.1} parent=5 // pred_check_branch
        %176 = sbr.rel (%p173) target = $region32
      $region31: #{tpu_custom_call.1} parent=5 // pred_region
        %s177 = ssub.s32 %s17, 1
        %s178 = smul.u32 2, %s22
        %p179 = scmp.lt.s32.totalorder %s178, 3
        %s180 = scalar_select %p179, %s178, 3
        %s181 = smul.addr %s180, 4
        %s182 = scalar_lea.vmem %s0, %s181
        %p183 = pneg %p43
        %p184 = pneg %p40
        %p185 = pneg %p64
        %p186 = pneg %p61
        %p187 = pneg %p85
        %p188 = pneg %p82
        %p189 = pneg %p111
        %p190 = pneg %p108
        %s191 = sand.u32 %s98, 1
        %s192 = scalar_lea.sflag [#allocation3], %s191
        %s193 = sand.u32 %s98, 1
        %s194 = smul.addr %s193, 16
        %s195 = scalar_lea.vmem [#allocation2], %s194
        %p196 = pneg %p137
        %p197 = pneg %p134
        %s198 = sand.u32 %s124, 1
        %s199 = scalar_lea.sflag [#allocation5], %s198
        %s200 = sand.u32 %s124, 1
        %s201 = smul.addr %s200, 32
        %s202 = scalar_lea.vmem [#allocation4], %s201
        %s203 = smul.u32 2, %s22
        %p204 = scmp.lt.s32.totalorder %s203, 3
        %s205 = scalar_select %p204, %s203, 3
        %s206 = smul.addr %s205, 4
        %s207 = scalar_lea.vmem %s0, %s206
        %s208 = smul.u32 2, %s22
        %s209 = smul.u32 2, %s22
        %s210 = smul.u32 2, %s22
        %v212 = vld [vmem:[%s207] sm:$0xff]
        %v214 = vcombine.high %v212, %v212
        %v216 = vpack.c.bf16 %v212, %v212
        %v217 = vpack.c.bf16 %v214, %v214
        %v218 = vld [vmem:[%s1] sm:$0xf]
        %219 = vrot.lane.b32.xlu0 %v212, 127
        %v220 = vpop.permute.xlu0 %219
        %221 = vrot.lane.b32.xlu0 %v214, 127
        %v222 = vpop.permute.xlu0 %221
        %v223 = vlaneseq
        %v224 = vand.u32 %v223, 127
        %vm225 = vcmp.lt.s32.totalorder %v224, 127
        %v226 = vsel %vm225, %v220, %v222
        %v227 = vsel %vm225, %v222, %v220
        %v228 = vpack.c.bf16 %v226, %v226
        %v229 = vpack.c.bf16 %v227, %v227
        %s230 = scalar_lea.vmem %s1, 8
        %v231 = vld [vmem:[%s230] sm:$0xf]
        %vm232 = vcmask 31744
        %v234 = vsel %vm232, %v231, 0
        %vm236 = vcmask 1041408
        %v238 = vsel %vm236, %v228, 0
        %v241 = vsel %vm236, %v229, 0
        %243 = vmatprep.subr.bf16.mxu0 0
        %244 = vmatpush1.bf16.msra.mxu0 0
        %245 = vmatprep.subr.bf16.mxu0 0
        %246 = vmatpush1.bf16.msra.mxu0 0
        %247 = vmatprep.subr.bf16.mxu0 0
        %248 = vmatpush1.bf16.msra.mxu0 0
        %249 = vmatprep.subr.bf16.mxu0 0
        %250 = vmatpush1.bf16.msra.mxu0 0
        %251 = vmatprep.subr.bf16.mxu0 0
        %252 = vmatpush1.bf16.msra.mxu0 0
        %253 = vmatprep.subr.bf16.mxu0 0
        %254 = vmatpush1.bf16.msra.mxu0 0
        %255 = vmatprep.subr.bf16.mxu0 0
        %256 = vmatpush1.bf16.msra.mxu0 0
        %257 = vmatprep.subr.bf16.mxu0 %v241
        %258 = vmatpush1.bf16.msra.mxu0 %v238
        %259 = vmatprep.subr.bf16.mxu0 0
        %260 = vmatpush2.bf16.msra.mxu0 0
        %261 = vmatprep.subr.bf16.mxu0 0
        %262 = vmatpush2.bf16.msra.mxu0 0
        %263 = vmatprep.subr.bf16.mxu0 0
        %264 = vmatpush2.bf16.msra.mxu0 0
        %265 = vmatprep.subr.bf16.mxu0 0
        %266 = vmatpush2.bf16.msra.mxu0 0
        %267 = vmatprep.subr.bf16.mxu0 0
        %268 = vmatpush2.bf16.msra.mxu0 0
        %269 = vmatprep.subr.bf16.mxu0 0
        %270 = vmatpush2.bf16.msra.mxu0 0
        %271 = vmatprep.subr.bf16.mxu0 0
        %272 = vmatpush2.bf16.msra.mxu0 0
        %273 = vmatprep.subr.bf16.mxu0 0
        %274 = vmatpush2.bf16.msra.mxu0 0
        %275 = vmatprep.mubr.bf16.mxu0 0
        %276 = vmatmul.mubr.bf16.gmra.mxu0 %v234
        %v277 = vpop.f32.mrf.mxu0
        %v278 = vadd.f32 0.0, %v277
        %v279 = vpop.f32.mrf.mxu0
        %v280 = vadd.f32 0.0, %v279
        %v281 = vpop.f32.mrf.mxu0
        %v282 = vpop.f32.mrf.mxu0
        %283 = vdwg.mxu0
        %v285 = vsel %vm232, %v218, 0
        %v288 = vsel %vm236, %v216, 0
        %v291 = vsel %vm236, %v217, 0
        %293 = vmatprep.subr.bf16.mxu0 0
        %294 = vmatpush1.bf16.msra.mxu0 0
        %295 = vmatprep.subr.bf16.mxu0 0
        %296 = vmatpush1.bf16.msra.mxu0 0
        %297 = vmatprep.subr.bf16.mxu0 0
        %298 = vmatpush1.bf16.msra.mxu0 0
        %299 = vmatprep.subr.bf16.mxu0 0
        %300 = vmatpush1.bf16.msra.mxu0 0
        %301 = vmatprep.subr.bf16.mxu0 0
        %302 = vmatpush1.bf16.msra.mxu0 0
        %303 = vmatprep.subr.bf16.mxu0 0
        %304 = vmatpush1.bf16.msra.mxu0 0
        %305 = vmatprep.subr.bf16.mxu0 0
        %306 = vmatpush1.bf16.msra.mxu0 0
        %307 = vmatprep.subr.bf16.mxu0 %v291
        %308 = vmatpush1.bf16.msra.mxu0 %v288
        %309 = vmatprep.subr.bf16.mxu0 0
        %310 = vmatpush2.bf16.msra.mxu0 0
        %311 = vmatprep.subr.bf16.mxu0 0
        %312 = vmatpush2.bf16.msra.mxu0 0
        %313 = vmatprep.subr.bf16.mxu0 0
        %314 = vmatpush2.bf16.msra.mxu0 0
        %315 = vmatprep.subr.bf16.mxu0 0
        %316 = vmatpush2.bf16.msra.mxu0 0
        %317 = vmatprep.subr.bf16.mxu0 0
        %318 = vmatpush2.bf16.msra.mxu0 0
        %319 = vmatprep.subr.bf16.mxu0 0
        %320 = vmatpush2.bf16.msra.mxu0 0
        %321 = vmatprep.subr.bf16.mxu0 0
        %322 = vmatpush2.bf16.msra.mxu0 0
        %323 = vmatprep.subr.bf16.mxu0 0
        %324 = vmatpush2.bf16.msra.mxu0 0
        %325 = vmatprep.mubr.bf16.mxu0 0
        %326 = vmatmul.mubr.bf16.gmra.mxu0 %v285
        %v327 = vpop.f32.mrf.mxu0
        %v328 = vadd.f32 %v278, %v327
        %v329 = vpop.f32.mrf.mxu0
        %v330 = vadd.f32 %v280, %v329
        %v331 = vpop.f32.mrf.mxu0
        %v332 = vpop.f32.mrf.mxu0
        %333 = vdwg.mxu0
        %334 = vrot.lane.b32.xlu0 %v212, 126
        %v335 = vpop.permute.xlu0 %334
        %336 = vrot.lane.b32.xlu0 %v214, 126
        %v337 = vpop.permute.xlu0 %336
        %vm338 = vcmp.lt.s32.totalorder %v224, 126
        %v339 = vsel %vm338, %v335, %v337
        %v340 = vsel %vm338, %v337, %v335
        %v341 = vpack.c.bf16 %v339, %v339
        %v342 = vpack.c.bf16 %v340, %v340
        %s343 = scalar_lea.vmem %s1, 16
        %v344 = vld [vmem:[%s343] sm:$0xf]
        %v346 = vsel %vm232, %v344, 0
        %v349 = vsel %vm236, %v341, 0
        %v352 = vsel %vm236, %v342, 0
        %354 = vmatprep.subr.bf16.mxu0 0
        %355 = vmatpush1.bf16.msra.mxu0 0
        %356 = vmatprep.subr.bf16.mxu0 0
        %357 = vmatpush1.bf16.msra.mxu0 0
        %358 = vmatprep.subr.bf16.mxu0 0
        %359 = vmatpush1.bf16.msra.mxu0 0
        %360 = vmatprep.subr.bf16.mxu0 0
        %361 = vmatpush1.bf16.msra.mxu0 0
        %362 = vmatprep.subr.bf16.mxu0 0
        %363 = vmatpush1.bf16.msra.mxu0 0
        %364 = vmatprep.subr.bf16.mxu0 0
        %365 = vmatpush1.bf16.msra.mxu0 0
        %366 = vmatprep.subr.bf16.mxu0 0
        %367 = vmatpush1.bf16.msra.mxu0 0
        %368 = vmatprep.subr.bf16.mxu0 %v352
        %369 = vmatpush1.bf16.msra.mxu0 %v349
        %370 = vmatprep.subr.bf16.mxu0 0
        %371 = vmatpush2.bf16.msra.mxu0 0
        %372 = vmatprep.subr.bf16.mxu0 0
        %373 = vmatpush2.bf16.msra.mxu0 0
        %374 = vmatprep.subr.bf16.mxu0 0
        %375 = vmatpush2.bf16.msra.mxu0 0
        %376 = vmatprep.subr.bf16.mxu0 0
        %377 = vmatpush2.bf16.msra.mxu0 0
        %378 = vmatprep.subr.bf16.mxu0 0
        %379 = vmatpush2.bf16.msra.mxu0 0
        %380 = vmatprep.subr.bf16.mxu0 0
        %381 = vmatpush2.bf16.msra.mxu0 0
        %382 = vmatprep.subr.bf16.mxu0 0
        %383 = vmatpush2.bf16.msra.mxu0 0
        %384 = vmatprep.subr.bf16.mxu0 0
        %385 = vmatpush2.bf16.msra.mxu0 0
        %386 = vmatprep.mubr.bf16.mxu0 0
        %387 = vmatmul.mubr.bf16.gmra.mxu0 %v346
        %v388 = vpop.f32.mrf.mxu0
        %v389 = vadd.f32 0.0, %v388
        %v390 = vpop.f32.mrf.mxu0
        %v391 = vadd.f32 0.0, %v390
        %v392 = vpop.f32.mrf.mxu0
        %v393 = vpop.f32.mrf.mxu0
        %394 = vdwg.mxu0
        %v395 = vadd.f32 %v328, %v389
        %v396 = vadd.f32 %v330, %v391
        %397 = vrot.lane.b32.xlu0 %v212, 112
        %v398 = vpop.permute.xlu0 %397
        %399 = vrot.lane.b32.xlu0 %v214, 112
        %v400 = vpop.permute.xlu0 %399
        %vm401 = vcmp.lt.s32.totalorder %v224, 112
        %v402 = vsel %vm401, %v398, %v400
        %v403 = vsel %vm401, %v400, %v398
        %v404 = vpack.c.bf16 %v402, %v402
        %v405 = vpack.c.bf16 %v403, %v403
        %s406 = scalar_lea.vmem %s1, 24
        %v407 = vld [vmem:[%s406] sm:$0xf]
        %v409 = vsel %vm232, %v407, 0
        %v412 = vsel %vm236, %v404, 0
        %v415 = vsel %vm236, %v405, 0
        %417 = vmatprep.subr.bf16.mxu0 0
        %418 = vmatpush1.bf16.msra.mxu0 0
        %419 = vmatprep.subr.bf16.mxu0 0
        %420 = vmatpush1.bf16.msra.mxu0 0
        %421 = vmatprep.subr.bf16.mxu0 0
        %422 = vmatpush1.bf16.msra.mxu0 0
        %423 = vmatprep.subr.bf16.mxu0 0
        %424 = vmatpush1.bf16.msra.mxu0 0
        %425 = vmatprep.subr.bf16.mxu0 0
        %426 = vmatpush1.bf16.msra.mxu0 0
        %427 = vmatprep.subr.bf16.mxu0 0
        %428 = vmatpush1.bf16.msra.mxu0 0
        %429 = vmatprep.subr.bf16.mxu0 0
        %430 = vmatpush1.bf16.msra.mxu0 0
        %431 = vmatprep.subr.bf16.mxu0 %v415
        %432 = vmatpush1.bf16.msra.mxu0 %v412
        %433 = vmatprep.subr.bf16.mxu0 0
        %434 = vmatpush2.bf16.msra.mxu0 0
        %435 = vmatprep.subr.bf16.mxu0 0
        %436 = vmatpush2.bf16.msra.mxu0 0
        %437 = vmatprep.subr.bf16.mxu0 0
        %438 = vmatpush2.bf16.msra.mxu0 0
        %439 = vmatprep.subr.bf16.mxu0 0
        %440 = vmatpush2.bf16.msra.mxu0 0
        %441 = vmatprep.subr.bf16.mxu0 0
        %442 = vmatpush2.bf16.msra.mxu0 0
        %443 = vmatprep.subr.bf16.mxu0 0
        %444 = vmatpush2.bf16.msra.mxu0 0
        %445 = vmatprep.subr.bf16.mxu0 0
        %446 = vmatpush2.bf16.msra.mxu0 0
        %447 = vmatprep.subr.bf16.mxu0 0
        %448 = vmatpush2.bf16.msra.mxu0 0
        %449 = vmatprep.mubr.bf16.mxu0 0
        %450 = vmatmul.mubr.bf16.gmra.mxu0 %v409
        %v451 = vpop.f32.mrf.mxu0
        %v452 = vadd.f32 0.0, %v451
        %v453 = vpop.f32.mrf.mxu0
        %v454 = vadd.f32 0.0, %v453
        %v455 = vpop.f32.mrf.mxu0
        %v456 = vpop.f32.mrf.mxu0
        %457 = vdwg.mxu0
        %v458 = vadd.f32 %v395, %v452
        %v459 = vadd.f32 %v396, %v454
        %460 = vrot.lane.b32.xlu0 %v212, 111
        %v461 = vpop.permute.xlu0 %460
        %462 = vrot.lane.b32.xlu0 %v214, 111
        %v463 = vpop.permute.xlu0 %462
        %vm464 = vcmp.lt.s32.totalorder %v224, 111
        %v465 = vsel %vm464, %v461, %v463
        %v466 = vsel %vm464, %v463, %v461
        %v467 = vpack.c.bf16 %v465, %v465
        %v468 = vpack.c.bf16 %v466, %v466
        %s469 = scalar_lea.vmem %s1, 32
        %v470 = vld [vmem:[%s469] sm:$0xf]
        %v472 = vsel %vm232, %v470, 0
        %v475 = vsel %vm236, %v467, 0
        %v478 = vsel %vm236, %v468, 0
        %480 = vmatprep.subr.bf16.mxu0 0
        %481 = vmatpush1.bf16.msra.mxu0 0
        %482 = vmatprep.subr.bf16.mxu0 0
        %483 = vmatpush1.bf16.msra.mxu0 0
        %484 = vmatprep.subr.bf16.mxu0 0
        %485 = vmatpush1.bf16.msra.mxu0 0
        %486 = vmatprep.subr.bf16.mxu0 0
        %487 = vmatpush1.bf16.msra.mxu0 0
        %488 = vmatprep.subr.bf16.mxu0 0
        %489 = vmatpush1.bf16.msra.mxu0 0
        %490 = vmatprep.subr.bf16.mxu0 0
        %491 = vmatpush1.bf16.msra.mxu0 0
        %492 = vmatprep.subr.bf16.mxu0 0
        %493 = vmatpush1.bf16.msra.mxu0 0
        %494 = vmatprep.subr.bf16.mxu0 %v478
        %495 = vmatpush1.bf16.msra.mxu0 %v475
        %496 = vmatprep.subr.bf16.mxu0 0
        %497 = vmatpush2.bf16.msra.mxu0 0
        %498 = vmatprep.subr.bf16.mxu0 0
        %499 = vmatpush2.bf16.msra.mxu0 0
        %500 = vmatprep.subr.bf16.mxu0 0
        %501 = vmatpush2.bf16.msra.mxu0 0
        %502 = vmatprep.subr.bf16.mxu0 0
        %503 = vmatpush2.bf16.msra.mxu0 0
        %504 = vmatprep.subr.bf16.mxu0 0
        %505 = vmatpush2.bf16.msra.mxu0 0
        %506 = vmatprep.subr.bf16.mxu0 0
        %507 = vmatpush2.bf16.msra.mxu0 0
        %508 = vmatprep.subr.bf16.mxu0 0
        %509 = vmatpush2.bf16.msra.mxu0 0
        %510 = vmatprep.subr.bf16.mxu0 0
        %511 = vmatpush2.bf16.msra.mxu0 0
        %512 = vmatprep.mubr.bf16.mxu0 0
        %513 = vmatmul.mubr.bf16.gmra.mxu0 %v472
        %v514 = vpop.f32.mrf.mxu0
        %v515 = vadd.f32 0.0, %v514
        %v516 = vpop.f32.mrf.mxu0
        %v517 = vadd.f32 0.0, %v516
        %v518 = vpop.f32.mrf.mxu0
        %v519 = vpop.f32.mrf.mxu0
        %520 = vdwg.mxu0
        %v521 = vadd.f32 %v458, %v515
        %v522 = vadd.f32 %v459, %v517
        %523 = vrot.lane.b32.xlu0 %v212, 110
        %v524 = vpop.permute.xlu0 %523
        %525 = vrot.lane.b32.xlu0 %v214, 110
        %v526 = vpop.permute.xlu0 %525
        %vm527 = vcmp.lt.s32.totalorder %v224, 110
        %v528 = vsel %vm527, %v524, %v526
        %v529 = vsel %vm527, %v526, %v524
        %v530 = vpack.c.bf16 %v528, %v528
        %v531 = vpack.c.bf16 %v529, %v529
        %s532 = scalar_lea.vmem %s1, 40
        %v533 = vld [vmem:[%s532] sm:$0xf]
        %v535 = vsel %vm232, %v533, 0
        %v538 = vsel %vm236, %v530, 0
        %v541 = vsel %vm236, %v531, 0
        %543 = vmatprep.subr.bf16.mxu0 0
        %544 = vmatpush1.bf16.msra.mxu0 0
        %545 = vmatprep.subr.bf16.mxu0 0
        %546 = vmatpush1.bf16.msra.mxu0 0
        %547 = vmatprep.subr.bf16.mxu0 0
        %548 = vmatpush1.bf16.msra.mxu0 0
        %549 = vmatprep.subr.bf16.mxu0 0
        %550 = vmatpush1.bf16.msra.mxu0 0
        %551 = vmatprep.subr.bf16.mxu0 0
        %552 = vmatpush1.bf16.msra.mxu0 0
        %553 = vmatprep.subr.bf16.mxu0 0
        %554 = vmatpush1.bf16.msra.mxu0 0
        %555 = vmatprep.subr.bf16.mxu0 0
        %556 = vmatpush1.bf16.msra.mxu0 0
        %557 = vmatprep.subr.bf16.mxu0 %v541
        %558 = vmatpush1.bf16.msra.mxu0 %v538
        %559 = vmatprep.subr.bf16.mxu0 0
        %560 = vmatpush2.bf16.msra.mxu0 0
        %561 = vmatprep.subr.bf16.mxu0 0
        %562 = vmatpush2.bf16.msra.mxu0 0
        %563 = vmatprep.subr.bf16.mxu0 0
        %564 = vmatpush2.bf16.msra.mxu0 0
        %565 = vmatprep.subr.bf16.mxu0 0
        %566 = vmatpush2.bf16.msra.mxu0 0
        %567 = vmatprep.subr.bf16.mxu0 0
        %568 = vmatpush2.bf16.msra.mxu0 0
        %569 = vmatprep.subr.bf16.mxu0 0
        %570 = vmatpush2.bf16.msra.mxu0 0
        %571 = vmatprep.subr.bf16.mxu0 0
        %572 = vmatpush2.bf16.msra.mxu0 0
        %573 = vmatprep.subr.bf16.mxu0 0
        %574 = vmatpush2.bf16.msra.mxu0 0
        %575 = vmatprep.mubr.bf16.mxu0 0
        %576 = vmatmul.mubr.bf16.gmra.mxu0 %v535
        %v577 = vpop.f32.mrf.mxu0
        %v578 = vadd.f32 0.0, %v577
        %v579 = vpop.f32.mrf.mxu0
        %v580 = vadd.f32 0.0, %v579
        %v581 = vpop.f32.mrf.mxu0
        %v582 = vpop.f32.mrf.mxu0
        %583 = vdwg.mxu0
        %v584 = vadd.f32 %v521, %v578
        %v585 = vadd.f32 %v522, %v580
        %586 = vrot.lane.b32.xlu0 %v212, 96
        %v587 = vpop.permute.xlu0 %586
        %588 = vrot.lane.b32.xlu0 %v214, 96
        %v589 = vpop.permute.xlu0 %588
        %vm590 = vcmp.lt.s32.totalorder %v224, 96
        %v591 = vsel %vm590, %v587, %v589
        %v592 = vsel %vm590, %v589, %v587
        %v593 = vpack.c.bf16 %v591, %v591
        %v594 = vpack.c.bf16 %v592, %v592
        %s595 = scalar_lea.vmem %s1, 48
        %v596 = vld [vmem:[%s595] sm:$0xf]
        %v598 = vsel %vm232, %v596, 0
        %v601 = vsel %vm236, %v593, 0
        %v604 = vsel %vm236, %v594, 0
        %606 = vmatprep.subr.bf16.mxu0 0
        %607 = vmatpush1.bf16.msra.mxu0 0
        %608 = vmatprep.subr.bf16.mxu0 0
        %609 = vmatpush1.bf16.msra.mxu0 0
        %610 = vmatprep.subr.bf16.mxu0 0
        %611 = vmatpush1.bf16.msra.mxu0 0
        %612 = vmatprep.subr.bf16.mxu0 0
        %613 = vmatpush1.bf16.msra.mxu0 0
        %614 = vmatprep.subr.bf16.mxu0 0
        %615 = vmatpush1.bf16.msra.mxu0 0
        %616 = vmatprep.subr.bf16.mxu0 0
        %617 = vmatpush1.bf16.msra.mxu0 0
        %618 = vmatprep.subr.bf16.mxu0 0
        %619 = vmatpush1.bf16.msra.mxu0 0
        %620 = vmatprep.subr.bf16.mxu0 %v604
        %621 = vmatpush1.bf16.msra.mxu0 %v601
        %622 = vmatprep.subr.bf16.mxu0 0
        %623 = vmatpush2.bf16.msra.mxu0 0
        %624 = vmatprep.subr.bf16.mxu0 0
        %625 = vmatpush2.bf16.msra.mxu0 0
        %626 = vmatprep.subr.bf16.mxu0 0
        %627 = vmatpush2.bf16.msra.mxu0 0
        %628 = vmatprep.subr.bf16.mxu0 0
        %629 = vmatpush2.bf16.msra.mxu0 0
        %630 = vmatprep.subr.bf16.mxu0 0
        %631 = vmatpush2.bf16.msra.mxu0 0
        %632 = vmatprep.subr.bf16.mxu0 0
        %633 = vmatpush2.bf16.msra.mxu0 0
        %634 = vmatprep.subr.bf16.mxu0 0
        %635 = vmatpush2.bf16.msra.mxu0 0
        %636 = vmatprep.subr.bf16.mxu0 0
        %637 = vmatpush2.bf16.msra.mxu0 0
        %638 = vmatprep.mubr.bf16.mxu0 0
        %639 = vmatmul.mubr.bf16.gmra.mxu0 %v598
        %v640 = vpop.f32.mrf.mxu0
        %v641 = vadd.f32 0.0, %v640
        %v642 = vpop.f32.mrf.mxu0
        %v643 = vadd.f32 0.0, %v642
        %v644 = vpop.f32.mrf.mxu0
        %v645 = vpop.f32.mrf.mxu0
        %646 = vdwg.mxu0
        %v647 = vadd.f32 %v584, %v641
        %v648 = vadd.f32 %v585, %v643
        %649 = vrot.lane.b32.xlu0 %v212, 95
        %v650 = vpop.permute.xlu0 %649
        %651 = vrot.lane.b32.xlu0 %v214, 95
        %v652 = vpop.permute.xlu0 %651
        %vm653 = vcmp.lt.s32.totalorder %v224, 95
        %v654 = vsel %vm653, %v650, %v652
        %v655 = vsel %vm653, %v652, %v650
        %v656 = vpack.c.bf16 %v654, %v654
        %v657 = vpack.c.bf16 %v655, %v655
        %s658 = scalar_lea.vmem %s1, 56
        %v659 = vld [vmem:[%s658] sm:$0xf]
        %v661 = vsel %vm232, %v659, 0
        %v664 = vsel %vm236, %v656, 0
        %v667 = vsel %vm236, %v657, 0
        %669 = vmatprep.subr.bf16.mxu0 0
        %670 = vmatpush1.bf16.msra.mxu0 0
        %671 = vmatprep.subr.bf16.mxu0 0
        %672 = vmatpush1.bf16.msra.mxu0 0
        %673 = vmatprep.subr.bf16.mxu0 0
        %674 = vmatpush1.bf16.msra.mxu0 0
        %675 = vmatprep.subr.bf16.mxu0 0
        %676 = vmatpush1.bf16.msra.mxu0 0
        %677 = vmatprep.subr.bf16.mxu0 0
        %678 = vmatpush1.bf16.msra.mxu0 0
        %679 = vmatprep.subr.bf16.mxu0 0
        %680 = vmatpush1.bf16.msra.mxu0 0
        %681 = vmatprep.subr.bf16.mxu0 0
        %682 = vmatpush1.bf16.msra.mxu0 0
        %683 = vmatprep.subr.bf16.mxu0 %v667
        %684 = vmatpush1.bf16.msra.mxu0 %v664
        %685 = vmatprep.subr.bf16.mxu0 0
        %686 = vmatpush2.bf16.msra.mxu0 0
        %687 = vmatprep.subr.bf16.mxu0 0
        %688 = vmatpush2.bf16.msra.mxu0 0
        %689 = vmatprep.subr.bf16.mxu0 0
        %690 = vmatpush2.bf16.msra.mxu0 0
        %691 = vmatprep.subr.bf16.mxu0 0
        %692 = vmatpush2.bf16.msra.mxu0 0
        %693 = vmatprep.subr.bf16.mxu0 0
        %694 = vmatpush2.bf16.msra.mxu0 0
        %695 = vmatprep.subr.bf16.mxu0 0
        %696 = vmatpush2.bf16.msra.mxu0 0
        %697 = vmatprep.subr.bf16.mxu0 0
        %698 = vmatpush2.bf16.msra.mxu0 0
        %699 = vmatprep.subr.bf16.mxu0 0
        %700 = vmatpush2.bf16.msra.mxu0 0
        %701 = vmatprep.mubr.bf16.mxu0 0
        %702 = vmatmul.mubr.bf16.gmra.mxu0 %v661
        %v703 = vpop.f32.mrf.mxu0
        %v704 = vadd.f32 0.0, %v703
        %v705 = vpop.f32.mrf.mxu0
        %v706 = vadd.f32 0.0, %v705
        %v707 = vpop.f32.mrf.mxu0
        %v708 = vpop.f32.mrf.mxu0
        %709 = vdwg.mxu0
        %v710 = vadd.f32 %v647, %v704
        %v711 = vadd.f32 %v648, %v706
        %712 = vrot.lane.b32.xlu0 %v212, 94
        %v713 = vpop.permute.xlu0 %712
        %714 = vrot.lane.b32.xlu0 %v214, 94
        %v715 = vpop.permute.xlu0 %714
        %vm716 = vcmp.lt.s32.totalorder %v224, 94
        %v717 = vsel %vm716, %v713, %v715
        %v718 = vsel %vm716, %v715, %v713
        %v719 = vpack.c.bf16 %v717, %v717
        %v720 = vpack.c.bf16 %v718, %v718
        %s721 = scalar_lea.vmem %s1, 64
        %v722 = vld [vmem:[%s721] sm:$0xf]
        %v724 = vsel %vm232, %v722, 0
        %v727 = vsel %vm236, %v719, 0
        %v730 = vsel %vm236, %v720, 0
        %732 = vmatprep.subr.bf16.mxu0 0
        %733 = vmatpush1.bf16.msra.mxu0 0
        %734 = vmatprep.subr.bf16.mxu0 0
        %735 = vmatpush1.bf16.msra.mxu0 0
        %736 = vmatprep.subr.bf16.mxu0 0
        %737 = vmatpush1.bf16.msra.mxu0 0
        %738 = vmatprep.subr.bf16.mxu0 0
        %739 = vmatpush1.bf16.msra.mxu0 0
        %740 = vmatprep.subr.bf16.mxu0 0
        %741 = vmatpush1.bf16.msra.mxu0 0
        %742 = vmatprep.subr.bf16.mxu0 0
        %743 = vmatpush1.bf16.msra.mxu0 0
        %744 = vmatprep.subr.bf16.mxu0 0
        %745 = vmatpush1.bf16.msra.mxu0 0
        %746 = vmatprep.subr.bf16.mxu0 %v730
        %747 = vmatpush1.bf16.msra.mxu0 %v727
        %748 = vmatprep.subr.bf16.mxu0 0
        %749 = vmatpush2.bf16.msra.mxu0 0
        %750 = vmatprep.subr.bf16.mxu0 0
        %751 = vmatpush2.bf16.msra.mxu0 0
        %752 = vmatprep.subr.bf16.mxu0 0
        %753 = vmatpush2.bf16.msra.mxu0 0
        %754 = vmatprep.subr.bf16.mxu0 0
        %755 = vmatpush2.bf16.msra.mxu0 0
        %756 = vmatprep.subr.bf16.mxu0 0
        %757 = vmatpush2.bf16.msra.mxu0 0
        %758 = vmatprep.subr.bf16.mxu0 0
        %759 = vmatpush2.bf16.msra.mxu0 0
        %760 = vmatprep.subr.bf16.mxu0 0
        %761 = vmatpush2.bf16.msra.mxu0 0
        %762 = vmatprep.subr.bf16.mxu0 0
        %763 = vmatpush2.bf16.msra.mxu0 0
        %764 = vmatprep.mubr.bf16.mxu0 0
        %765 = vmatmul.mubr.bf16.gmra.mxu0 %v724
        %v766 = vpop.f32.mrf.mxu0
        %v767 = vadd.f32 0.0, %v766
        %v768 = vpop.f32.mrf.mxu0
        %v769 = vadd.f32 0.0, %v768
        %v770 = vpop.f32.mrf.mxu0
        %v771 = vpop.f32.mrf.mxu0
        %772 = vdwg.mxu0
        %v773 = vadd.f32 %v710, %v767
        %v774 = vadd.f32 %v711, %v769
        %v775 = vld [vmem:[%s2] sm:$0xff]
        %777 = vset.pattern.permute.xlu0 0
        %778 = vperm.xlu0 %777, %v775
        %v779 = vpop.permute.xlu0 %778
        %v781 = vadd.f32 %v773, %v779
        %v782 = vadd.f32 %v774, %v779
        %v783 = vmax.f32 %v781, 0.0
        %v784 = vmax.f32 %v782, 0.0
        %v785 = vpack.c.bf16 %v783, %v783
        %v786 = vpack.c.bf16 %v784, %v784
        %s787 = scalar_lea.vmem %s1, 72
        %v788 = vld [vmem:[%s787] sm:$0xf]
        %789 = vrot.lane.b32.xlu0 %v783, 127
        %v790 = vpop.permute.xlu0 %789
        %791 = vrot.lane.b32.xlu0 %v784, 127
        %v792 = vpop.permute.xlu0 %791
        %v793 = vsel %vm225, %v790, %v792
        %v794 = vsel %vm225, %v792, %v790
        %v795 = vpack.c.bf16 %v793, %v793
        %v796 = vpack.c.bf16 %v794, %v794
        %s797 = scalar_lea.vmem %s1, 80
        %v798 = vld [vmem:[%s797] sm:$0xf]
        %vm799 = vcmask 64512
        %v801 = vsel %vm799, %v798, 0
        %vm803 = vcmask 1043456
        %v805 = vsel %vm803, %v795, 0
        %v808 = vsel %vm803, %v796, 0
        %810 = vmatprep.subr.bf16.mxu0 0
        %811 = vmatpush1.bf16.msra.mxu0 0
        %812 = vmatprep.subr.bf16.mxu0 0
        %813 = vmatpush1.bf16.msra.mxu0 0
        %814 = vmatprep.subr.bf16.mxu0 0
        %815 = vmatpush1.bf16.msra.mxu0 0
        %816 = vmatprep.subr.bf16.mxu0 0
        %817 = vmatpush1.bf16.msra.mxu0 0
        %818 = vmatprep.subr.bf16.mxu0 0
        %819 = vmatpush1.bf16.msra.mxu0 0
        %820 = vmatprep.subr.bf16.mxu0 0
        %821 = vmatpush1.bf16.msra.mxu0 0
        %822 = vmatprep.subr.bf16.mxu0 0
        %823 = vmatpush1.bf16.msra.mxu0 0
        %824 = vmatprep.subr.bf16.mxu0 %v808
        %825 = vmatpush1.bf16.msra.mxu0 %v805
        %826 = vmatprep.subr.bf16.mxu0 0
        %827 = vmatpush2.bf16.msra.mxu0 0
        %828 = vmatprep.subr.bf16.mxu0 0
        %829 = vmatpush2.bf16.msra.mxu0 0
        %830 = vmatprep.subr.bf16.mxu0 0
        %831 = vmatpush2.bf16.msra.mxu0 0
        %832 = vmatprep.subr.bf16.mxu0 0
        %833 = vmatpush2.bf16.msra.mxu0 0
        %834 = vmatprep.subr.bf16.mxu0 0
        %835 = vmatpush2.bf16.msra.mxu0 0
        %836 = vmatprep.subr.bf16.mxu0 0
        %837 = vmatpush2.bf16.msra.mxu0 0
        %838 = vmatprep.subr.bf16.mxu0 0
        %839 = vmatpush2.bf16.msra.mxu0 0
        %840 = vmatprep.subr.bf16.mxu0 0
        %841 = vmatpush2.bf16.msra.mxu0 0
        %842 = vmatprep.mubr.bf16.mxu0 0
        %843 = vmatmul.mubr.bf16.gmra.mxu0 %v801
        %v844 = vpop.f32.mrf.mxu0
        %v845 = vadd.f32 0.0, %v844
        %v846 = vpop.f32.mrf.mxu0
        %v847 = vadd.f32 0.0, %v846
        %v848 = vpop.f32.mrf.mxu0
        %v849 = vpop.f32.mrf.mxu0
        %850 = vdwg.mxu0
        %v852 = vsel %vm799, %v788, 0
        %v855 = vsel %vm803, %v785, 0
        %v858 = vsel %vm803, %v786, 0
        %860 = vmatprep.subr.bf16.mxu0 0
        %861 = vmatpush1.bf16.msra.mxu0 0
        %862 = vmatprep.subr.bf16.mxu0 0
        %863 = vmatpush1.bf16.msra.mxu0 0
        %864 = vmatprep.subr.bf16.mxu0 0
        %865 = vmatpush1.bf16.msra.mxu0 0
        %866 = vmatprep.subr.bf16.mxu0 0
        %867 = vmatpush1.bf16.msra.mxu0 0
        %868 = vmatprep.subr.bf16.mxu0 0
        %869 = vmatpush1.bf16.msra.mxu0 0
        %870 = vmatprep.subr.bf16.mxu0 0
        %871 = vmatpush1.bf16.msra.mxu0 0
        %872 = vmatprep.subr.bf16.mxu0 0
        %873 = vmatpush1.bf16.msra.mxu0 0
        %874 = vmatprep.subr.bf16.mxu0 %v858
        %875 = vmatpush1.bf16.msra.mxu0 %v855
        %876 = vmatprep.subr.bf16.mxu0 0
        %877 = vmatpush2.bf16.msra.mxu0 0
        %878 = vmatprep.subr.bf16.mxu0 0
        %879 = vmatpush2.bf16.msra.mxu0 0
        %880 = vmatprep.subr.bf16.mxu0 0
        %881 = vmatpush2.bf16.msra.mxu0 0
        %882 = vmatprep.subr.bf16.mxu0 0
        %883 = vmatpush2.bf16.msra.mxu0 0
        %884 = vmatprep.subr.bf16.mxu0 0
        %885 = vmatpush2.bf16.msra.mxu0 0
        %886 = vmatprep.subr.bf16.mxu0 0
        %887 = vmatpush2.bf16.msra.mxu0 0
        %888 = vmatprep.subr.bf16.mxu0 0
        %889 = vmatpush2.bf16.msra.mxu0 0
        %890 = vmatprep.subr.bf16.mxu0 0
        %891 = vmatpush2.bf16.msra.mxu0 0
        %892 = vmatprep.mubr.bf16.mxu0 0
        %893 = vmatmul.mubr.bf16.gmra.mxu0 %v852
        %v894 = vpop.f32.mrf.mxu0
        %v895 = vadd.f32 %v845, %v894
        %v896 = vpop.f32.mrf.mxu0
        %v897 = vadd.f32 %v847, %v896
        %v898 = vpop.f32.mrf.mxu0
        %v899 = vpop.f32.mrf.mxu0
        %900 = vdwg.mxu0
        %901 = vrot.lane.b32.xlu0 %v783, 126
        %v902 = vpop.permute.xlu0 %901
        %903 = vrot.lane.b32.xlu0 %v784, 126
        %v904 = vpop.permute.xlu0 %903
        %v905 = vsel %vm338, %v902, %v904
        %v906 = vsel %vm338, %v904, %v902
        %v907 = vpack.c.bf16 %v905, %v905
        %v908 = vpack.c.bf16 %v906, %v906
        %s909 = scalar_lea.vmem %s1, 88
        %v910 = vld [vmem:[%s909] sm:$0xf]
        %v912 = vsel %vm799, %v910, 0
        %v915 = vsel %vm803, %v907, 0
        %v918 = vsel %vm803, %v908, 0
        %920 = vmatprep.subr.bf16.mxu0 0
        %921 = vmatpush1.bf16.msra.mxu0 0
        %922 = vmatprep.subr.bf16.mxu0 0
        %923 = vmatpush1.bf16.msra.mxu0 0
        %924 = vmatprep.subr.bf16.mxu0 0
        %925 = vmatpush1.bf16.msra.mxu0 0
        %926 = vmatprep.subr.bf16.mxu0 0
        %927 = vmatpush1.bf16.msra.mxu0 0
        %928 = vmatprep.subr.bf16.mxu0 0
        %929 = vmatpush1.bf16.msra.mxu0 0
        %930 = vmatprep.subr.bf16.mxu0 0
        %931 = vmatpush1.bf16.msra.mxu0 0
        %932 = vmatprep.subr.bf16.mxu0 0
        %933 = vmatpush1.bf16.msra.mxu0 0
        %934 = vmatprep.subr.bf16.mxu0 %v918
        %935 = vmatpush1.bf16.msra.mxu0 %v915
        %936 = vmatprep.subr.bf16.mxu0 0
        %937 = vmatpush2.bf16.msra.mxu0 0
        %938 = vmatprep.subr.bf16.mxu0 0
        %939 = vmatpush2.bf16.msra.mxu0 0
        %940 = vmatprep.subr.bf16.mxu0 0
        %941 = vmatpush2.bf16.msra.mxu0 0
        %942 = vmatprep.subr.bf16.mxu0 0
        %943 = vmatpush2.bf16.msra.mxu0 0
        %944 = vmatprep.subr.bf16.mxu0 0
        %945 = vmatpush2.bf16.msra.mxu0 0
        %946 = vmatprep.subr.bf16.mxu0 0
        %947 = vmatpush2.bf16.msra.mxu0 0
        %948 = vmatprep.subr.bf16.mxu0 0
        %949 = vmatpush2.bf16.msra.mxu0 0
        %950 = vmatprep.subr.bf16.mxu0 0
        %951 = vmatpush2.bf16.msra.mxu0 0
        %952 = vmatprep.mubr.bf16.mxu0 0
        %953 = vmatmul.mubr.bf16.gmra.mxu0 %v912
        %v954 = vpop.f32.mrf.mxu0
        %v955 = vadd.f32 0.0, %v954
        %v956 = vpop.f32.mrf.mxu0
        %v957 = vadd.f32 0.0, %v956
        %v958 = vpop.f32.mrf.mxu0
        %v959 = vpop.f32.mrf.mxu0
        %960 = vdwg.mxu0
        %v961 = vadd.f32 %v895, %v955
        %v962 = vadd.f32 %v897, %v957
        %963 = vrot.lane.b32.xlu0 %v783, 112
        %v964 = vpop.permute.xlu0 %963
        %965 = vrot.lane.b32.xlu0 %v784, 112
        %v966 = vpop.permute.xlu0 %965
        %v967 = vsel %vm401, %v964, %v966
        %v968 = vsel %vm401, %v966, %v964
        %v969 = vpack.c.bf16 %v967, %v967
        %v970 = vpack.c.bf16 %v968, %v968
        %s971 = scalar_lea.vmem %s1, 96
        %v972 = vld [vmem:[%s971] sm:$0xf]
        %v974 = vsel %vm799, %v972, 0
        %v977 = vsel %vm803, %v969, 0
        %v980 = vsel %vm803, %v970, 0
        %982 = vmatprep.subr.bf16.mxu0 0
        %983 = vmatpush1.bf16.msra.mxu0 0
        %984 = vmatprep.subr.bf16.mxu0 0
        %985 = vmatpush1.bf16.msra.mxu0 0
        %986 = vmatprep.subr.bf16.mxu0 0
        %987 = vmatpush1.bf16.msra.mxu0 0
        %988 = vmatprep.subr.bf16.mxu0 0
        %989 = vmatpush1.bf16.msra.mxu0 0
        %990 = vmatprep.subr.bf16.mxu0 0
        %991 = vmatpush1.bf16.msra.mxu0 0
        %992 = vmatprep.subr.bf16.mxu0 0
        %993 = vmatpush1.bf16.msra.mxu0 0
        %994 = vmatprep.subr.bf16.mxu0 0
        %995 = vmatpush1.bf16.msra.mxu0 0
        %996 = vmatprep.subr.bf16.mxu0 %v980
        %997 = vmatpush1.bf16.msra.mxu0 %v977
        %998 = vmatprep.subr.bf16.mxu0 0
        %999 = vmatpush2.bf16.msra.mxu0 0
        %1000 = vmatprep.subr.bf16.mxu0 0
        %1001 = vmatpush2.bf16.msra.mxu0 0
        %1002 = vmatprep.subr.bf16.mxu0 0
        %1003 = vmatpush2.bf16.msra.mxu0 0
        %1004 = vmatprep.subr.bf16.mxu0 0
        %1005 = vmatpush2.bf16.msra.mxu0 0
        %1006 = vmatprep.subr.bf16.mxu0 0
        %1007 = vmatpush2.bf16.msra.mxu0 0
        %1008 = vmatprep.subr.bf16.mxu0 0
        %1009 = vmatpush2.bf16.msra.mxu0 0
        %1010 = vmatprep.subr.bf16.mxu0 0
        %1011 = vmatpush2.bf16.msra.mxu0 0
        %1012 = vmatprep.subr.bf16.mxu0 0
        %1013 = vmatpush2.bf16.msra.mxu0 0
        %1014 = vmatprep.mubr.bf16.mxu0 0
        %1015 = vmatmul.mubr.bf16.gmra.mxu0 %v974
        %v1016 = vpop.f32.mrf.mxu0
        %v1017 = vadd.f32 0.0, %v1016
        %v1018 = vpop.f32.mrf.mxu0
        %v1019 = vadd.f32 0.0, %v1018
        %v1020 = vpop.f32.mrf.mxu0
        %v1021 = vpop.f32.mrf.mxu0
        %1022 = vdwg.mxu0
        %v1023 = vadd.f32 %v961, %v1017
        %v1024 = vadd.f32 %v962, %v1019
        %1025 = vrot.lane.b32.xlu0 %v783, 111
        %v1026 = vpop.permute.xlu0 %1025
        %1027 = vrot.lane.b32.xlu0 %v784, 111
        %v1028 = vpop.permute.xlu0 %1027
        %v1029 = vsel %vm464, %v1026, %v1028
        %v1030 = vsel %vm464, %v1028, %v1026
        %v1031 = vpack.c.bf16 %v1029, %v1029
        %v1032 = vpack.c.bf16 %v1030, %v1030
        %s1033 = scalar_lea.vmem %s1, 104
        %v1034 = vld [vmem:[%s1033] sm:$0xf]
        %v1036 = vsel %vm799, %v1034, 0
        %v1039 = vsel %vm803, %v1031, 0
        %v1042 = vsel %vm803, %v1032, 0
        %1044 = vmatprep.subr.bf16.mxu0 0
        %1045 = vmatpush1.bf16.msra.mxu0 0
        %1046 = vmatprep.subr.bf16.mxu0 0
        %1047 = vmatpush1.bf16.msra.mxu0 0
        %1048 = vmatprep.subr.bf16.mxu0 0
        %1049 = vmatpush1.bf16.msra.mxu0 0
        %1050 = vmatprep.subr.bf16.mxu0 0
        %1051 = vmatpush1.bf16.msra.mxu0 0
        %1052 = vmatprep.subr.bf16.mxu0 0
        %1053 = vmatpush1.bf16.msra.mxu0 0
        %1054 = vmatprep.subr.bf16.mxu0 0
        %1055 = vmatpush1.bf16.msra.mxu0 0
        %1056 = vmatprep.subr.bf16.mxu0 0
        %1057 = vmatpush1.bf16.msra.mxu0 0
        %1058 = vmatprep.subr.bf16.mxu0 %v1042
        %1059 = vmatpush1.bf16.msra.mxu0 %v1039
        %1060 = vmatprep.subr.bf16.mxu0 0
        %1061 = vmatpush2.bf16.msra.mxu0 0
        %1062 = vmatprep.subr.bf16.mxu0 0
        %1063 = vmatpush2.bf16.msra.mxu0 0
        %1064 = vmatprep.subr.bf16.mxu0 0
        %1065 = vmatpush2.bf16.msra.mxu0 0
        %1066 = vmatprep.subr.bf16.mxu0 0
        %1067 = vmatpush2.bf16.msra.mxu0 0
        %1068 = vmatprep.subr.bf16.mxu0 0
        %1069 = vmatpush2.bf16.msra.mxu0 0
        %1070 = vmatprep.subr.bf16.mxu0 0
        %1071 = vmatpush2.bf16.msra.mxu0 0
        %1072 = vmatprep.subr.bf16.mxu0 0
        %1073 = vmatpush2.bf16.msra.mxu0 0
        %1074 = vmatprep.subr.bf16.mxu0 0
        %1075 = vmatpush2.bf16.msra.mxu0 0
        %1076 = vmatprep.mubr.bf16.mxu0 0
        %1077 = vmatmul.mubr.bf16.gmra.mxu0 %v1036
        %v1078 = vpop.f32.mrf.mxu0
        %v1079 = vadd.f32 0.0, %v1078
        %v1080 = vpop.f32.mrf.mxu0
        %v1081 = vadd.f32 0.0, %v1080
        %v1082 = vpop.f32.mrf.mxu0
        %v1083 = vpop.f32.mrf.mxu0
        %1084 = vdwg.mxu0
        %v1085 = vadd.f32 %v1023, %v1079
        %v1086 = vadd.f32 %v1024, %v1081
        %1087 = vrot.lane.b32.xlu0 %v783, 110
        %v1088 = vpop.permute.xlu0 %1087
        %1089 = vrot.lane.b32.xlu0 %v784, 110
        %v1090 = vpop.permute.xlu0 %1089
        %v1091 = vsel %vm527, %v1088, %v1090
        %v1092 = vsel %vm527, %v1090, %v1088
        %v1093 = vpack.c.bf16 %v1091, %v1091
        %v1094 = vpack.c.bf16 %v1092, %v1092
        %s1095 = scalar_lea.vmem %s1, 112
        %v1096 = vld [vmem:[%s1095] sm:$0xf]
        %v1098 = vsel %vm799, %v1096, 0
        %v1101 = vsel %vm803, %v1093, 0
        %v1104 = vsel %vm803, %v1094, 0
        %1106 = vmatprep.subr.bf16.mxu0 0
        %1107 = vmatpush1.bf16.msra.mxu0 0
        %1108 = vmatprep.subr.bf16.mxu0 0
        %1109 = vmatpush1.bf16.msra.mxu0 0
        %1110 = vmatprep.subr.bf16.mxu0 0
        %1111 = vmatpush1.bf16.msra.mxu0 0
        %1112 = vmatprep.subr.bf16.mxu0 0
        %1113 = vmatpush1.bf16.msra.mxu0 0
        %1114 = vmatprep.subr.bf16.mxu0 0
        %1115 = vmatpush1.bf16.msra.mxu0 0
        %1116 = vmatprep.subr.bf16.mxu0 0
        %1117 = vmatpush1.bf16.msra.mxu0 0
        %1118 = vmatprep.subr.bf16.mxu0 0
        %1119 = vmatpush1.bf16.msra.mxu0 0
        %1120 = vmatprep.subr.bf16.mxu0 %v1104
        %1121 = vmatpush1.bf16.msra.mxu0 %v1101
        %1122 = vmatprep.subr.bf16.mxu0 0
        %1123 = vmatpush2.bf16.msra.mxu0 0
        %1124 = vmatprep.subr.bf16.mxu0 0
        %1125 = vmatpush2.bf16.msra.mxu0 0
        %1126 = vmatprep.subr.bf16.mxu0 0
        %1127 = vmatpush2.bf16.msra.mxu0 0
        %1128 = vmatprep.subr.bf16.mxu0 0
        %1129 = vmatpush2.bf16.msra.mxu0 0
        %1130 = vmatprep.subr.bf16.mxu0 0
        %1131 = vmatpush2.bf16.msra.mxu0 0
        %1132 = vmatprep.subr.bf16.mxu0 0
        %1133 = vmatpush2.bf16.msra.mxu0 0
        %1134 = vmatprep.subr.bf16.mxu0 0
        %1135 = vmatpush2.bf16.msra.mxu0 0
        %1136 = vmatprep.subr.bf16.mxu0 0
        %1137 = vmatpush2.bf16.msra.mxu0 0
        %1138 = vmatprep.mubr.bf16.mxu0 0
        %1139 = vmatmul.mubr.bf16.gmra.mxu0 %v1098
        %v1140 = vpop.f32.mrf.mxu0
        %v1141 = vadd.f32 0.0, %v1140
        %v1142 = vpop.f32.mrf.mxu0
        %v1143 = vadd.f32 0.0, %v1142
        %v1144 = vpop.f32.mrf.mxu0
        %v1145 = vpop.f32.mrf.mxu0
        %1146 = vdwg.mxu0
        %v1147 = vadd.f32 %v1085, %v1141
        %v1148 = vadd.f32 %v1086, %v1143
        %1149 = vrot.lane.b32.xlu0 %v783, 96
        %v1150 = vpop.permute.xlu0 %1149
        %1151 = vrot.lane.b32.xlu0 %v784, 96
        %v1152 = vpop.permute.xlu0 %1151
        %v1153 = vsel %vm590, %v1150, %v1152
        %v1154 = vsel %vm590, %v1152, %v1150
        %v1155 = vpack.c.bf16 %v1153, %v1153
        %v1156 = vpack.c.bf16 %v1154, %v1154
        %s1157 = scalar_lea.vmem %s1, 120
        %v1158 = vld [vmem:[%s1157] sm:$0xf]
        %v1160 = vsel %vm799, %v1158, 0
        %v1163 = vsel %vm803, %v1155, 0
        %v1166 = vsel %vm803, %v1156, 0
        %1168 = vmatprep.subr.bf16.mxu0 0
        %1169 = vmatpush1.bf16.msra.mxu0 0
        %1170 = vmatprep.subr.bf16.mxu0 0
        %1171 = vmatpush1.bf16.msra.mxu0 0
        %1172 = vmatprep.subr.bf16.mxu0 0
        %1173 = vmatpush1.bf16.msra.mxu0 0
        %1174 = vmatprep.subr.bf16.mxu0 0
        %1175 = vmatpush1.bf16.msra.mxu0 0
        %1176 = vmatprep.subr.bf16.mxu0 0
        %1177 = vmatpush1.bf16.msra.mxu0 0
        %1178 = vmatprep.subr.bf16.mxu0 0
        %1179 = vmatpush1.bf16.msra.mxu0 0
        %1180 = vmatprep.subr.bf16.mxu0 0
        %1181 = vmatpush1.bf16.msra.mxu0 0
        %1182 = vmatprep.subr.bf16.mxu0 %v1166
        %1183 = vmatpush1.bf16.msra.mxu0 %v1163
        %1184 = vmatprep.subr.bf16.mxu0 0
        %1185 = vmatpush2.bf16.msra.mxu0 0
        %1186 = vmatprep.subr.bf16.mxu0 0
        %1187 = vmatpush2.bf16.msra.mxu0 0
        %1188 = vmatprep.subr.bf16.mxu0 0
        %1189 = vmatpush2.bf16.msra.mxu0 0
        %1190 = vmatprep.subr.bf16.mxu0 0
        %1191 = vmatpush2.bf16.msra.mxu0 0
        %1192 = vmatprep.subr.bf16.mxu0 0
        %1193 = vmatpush2.bf16.msra.mxu0 0
        %1194 = vmatprep.subr.bf16.mxu0 0
        %1195 = vmatpush2.bf16.msra.mxu0 0
        %1196 = vmatprep.subr.bf16.mxu0 0
        %1197 = vmatpush2.bf16.msra.mxu0 0
        %1198 = vmatprep.subr.bf16.mxu0 0
        %1199 = vmatpush2.bf16.msra.mxu0 0
        %1200 = vmatprep.mubr.bf16.mxu0 0
        %1201 = vmatmul.mubr.bf16.gmra.mxu0 %v1160
        %v1202 = vpop.f32.mrf.mxu0
        %v1203 = vadd.f32 0.0, %v1202
        %v1204 = vpop.f32.mrf.mxu0
        %v1205 = vadd.f32 0.0, %v1204
        %v1206 = vpop.f32.mrf.mxu0
        %v1207 = vpop.f32.mrf.mxu0
        %1208 = vdwg.mxu0
        %v1209 = vadd.f32 %v1147, %v1203
        %v1210 = vadd.f32 %v1148, %v1205
        %1211 = vrot.lane.b32.xlu0 %v783, 95
        %v1212 = vpop.permute.xlu0 %1211
        %1213 = vrot.lane.b32.xlu0 %v784, 95
        %v1214 = vpop.permute.xlu0 %1213
        %v1215 = vsel %vm653, %v1212, %v1214
        %v1216 = vsel %vm653, %v1214, %v1212
        %v1217 = vpack.c.bf16 %v1215, %v1215
        %v1218 = vpack.c.bf16 %v1216, %v1216
        %s1219 = scalar_lea.vmem %s1, 128
        %v1220 = vld [vmem:[%s1219] sm:$0xf]
        %v1222 = vsel %vm799, %v1220, 0
        %v1225 = vsel %vm803, %v1217, 0
        %v1228 = vsel %vm803, %v1218, 0
        %1230 = vmatprep.subr.bf16.mxu0 0
        %1231 = vmatpush1.bf16.msra.mxu0 0
        %1232 = vmatprep.subr.bf16.mxu0 0
        %1233 = vmatpush1.bf16.msra.mxu0 0
        %1234 = vmatprep.subr.bf16.mxu0 0
        %1235 = vmatpush1.bf16.msra.mxu0 0
        %1236 = vmatprep.subr.bf16.mxu0 0
        %1237 = vmatpush1.bf16.msra.mxu0 0
        %1238 = vmatprep.subr.bf16.mxu0 0
        %1239 = vmatpush1.bf16.msra.mxu0 0
        %1240 = vmatprep.subr.bf16.mxu0 0
        %1241 = vmatpush1.bf16.msra.mxu0 0
        %1242 = vmatprep.subr.bf16.mxu0 0
        %1243 = vmatpush1.bf16.msra.mxu0 0
        %1244 = vmatprep.subr.bf16.mxu0 %v1228
        %1245 = vmatpush1.bf16.msra.mxu0 %v1225
        %1246 = vmatprep.subr.bf16.mxu0 0
        %1247 = vmatpush2.bf16.msra.mxu0 0
        %1248 = vmatprep.subr.bf16.mxu0 0
        %1249 = vmatpush2.bf16.msra.mxu0 0
        %1250 = vmatprep.subr.bf16.mxu0 0
        %1251 = vmatpush2.bf16.msra.mxu0 0
        %1252 = vmatprep.subr.bf16.mxu0 0
        %1253 = vmatpush2.bf16.msra.mxu0 0
        %1254 = vmatprep.subr.bf16.mxu0 0
        %1255 = vmatpush2.bf16.msra.mxu0 0
        %1256 = vmatprep.subr.bf16.mxu0 0
        %1257 = vmatpush2.bf16.msra.mxu0 0
        %1258 = vmatprep.subr.bf16.mxu0 0
        %1259 = vmatpush2.bf16.msra.mxu0 0
        %1260 = vmatprep.subr.bf16.mxu0 0
        %1261 = vmatpush2.bf16.msra.mxu0 0
        %1262 = vmatprep.mubr.bf16.mxu0 0
        %1263 = vmatmul.mubr.bf16.gmra.mxu0 %v1222
        %v1264 = vpop.f32.mrf.mxu0
        %v1265 = vadd.f32 0.0, %v1264
        %v1266 = vpop.f32.mrf.mxu0
        %v1267 = vadd.f32 0.0, %v1266
        %v1268 = vpop.f32.mrf.mxu0
        %v1269 = vpop.f32.mrf.mxu0
        %1270 = vdwg.mxu0
        %v1271 = vadd.f32 %v1209, %v1265
        %v1272 = vadd.f32 %v1210, %v1267
        %1273 = vrot.lane.b32.xlu0 %v783, 94
        %v1274 = vpop.permute.xlu0 %1273
        %1275 = vrot.lane.b32.xlu0 %v784, 94
        %v1276 = vpop.permute.xlu0 %1275
        %v1277 = vsel %vm716, %v1274, %v1276
        %v1278 = vsel %vm716, %v1276, %v1274
        %v1279 = vpack.c.bf16 %v1277, %v1277
        %v1280 = vpack.c.bf16 %v1278, %v1278
        %s1281 = scalar_lea.vmem %s1, 136
        %v1282 = vld [vmem:[%s1281] sm:$0xf]
        %v1284 = vsel %vm799, %v1282, 0
        %v1287 = vsel %vm803, %v1279, 0
        %v1290 = vsel %vm803, %v1280, 0
        %1292 = vmatprep.subr.bf16.mxu0 0
        %1293 = vmatpush1.bf16.msra.mxu0 0
        %1294 = vmatprep.subr.bf16.mxu0 0
        %1295 = vmatpush1.bf16.msra.mxu0 0
        %1296 = vmatprep.subr.bf16.mxu0 0
        %1297 = vmatpush1.bf16.msra.mxu0 0
        %1298 = vmatprep.subr.bf16.mxu0 0
        %1299 = vmatpush1.bf16.msra.mxu0 0
        %1300 = vmatprep.subr.bf16.mxu0 0
        %1301 = vmatpush1.bf16.msra.mxu0 0
        %1302 = vmatprep.subr.bf16.mxu0 0
        %1303 = vmatpush1.bf16.msra.mxu0 0
        %1304 = vmatprep.subr.bf16.mxu0 0
        %1305 = vmatpush1.bf16.msra.mxu0 0
        %1306 = vmatprep.subr.bf16.mxu0 %v1290
        %1307 = vmatpush1.bf16.msra.mxu0 %v1287
        %1308 = vmatprep.subr.bf16.mxu0 0
        %1309 = vmatpush2.bf16.msra.mxu0 0
        %1310 = vmatprep.subr.bf16.mxu0 0
        %1311 = vmatpush2.bf16.msra.mxu0 0
        %1312 = vmatprep.subr.bf16.mxu0 0
        %1313 = vmatpush2.bf16.msra.mxu0 0
        %1314 = vmatprep.subr.bf16.mxu0 0
        %1315 = vmatpush2.bf16.msra.mxu0 0
        %1316 = vmatprep.subr.bf16.mxu0 0
        %1317 = vmatpush2.bf16.msra.mxu0 0
        %1318 = vmatprep.subr.bf16.mxu0 0
        %1319 = vmatpush2.bf16.msra.mxu0 0
        %1320 = vmatprep.subr.bf16.mxu0 0
        %1321 = vmatpush2.bf16.msra.mxu0 0
        %1322 = vmatprep.subr.bf16.mxu0 0
        %1323 = vmatpush2.bf16.msra.mxu0 0
        %1324 = vmatprep.mubr.bf16.mxu0 0
        %1325 = vmatmul.mubr.bf16.gmra.mxu0 %v1284
        %v1326 = vpop.f32.mrf.mxu0
        %v1327 = vadd.f32 0.0, %v1326
        %v1328 = vpop.f32.mrf.mxu0
        %v1329 = vadd.f32 0.0, %v1328
        %v1330 = vpop.f32.mrf.mxu0
        %v1331 = vpop.f32.mrf.mxu0
        %1332 = vdwg.mxu0
        %v1333 = vadd.f32 %v1271, %v1327
        %v1334 = vadd.f32 %v1272, %v1329
        %s1335 = scalar_lea.vmem %s2, 16
        %v1336 = vld [vmem:[%s1335] sm:$0xff]
        %1338 = vset.pattern.permute.xlu0 0
        %1339 = vperm.xlu0 %1338, %v1336
        %v1340 = vpop.permute.xlu0 %1339
        %v1342 = vadd.f32 %v1333, %v1340
        %v1343 = vadd.f32 %v1334, %v1340
        %1344 = vst [vmem:[%s195] sm:$0xff] %v1342
        %1345 = vst [vmem:[%s195 + $0x8] sm:$0xff] %v1343
        %1346 = vrot.lane.b32.xlu0 %v1342, 127
        %v1347 = vpop.permute.xlu0 %1346
        %1348 = vrot.lane.b32.xlu0 %v1343, 127
        %v1349 = vpop.permute.xlu0 %1348
        %v1350 = vsel %vm225, %v1347, %v1349
        %v1351 = vsel %vm225, %v1349, %v1347
        %v1352 = vmax.f32 %v1342, %v1350
        %v1353 = vmax.f32 %v1343, %v1351
        %1354 = vrot.lane.b32.xlu0 %v1342, 112
        %v1355 = vpop.permute.xlu0 %1354
        %1356 = vrot.lane.b32.xlu0 %v1343, 112
        %v1357 = vpop.permute.xlu0 %1356
        %v1358 = vsel %vm401, %v1355, %v1357
        %v1359 = vsel %vm401, %v1357, %v1355
        %1360 = vrot.lane.b32.xlu0 %v1342, 111
        %v1361 = vpop.permute.xlu0 %1360
        %1362 = vrot.lane.b32.xlu0 %v1343, 111
        %v1363 = vpop.permute.xlu0 %1362
        %v1364 = vsel %vm464, %v1361, %v1363
        %v1365 = vsel %vm464, %v1363, %v1361
        %v1366 = vmax.f32 %v1358, %v1364
        %v1367 = vmax.f32 %v1359, %v1365
        %v1368 = vmax.f32 %v1352, %v1366
        %v1369 = vmax.f32 %v1353, %v1367
        %v1370 = vpack.c.bf16 %v1368, %v1368
        %v1371 = vpack.c.bf16 %v1369, %v1369
        %s1372 = scalar_lea.vmem %s1, 144
        %v1373 = vld [vmem:[%s1372] sm:$0xf]
        %v1374 = vld [vmem:[%s1372 + $0x4] sm:$0xf]
        %1375 = vrot.lane.b32.xlu0 %v1368, 126
        %v1376 = vpop.permute.xlu0 %1375
        %1377 = vrot.lane.b32.xlu0 %v1369, 126
        %v1378 = vpop.permute.xlu0 %1377
        %v1379 = vsel %vm338, %v1376, %v1378
        %v1380 = vsel %vm338, %v1378, %v1376
        %v1381 = vpack.c.bf16 %v1379, %v1379
        %v1382 = vpack.c.bf16 %v1380, %v1380
        %s1383 = scalar_lea.vmem %s1, 152
        %v1384 = vld [vmem:[%s1383] sm:$0xf]
        %v1385 = vld [vmem:[%s1383 + $0x4] sm:$0xf]
        %v1388 = vunpack.c.l.b16 %v1384
        %v1389 = vunpack.c.l.b16 %v1385
        %v1390 = vpack.c.b16 %v1389, %v1388
        %v1392 = vsel %vm799, %v1390, 0
        %v1395 = vsel %vm803, %v1381, 0
        %v1398 = vsel %vm803, %v1382, 0
        %1400 = vmatprep.subr.bf16.mxu0 0
        %1401 = vmatpush1.bf16.msra.mxu0 0
        %1402 = vmatprep.subr.bf16.mxu0 0
        %1403 = vmatpush1.bf16.msra.mxu0 0
        %1404 = vmatprep.subr.bf16.mxu0 0
        %1405 = vmatpush1.bf16.msra.mxu0 0
        %1406 = vmatprep.subr.bf16.mxu0 0
        %1407 = vmatpush1.bf16.msra.mxu0 0
        %1408 = vmatprep.subr.bf16.mxu0 0
        %1409 = vmatpush1.bf16.msra.mxu0 0
        %1410 = vmatprep.subr.bf16.mxu0 0
        %1411 = vmatpush1.bf16.msra.mxu0 0
        %1412 = vmatprep.subr.bf16.mxu0 0
        %1413 = vmatpush1.bf16.msra.mxu0 0
        %1414 = vmatprep.subr.bf16.mxu0 %v1398
        %1415 = vmatpush1.bf16.msra.mxu0 %v1395
        %1416 = vmatprep.subr.bf16.mxu0 0
        %1417 = vmatpush2.bf16.msra.mxu0 0
        %1418 = vmatprep.subr.bf16.mxu0 0
        %1419 = vmatpush2.bf16.msra.mxu0 0
        %1420 = vmatprep.subr.bf16.mxu0 0
        %1421 = vmatpush2.bf16.msra.mxu0 0
        %1422 = vmatprep.subr.bf16.mxu0 0
        %1423 = vmatpush2.bf16.msra.mxu0 0
        %1424 = vmatprep.subr.bf16.mxu0 0
        %1425 = vmatpush2.bf16.msra.mxu0 0
        %1426 = vmatprep.subr.bf16.mxu0 0
        %1427 = vmatpush2.bf16.msra.mxu0 0
        %1428 = vmatprep.subr.bf16.mxu0 0
        %1429 = vmatpush2.bf16.msra.mxu0 0
        %1430 = vmatprep.subr.bf16.mxu0 0
        %1431 = vmatpush2.bf16.msra.mxu0 0
        %1432 = vmatprep.mubr.bf16.mxu0 0
        %1433 = vmatmul.mubr.bf16.gmra.mxu0 %v1392
        %v1434 = vpop.f32.mrf.mxu0
        %v1435 = vadd.f32 0.0, %v1434
        %v1436 = vpop.f32.mrf.mxu0
        %v1437 = vadd.f32 0.0, %v1436
        %v1438 = vpop.f32.mrf.mxu0
        %v1439 = vadd.f32 0.0, %v1438
        %v1440 = vpop.f32.mrf.mxu0
        %v1441 = vadd.f32 0.0, %v1440
        %1442 = vdwg.mxu0
        %v1445 = vunpack.c.l.b16 %v1373
        %v1446 = vunpack.c.l.b16 %v1374
        %v1447 = vpack.c.b16 %v1446, %v1445
        %v1449 = vsel %vm799, %v1447, 0
        %v1452 = vsel %vm803, %v1370, 0
        %v1455 = vsel %vm803, %v1371, 0
        %1457 = vmatprep.subr.bf16.mxu0 0
        %1458 = vmatpush1.bf16.msra.mxu0 0
        %1459 = vmatprep.subr.bf16.mxu0 0
        %1460 = vmatpush1.bf16.msra.mxu0 0
        %1461 = vmatprep.subr.bf16.mxu0 0
        %1462 = vmatpush1.bf16.msra.mxu0 0
        %1463 = vmatprep.subr.bf16.mxu0 0
        %1464 = vmatpush1.bf16.msra.mxu0 0
        %1465 = vmatprep.subr.bf16.mxu0 0
        %1466 = vmatpush1.bf16.msra.mxu0 0
        %1467 = vmatprep.subr.bf16.mxu0 0
        %1468 = vmatpush1.bf16.msra.mxu0 0
        %1469 = vmatprep.subr.bf16.mxu0 0
        %1470 = vmatpush1.bf16.msra.mxu0 0
        %1471 = vmatprep.subr.bf16.mxu0 %v1455
        %1472 = vmatpush1.bf16.msra.mxu0 %v1452
        %1473 = vmatprep.subr.bf16.mxu0 0
        %1474 = vmatpush2.bf16.msra.mxu0 0
        %1475 = vmatprep.subr.bf16.mxu0 0
        %1476 = vmatpush2.bf16.msra.mxu0 0
        %1477 = vmatprep.subr.bf16.mxu0 0
        %1478 = vmatpush2.bf16.msra.mxu0 0
        %1479 = vmatprep.subr.bf16.mxu0 0
        %1480 = vmatpush2.bf16.msra.mxu0 0
        %1481 = vmatprep.subr.bf16.mxu0 0
        %1482 = vmatpush2.bf16.msra.mxu0 0
        %1483 = vmatprep.subr.bf16.mxu0 0
        %1484 = vmatpush2.bf16.msra.mxu0 0
        %1485 = vmatprep.subr.bf16.mxu0 0
        %1486 = vmatpush2.bf16.msra.mxu0 0
        %1487 = vmatprep.subr.bf16.mxu0 0
        %1488 = vmatpush2.bf16.msra.mxu0 0
        %1489 = vmatprep.mubr.bf16.mxu0 0
        %1490 = vmatmul.mubr.bf16.gmra.mxu0 %v1449
        %v1491 = vpop.f32.mrf.mxu0
        %v1492 = vadd.f32 %v1435, %v1491
        %v1493 = vpop.f32.mrf.mxu0
        %v1494 = vadd.f32 %v1437, %v1493
        %v1495 = vpop.f32.mrf.mxu0
        %v1496 = vadd.f32 %v1439, %v1495
        %v1497 = vpop.f32.mrf.mxu0
        %v1498 = vadd.f32 %v1441, %v1497
        %1499 = vdwg.mxu0
        %1500 = vrot.lane.b32.xlu0 %v1368, 124
        %v1501 = vpop.permute.xlu0 %1500
        %1502 = vrot.lane.b32.xlu0 %v1369, 124
        %v1503 = vpop.permute.xlu0 %1502
        %vm1504 = vcmp.lt.s32.totalorder %v224, 124
        %v1505 = vsel %vm1504, %v1501, %v1503
        %v1506 = vsel %vm1504, %v1503, %v1501
        %v1507 = vpack.c.bf16 %v1505, %v1505
        %v1508 = vpack.c.bf16 %v1506, %v1506
        %s1509 = scalar_lea.vmem %s1, 160
        %v1510 = vld [vmem:[%s1509] sm:$0xf]
        %v1511 = vld [vmem:[%s1509 + $0x4] sm:$0xf]
        %v1514 = vunpack.c.l.b16 %v1510
        %v1515 = vunpack.c.l.b16 %v1511
        %v1516 = vpack.c.b16 %v1515, %v1514
        %v1518 = vsel %vm799, %v1516, 0
        %v1521 = vsel %vm803, %v1507, 0
        %v1524 = vsel %vm803, %v1508, 0
        %1526 = vmatprep.subr.bf16.mxu0 0
        %1527 = vmatpush1.bf16.msra.mxu0 0
        %1528 = vmatprep.subr.bf16.mxu0 0
        %1529 = vmatpush1.bf16.msra.mxu0 0
        %1530 = vmatprep.subr.bf16.mxu0 0
        %1531 = vmatpush1.bf16.msra.mxu0 0
        %1532 = vmatprep.subr.bf16.mxu0 0
        %1533 = vmatpush1.bf16.msra.mxu0 0
        %1534 = vmatprep.subr.bf16.mxu0 0
        %1535 = vmatpush1.bf16.msra.mxu0 0
        %1536 = vmatprep.subr.bf16.mxu0 0
        %1537 = vmatpush1.bf16.msra.mxu0 0
        %1538 = vmatprep.subr.bf16.mxu0 0
        %1539 = vmatpush1.bf16.msra.mxu0 0
        %1540 = vmatprep.subr.bf16.mxu0 %v1524
        %1541 = vmatpush1.bf16.msra.mxu0 %v1521
        %1542 = vmatprep.subr.bf16.mxu0 0
        %1543 = vmatpush2.bf16.msra.mxu0 0
        %1544 = vmatprep.subr.bf16.mxu0 0
        %1545 = vmatpush2.bf16.msra.mxu0 0
        %1546 = vmatprep.subr.bf16.mxu0 0
        %1547 = vmatpush2.bf16.msra.mxu0 0
        %1548 = vmatprep.subr.bf16.mxu0 0
        %1549 = vmatpush2.bf16.msra.mxu0 0
        %1550 = vmatprep.subr.bf16.mxu0 0
        %1551 = vmatpush2.bf16.msra.mxu0 0
        %1552 = vmatprep.subr.bf16.mxu0 0
        %1553 = vmatpush2.bf16.msra.mxu0 0
        %1554 = vmatprep.subr.bf16.mxu0 0
        %1555 = vmatpush2.bf16.msra.mxu0 0
        %1556 = vmatprep.subr.bf16.mxu0 0
        %1557 = vmatpush2.bf16.msra.mxu0 0
        %1558 = vmatprep.mubr.bf16.mxu0 0
        %1559 = vmatmul.mubr.bf16.gmra.mxu0 %v1518
        %v1560 = vpop.f32.mrf.mxu0
        %v1561 = vadd.f32 0.0, %v1560
        %v1562 = vpop.f32.mrf.mxu0
        %v1563 = vadd.f32 0.0, %v1562
        %v1564 = vpop.f32.mrf.mxu0
        %v1565 = vadd.f32 0.0, %v1564
        %v1566 = vpop.f32.mrf.mxu0
        %v1567 = vadd.f32 0.0, %v1566
        %1568 = vdwg.mxu0
        %v1569 = vadd.f32 %v1492, %v1561
        %v1570 = vadd.f32 %v1494, %v1563
        %v1571 = vadd.f32 %v1496, %v1565
        %v1572 = vadd.f32 %v1498, %v1567
        %1573 = vrot.lane.b32.xlu0 %v1368, 96
        %v1574 = vpop.permute.xlu0 %1573
        %1575 = vrot.lane.b32.xlu0 %v1369, 96
        %v1576 = vpop.permute.xlu0 %1575
        %v1577 = vsel %vm590, %v1574, %v1576
        %v1578 = vsel %vm590, %v1576, %v1574
        %v1579 = vpack.c.bf16 %v1577, %v1577
        %v1580 = vpack.c.bf16 %v1578, %v1578
        %s1581 = scalar_lea.vmem %s1, 168
        %v1582 = vld [vmem:[%s1581] sm:$0xf]
        %v1583 = vld [vmem:[%s1581 + $0x4] sm:$0xf]
        %v1586 = vunpack.c.l.b16 %v1582
        %v1587 = vunpack.c.l.b16 %v1583
        %v1588 = vpack.c.b16 %v1587, %v1586
        %v1590 = vsel %vm799, %v1588, 0
        %v1593 = vsel %vm803, %v1579, 0
        %v1596 = vsel %vm803, %v1580, 0
        %1598 = vmatprep.subr.bf16.mxu0 0
        %1599 = vmatpush1.bf16.msra.mxu0 0
        %1600 = vmatprep.subr.bf16.mxu0 0
        %1601 = vmatpush1.bf16.msra.mxu0 0
        %1602 = vmatprep.subr.bf16.mxu0 0
        %1603 = vmatpush1.bf16.msra.mxu0 0
        %1604 = vmatprep.subr.bf16.mxu0 0
        %1605 = vmatpush1.bf16.msra.mxu0 0
        %1606 = vmatprep.subr.bf16.mxu0 0
        %1607 = vmatpush1.bf16.msra.mxu0 0
        %1608 = vmatprep.subr.bf16.mxu0 0
        %1609 = vmatpush1.bf16.msra.mxu0 0
        %1610 = vmatprep.subr.bf16.mxu0 0
        %1611 = vmatpush1.bf16.msra.mxu0 0
        %1612 = vmatprep.subr.bf16.mxu0 %v1596
        %1613 = vmatpush1.bf16.msra.mxu0 %v1593
        %1614 = vmatprep.subr.bf16.mxu0 0
        %1615 = vmatpush2.bf16.msra.mxu0 0
        %1616 = vmatprep.subr.bf16.mxu0 0
        %1617 = vmatpush2.bf16.msra.mxu0 0
        %1618 = vmatprep.subr.bf16.mxu0 0
        %1619 = vmatpush2.bf16.msra.mxu0 0
        %1620 = vmatprep.subr.bf16.mxu0 0
        %1621 = vmatpush2.bf16.msra.mxu0 0
        %1622 = vmatprep.subr.bf16.mxu0 0
        %1623 = vmatpush2.bf16.msra.mxu0 0
        %1624 = vmatprep.subr.bf16.mxu0 0
        %1625 = vmatpush2.bf16.msra.mxu0 0
        %1626 = vmatprep.subr.bf16.mxu0 0
        %1627 = vmatpush2.bf16.msra.mxu0 0
        %1628 = vmatprep.subr.bf16.mxu0 0
        %1629 = vmatpush2.bf16.msra.mxu0 0
        %1630 = vmatprep.mubr.bf16.mxu0 0
        %1631 = vmatmul.mubr.bf16.gmra.mxu0 %v1590
        %v1632 = vpop.f32.mrf.mxu0
        %v1633 = vadd.f32 0.0, %v1632
        %v1634 = vpop.f32.mrf.mxu0
        %v1635 = vadd.f32 0.0, %v1634
        %v1636 = vpop.f32.mrf.mxu0
        %v1637 = vadd.f32 0.0, %v1636
        %v1638 = vpop.f32.mrf.mxu0
        %v1639 = vadd.f32 0.0, %v1638
        %1640 = vdwg.mxu0
        %v1641 = vadd.f32 %v1569, %v1633
        %v1642 = vadd.f32 %v1570, %v1635
        %v1643 = vadd.f32 %v1571, %v1637
        %v1644 = vadd.f32 %v1572, %v1639
        %1645 = vrot.lane.b32.xlu0 %v1368, 94
        %v1646 = vpop.permute.xlu0 %1645
        %1647 = vrot.lane.b32.xlu0 %v1369, 94
        %v1648 = vpop.permute.xlu0 %1647
        %v1649 = vsel %vm716, %v1646, %v1648
        %v1650 = vsel %vm716, %v1648, %v1646
        %v1651 = vpack.c.bf16 %v1649, %v1649
        %v1652 = vpack.c.bf16 %v1650, %v1650
        %s1653 = scalar_lea.vmem %s1, 176
        %v1654 = vld [vmem:[%s1653] sm:$0xf]
        %v1655 = vld [vmem:[%s1653 + $0x4] sm:$0xf]
        %v1658 = vunpack.c.l.b16 %v1654
        %v1659 = vunpack.c.l.b16 %v1655
        %v1660 = vpack.c.b16 %v1659, %v1658
        %v1662 = vsel %vm799, %v1660, 0
        %v1665 = vsel %vm803, %v1651, 0
        %v1668 = vsel %vm803, %v1652, 0
        %1670 = vmatprep.subr.bf16.mxu0 0
        %1671 = vmatpush1.bf16.msra.mxu0 0
        %1672 = vmatprep.subr.bf16.mxu0 0
        %1673 = vmatpush1.bf16.msra.mxu0 0
        %1674 = vmatprep.subr.bf16.mxu0 0
        %1675 = vmatpush1.bf16.msra.mxu0 0
        %1676 = vmatprep.subr.bf16.mxu0 0
        %1677 = vmatpush1.bf16.msra.mxu0 0
        %1678 = vmatprep.subr.bf16.mxu0 0
        %1679 = vmatpush1.bf16.msra.mxu0 0
        %1680 = vmatprep.subr.bf16.mxu0 0
        %1681 = vmatpush1.bf16.msra.mxu0 0
        %1682 = vmatprep.subr.bf16.mxu0 0
        %1683 = vmatpush1.bf16.msra.mxu0 0
        %1684 = vmatprep.subr.bf16.mxu0 %v1668
        %1685 = vmatpush1.bf16.msra.mxu0 %v1665
        %1686 = vmatprep.subr.bf16.mxu0 0
        %1687 = vmatpush2.bf16.msra.mxu0 0
        %1688 = vmatprep.subr.bf16.mxu0 0
        %1689 = vmatpush2.bf16.msra.mxu0 0
        %1690 = vmatprep.subr.bf16.mxu0 0
        %1691 = vmatpush2.bf16.msra.mxu0 0
        %1692 = vmatprep.subr.bf16.mxu0 0
        %1693 = vmatpush2.bf16.msra.mxu0 0
        %1694 = vmatprep.subr.bf16.mxu0 0
        %1695 = vmatpush2.bf16.msra.mxu0 0
        %1696 = vmatprep.subr.bf16.mxu0 0
        %1697 = vmatpush2.bf16.msra.mxu0 0
        %1698 = vmatprep.subr.bf16.mxu0 0
        %1699 = vmatpush2.bf16.msra.mxu0 0
        %1700 = vmatprep.subr.bf16.mxu0 0
        %1701 = vmatpush2.bf16.msra.mxu0 0
        %1702 = vmatprep.mubr.bf16.mxu0 0
        %1703 = vmatmul.mubr.bf16.gmra.mxu0 %v1662
        %v1704 = vpop.f32.mrf.mxu0
        %v1705 = vadd.f32 0.0, %v1704
        %v1706 = vpop.f32.mrf.mxu0
        %v1707 = vadd.f32 0.0, %v1706
        %v1708 = vpop.f32.mrf.mxu0
        %v1709 = vadd.f32 0.0, %v1708
        %v1710 = vpop.f32.mrf.mxu0
        %v1711 = vadd.f32 0.0, %v1710
        %1712 = vdwg.mxu0
        %v1713 = vadd.f32 %v1641, %v1705
        %v1714 = vadd.f32 %v1642, %v1707
        %v1715 = vadd.f32 %v1643, %v1709
        %v1716 = vadd.f32 %v1644, %v1711
        %1717 = vrot.lane.b32.xlu0 %v1368, 92
        %v1718 = vpop.permute.xlu0 %1717
        %1719 = vrot.lane.b32.xlu0 %v1369, 92
        %v1720 = vpop.permute.xlu0 %1719
        %vm1721 = vcmp.lt.s32.totalorder %v224, 92
        %v1722 = vsel %vm1721, %v1718, %v1720
        %v1723 = vsel %vm1721, %v1720, %v1718
        %v1724 = vpack.c.bf16 %v1722, %v1722
        %v1725 = vpack.c.bf16 %v1723, %v1723
        %s1726 = scalar_lea.vmem %s1, 184
        %v1727 = vld [vmem:[%s1726] sm:$0xf]
        %v1728 = vld [vmem:[%s1726 + $0x4] sm:$0xf]
        %v1731 = vunpack.c.l.b16 %v1727
        %v1732 = vunpack.c.l.b16 %v1728
        %v1733 = vpack.c.b16 %v1732, %v1731
        %v1735 = vsel %vm799, %v1733, 0
        %v1738 = vsel %vm803, %v1724, 0
        %v1741 = vsel %vm803, %v1725, 0
        %1743 = vmatprep.subr.bf16.mxu0 0
        %1744 = vmatpush1.bf16.msra.mxu0 0
        %1745 = vmatprep.subr.bf16.mxu0 0
        %1746 = vmatpush1.bf16.msra.mxu0 0
        %1747 = vmatprep.subr.bf16.mxu0 0
        %1748 = vmatpush1.bf16.msra.mxu0 0
        %1749 = vmatprep.subr.bf16.mxu0 0
        %1750 = vmatpush1.bf16.msra.mxu0 0
        %1751 = vmatprep.subr.bf16.mxu0 0
        %1752 = vmatpush1.bf16.msra.mxu0 0
        %1753 = vmatprep.subr.bf16.mxu0 0
        %1754 = vmatpush1.bf16.msra.mxu0 0
        %1755 = vmatprep.subr.bf16.mxu0 0
        %1756 = vmatpush1.bf16.msra.mxu0 0
        %1757 = vmatprep.subr.bf16.mxu0 %v1741
        %1758 = vmatpush1.bf16.msra.mxu0 %v1738
        %1759 = vmatprep.subr.bf16.mxu0 0
        %1760 = vmatpush2.bf16.msra.mxu0 0
        %1761 = vmatprep.subr.bf16.mxu0 0
        %1762 = vmatpush2.bf16.msra.mxu0 0
        %1763 = vmatprep.subr.bf16.mxu0 0
        %1764 = vmatpush2.bf16.msra.mxu0 0
        %1765 = vmatprep.subr.bf16.mxu0 0
        %1766 = vmatpush2.bf16.msra.mxu0 0
        %1767 = vmatprep.subr.bf16.mxu0 0
        %1768 = vmatpush2.bf16.msra.mxu0 0
        %1769 = vmatprep.subr.bf16.mxu0 0
        %1770 = vmatpush2.bf16.msra.mxu0 0
        %1771 = vmatprep.subr.bf16.mxu0 0
        %1772 = vmatpush2.bf16.msra.mxu0 0
        %1773 = vmatprep.subr.bf16.mxu0 0
        %1774 = vmatpush2.bf16.msra.mxu0 0
        %1775 = vmatprep.mubr.bf16.mxu0 0
        %1776 = vmatmul.mubr.bf16.gmra.mxu0 %v1735
        %v1777 = vpop.f32.mrf.mxu0
        %v1778 = vadd.f32 0.0, %v1777
        %v1779 = vpop.f32.mrf.mxu0
        %v1780 = vadd.f32 0.0, %v1779
        %v1781 = vpop.f32.mrf.mxu0
        %v1782 = vadd.f32 0.0, %v1781
        %v1783 = vpop.f32.mrf.mxu0
        %v1784 = vadd.f32 0.0, %v1783
        %1785 = vdwg.mxu0
        %v1786 = vadd.f32 %v1713, %v1778
        %v1787 = vadd.f32 %v1714, %v1780
        %v1788 = vadd.f32 %v1715, %v1782
        %v1789 = vadd.f32 %v1716, %v1784
        %1790 = vrot.lane.b32.xlu0 %v1368, 64
        %v1791 = vpop.permute.xlu0 %1790
        %1792 = vrot.lane.b32.xlu0 %v1369, 64
        %v1793 = vpop.permute.xlu0 %1792
        %vm1794 = vcmp.lt.s32.totalorder %v224, 64
        %v1795 = vsel %vm1794, %v1791, %v1793
        %v1796 = vsel %vm1794, %v1793, %v1791
        %v1797 = vpack.c.bf16 %v1795, %v1795
        %v1798 = vpack.c.bf16 %v1796, %v1796
        %s1799 = scalar_lea.vmem %s1, 192
        %v1800 = vld [vmem:[%s1799] sm:$0xf]
        %v1801 = vld [vmem:[%s1799 + $0x4] sm:$0xf]
        %v1804 = vunpack.c.l.b16 %v1800
        %v1805 = vunpack.c.l.b16 %v1801
        %v1806 = vpack.c.b16 %v1805, %v1804
        %v1808 = vsel %vm799, %v1806, 0
        %v1811 = vsel %vm803, %v1797, 0
        %v1814 = vsel %vm803, %v1798, 0
        %1816 = vmatprep.subr.bf16.mxu0 0
        %1817 = vmatpush1.bf16.msra.mxu0 0
        %1818 = vmatprep.subr.bf16.mxu0 0
        %1819 = vmatpush1.bf16.msra.mxu0 0
        %1820 = vmatprep.subr.bf16.mxu0 0
        %1821 = vmatpush1.bf16.msra.mxu0 0
        %1822 = vmatprep.subr.bf16.mxu0 0
        %1823 = vmatpush1.bf16.msra.mxu0 0
        %1824 = vmatprep.subr.bf16.mxu0 0
        %1825 = vmatpush1.bf16.msra.mxu0 0
        %1826 = vmatprep.subr.bf16.mxu0 0
        %1827 = vmatpush1.bf16.msra.mxu0 0
        %1828 = vmatprep.subr.bf16.mxu0 0
        %1829 = vmatpush1.bf16.msra.mxu0 0
        %1830 = vmatprep.subr.bf16.mxu0 %v1814
        %1831 = vmatpush1.bf16.msra.mxu0 %v1811
        %1832 = vmatprep.subr.bf16.mxu0 0
        %1833 = vmatpush2.bf16.msra.mxu0 0
        %1834 = vmatprep.subr.bf16.mxu0 0
        %1835 = vmatpush2.bf16.msra.mxu0 0
        %1836 = vmatprep.subr.bf16.mxu0 0
        %1837 = vmatpush2.bf16.msra.mxu0 0
        %1838 = vmatprep.subr.bf16.mxu0 0
        %1839 = vmatpush2.bf16.msra.mxu0 0
        %1840 = vmatprep.subr.bf16.mxu0 0
        %1841 = vmatpush2.bf16.msra.mxu0 0
        %1842 = vmatprep.subr.bf16.mxu0 0
        %1843 = vmatpush2.bf16.msra.mxu0 0
        %1844 = vmatprep.subr.bf16.mxu0 0
        %1845 = vmatpush2.bf16.msra.mxu0 0
        %1846 = vmatprep.subr.bf16.mxu0 0
        %1847 = vmatpush2.bf16.msra.mxu0 0
        %1848 = vmatprep.mubr.bf16.mxu0 0
        %1849 = vmatmul.mubr.bf16.gmra.mxu0 %v1808
        %v1850 = vpop.f32.mrf.mxu0
        %v1851 = vadd.f32 0.0, %v1850
        %v1852 = vpop.f32.mrf.mxu0
        %v1853 = vadd.f32 0.0, %v1852
        %v1854 = vpop.f32.mrf.mxu0
        %v1855 = vadd.f32 0.0, %v1854
        %v1856 = vpop.f32.mrf.mxu0
        %v1857 = vadd.f32 0.0, %v1856
        %1858 = vdwg.mxu0
        %v1859 = vadd.f32 %v1786, %v1851
        %v1860 = vadd.f32 %v1787, %v1853
        %v1861 = vadd.f32 %v1788, %v1855
        %v1862 = vadd.f32 %v1789, %v1857
        %1863 = vrot.lane.b32.xlu0 %v1368, 62
        %v1864 = vpop.permute.xlu0 %1863
        %1865 = vrot.lane.b32.xlu0 %v1369, 62
        %v1866 = vpop.permute.xlu0 %1865
        %vm1867 = vcmp.lt.s32.totalorder %v224, 62
        %v1868 = vsel %vm1867, %v1864, %v1866
        %v1869 = vsel %vm1867, %v1866, %v1864
        %v1870 = vpack.c.bf16 %v1868, %v1868
        %v1871 = vpack.c.bf16 %v1869, %v1869
        %s1872 = scalar_lea.vmem %s1, 200
        %v1873 = vld [vmem:[%s1872] sm:$0xf]
        %v1874 = vld [vmem:[%s1872 + $0x4] sm:$0xf]
        %v1877 = vunpack.c.l.b16 %v1873
        %v1878 = vunpack.c.l.b16 %v1874
        %v1879 = vpack.c.b16 %v1878, %v1877
        %v1881 = vsel %vm799, %v1879, 0
        %v1884 = vsel %vm803, %v1870, 0
        %v1887 = vsel %vm803, %v1871, 0
        %1889 = vmatprep.subr.bf16.mxu0 0
        %1890 = vmatpush1.bf16.msra.mxu0 0
        %1891 = vmatprep.subr.bf16.mxu0 0
        %1892 = vmatpush1.bf16.msra.mxu0 0
        %1893 = vmatprep.subr.bf16.mxu0 0
        %1894 = vmatpush1.bf16.msra.mxu0 0
        %1895 = vmatprep.subr.bf16.mxu0 0
        %1896 = vmatpush1.bf16.msra.mxu0 0
        %1897 = vmatprep.subr.bf16.mxu0 0
        %1898 = vmatpush1.bf16.msra.mxu0 0
        %1899 = vmatprep.subr.bf16.mxu0 0
        %1900 = vmatpush1.bf16.msra.mxu0 0
        %1901 = vmatprep.subr.bf16.mxu0 0
        %1902 = vmatpush1.bf16.msra.mxu0 0
        %1903 = vmatprep.subr.bf16.mxu0 %v1887
        %1904 = vmatpush1.bf16.msra.mxu0 %v1884
        %1905 = vmatprep.subr.bf16.mxu0 0
        %1906 = vmatpush2.bf16.msra.mxu0 0
        %1907 = vmatprep.subr.bf16.mxu0 0
        %1908 = vmatpush2.bf16.msra.mxu0 0
        %1909 = vmatprep.subr.bf16.mxu0 0
        %1910 = vmatpush2.bf16.msra.mxu0 0
        %1911 = vmatprep.subr.bf16.mxu0 0
        %1912 = vmatpush2.bf16.msra.mxu0 0
        %1913 = vmatprep.subr.bf16.mxu0 0
        %1914 = vmatpush2.bf16.msra.mxu0 0
        %1915 = vmatprep.subr.bf16.mxu0 0
        %1916 = vmatpush2.bf16.msra.mxu0 0
        %1917 = vmatprep.subr.bf16.mxu0 0
        %1918 = vmatpush2.bf16.msra.mxu0 0
        %1919 = vmatprep.subr.bf16.mxu0 0
        %1920 = vmatpush2.bf16.msra.mxu0 0
        %1921 = vmatprep.mubr.bf16.mxu0 0
        %1922 = vmatmul.mubr.bf16.gmra.mxu0 %v1881
        %v1923 = vpop.f32.mrf.mxu0
        %v1924 = vadd.f32 0.0, %v1923
        %v1925 = vpop.f32.mrf.mxu0
        %v1926 = vadd.f32 0.0, %v1925
        %v1927 = vpop.f32.mrf.mxu0
        %v1928 = vadd.f32 0.0, %v1927
        %v1929 = vpop.f32.mrf.mxu0
        %v1930 = vadd.f32 0.0, %v1929
        %1931 = vdwg.mxu0
        %v1932 = vadd.f32 %v1859, %v1924
        %v1933 = vadd.f32 %v1860, %v1926
        %v1934 = vadd.f32 %v1861, %v1928
        %v1935 = vadd.f32 %v1862, %v1930
        %1936 = vrot.lane.b32.xlu0 %v1368, 60
        %v1937 = vpop.permute.xlu0 %1936
        %1938 = vrot.lane.b32.xlu0 %v1369, 60
        %v1939 = vpop.permute.xlu0 %1938
        %vm1940 = vcmp.lt.s32.totalorder %v224, 60
        %v1941 = vsel %vm1940, %v1937, %v1939
        %v1942 = vsel %vm1940, %v1939, %v1937
        %v1943 = vpack.c.bf16 %v1941, %v1941
        %v1944 = vpack.c.bf16 %v1942, %v1942
        %s1945 = scalar_lea.vmem %s1, 208
        %v1946 = vld [vmem:[%s1945] sm:$0xf]
        %v1947 = vld [vmem:[%s1945 + $0x4] sm:$0xf]
        %v1950 = vunpack.c.l.b16 %v1946
        %v1951 = vunpack.c.l.b16 %v1947
        %v1952 = vpack.c.b16 %v1951, %v1950
        %v1954 = vsel %vm799, %v1952, 0
        %v1957 = vsel %vm803, %v1943, 0
        %v1960 = vsel %vm803, %v1944, 0
        %1962 = vmatprep.subr.bf16.mxu0 0
        %1963 = vmatpush1.bf16.msra.mxu0 0
        %1964 = vmatprep.subr.bf16.mxu0 0
        %1965 = vmatpush1.bf16.msra.mxu0 0
        %1966 = vmatprep.subr.bf16.mxu0 0
        %1967 = vmatpush1.bf16.msra.mxu0 0
        %1968 = vmatprep.subr.bf16.mxu0 0
        %1969 = vmatpush1.bf16.msra.mxu0 0
        %1970 = vmatprep.subr.bf16.mxu0 0
        %1971 = vmatpush1.bf16.msra.mxu0 0
        %1972 = vmatprep.subr.bf16.mxu0 0
        %1973 = vmatpush1.bf16.msra.mxu0 0
        %1974 = vmatprep.subr.bf16.mxu0 0
        %1975 = vmatpush1.bf16.msra.mxu0 0
        %1976 = vmatprep.subr.bf16.mxu0 %v1960
        %1977 = vmatpush1.bf16.msra.mxu0 %v1957
        %1978 = vmatprep.subr.bf16.mxu0 0
        %1979 = vmatpush2.bf16.msra.mxu0 0
        %1980 = vmatprep.subr.bf16.mxu0 0
        %1981 = vmatpush2.bf16.msra.mxu0 0
        %1982 = vmatprep.subr.bf16.mxu0 0
        %1983 = vmatpush2.bf16.msra.mxu0 0
        %1984 = vmatprep.subr.bf16.mxu0 0
        %1985 = vmatpush2.bf16.msra.mxu0 0
        %1986 = vmatprep.subr.bf16.mxu0 0
        %1987 = vmatpush2.bf16.msra.mxu0 0
        %1988 = vmatprep.subr.bf16.mxu0 0
        %1989 = vmatpush2.bf16.msra.mxu0 0
        %1990 = vmatprep.subr.bf16.mxu0 0
        %1991 = vmatpush2.bf16.msra.mxu0 0
        %1992 = vmatprep.subr.bf16.mxu0 0
        %1993 = vmatpush2.bf16.msra.mxu0 0
        %1994 = vmatprep.mubr.bf16.mxu0 0
        %1995 = vmatmul.mubr.bf16.gmra.mxu0 %v1954
        %v1996 = vpop.f32.mrf.mxu0
        %v1997 = vadd.f32 0.0, %v1996
        %v1998 = vpop.f32.mrf.mxu0
        %v1999 = vadd.f32 0.0, %v1998
        %v2000 = vpop.f32.mrf.mxu0
        %v2001 = vadd.f32 0.0, %v2000
        %v2002 = vpop.f32.mrf.mxu0
        %v2003 = vadd.f32 0.0, %v2002
        %2004 = vdwg.mxu0
        %v2005 = vadd.f32 %v1932, %v1997
        %v2006 = vadd.f32 %v1933, %v1999
        %v2007 = vadd.f32 %v1934, %v2001
        %v2008 = vadd.f32 %v1935, %v2003
        %s2009 = scalar_lea.vmem %s2, 32
        %v2010 = vld [vmem:[%s2009] sm:$0xff]
        %v2011 = vld [vmem:[%s2009 + $0x8] sm:$0xff]
        %2013 = vset.pattern.permute.xlu0 0
        %2014 = vperm.xlu0 %2013, %v2010
        %v2015 = vpop.permute.xlu0 %2014
        %2018 = vset.pattern.permute.xlu0 0
        %2019 = vperm.xlu0 %2018, %v2011
        %v2020 = vpop.permute.xlu0 %2019
        %v2022 = vadd.f32 %v2005, %v2015
        %v2023 = vadd.f32 %v2006, %v2015
        %v2024 = vadd.f32 %v2007, %v2020
        %v2025 = vadd.f32 %v2008, %v2020
        %v2026 = vmax.f32 %v2022, 0.0
        %v2027 = vmax.f32 %v2023, 0.0
        %v2028 = vmax.f32 %v2024, 0.0
        %v2029 = vmax.f32 %v2025, 0.0
        %v2030 = vpack.c.bf16 %v2028, %v2026
        %v2031 = vpack.c.bf16 %v2029, %v2027
        %s2032 = scalar_lea.vmem %s1, 216
        %v2033 = vld [vmem:[%s2032] sm:$0xf]
        %v2034 = vld [vmem:[%s2032 + $0x4] sm:$0xf]
        %2035 = vrot.lane.b32.xlu0 %v2026, 126
        %v2036 = vpop.permute.xlu0 %2035
        %2037 = vrot.lane.b32.xlu0 %v2028, 126
        %v2038 = vpop.permute.xlu0 %2037
        %2039 = vrot.lane.b32.xlu0 %v2027, 126
        %v2040 = vpop.permute.xlu0 %2039
        %2041 = vrot.lane.b32.xlu0 %v2029, 126
        %v2042 = vpop.permute.xlu0 %2041
        %v2043 = vsel %vm338, %v2036, %v2040
        %v2044 = vsel %vm338, %v2038, %v2042
        %v2045 = vsel %vm338, %v2040, %v2036
        %v2046 = vsel %vm338, %v2042, %v2038
        %v2047 = vpack.c.bf16 %v2044, %v2043
        %v2048 = vpack.c.bf16 %v2046, %v2045
        %s2049 = scalar_lea.vmem %s1, 224
        %v2050 = vld [vmem:[%s2049] sm:$0xf]
        %v2051 = vld [vmem:[%s2049 + $0x4] sm:$0xf]
        %v2054 = vunpack.c.l.b16 %v2050
        %v2055 = vunpack.c.l.b16 %v2051
        %v2056 = vpack.c.b16 %v2055, %v2054
        %vm2057 = vcmask 130048
        %v2059 = vsel %vm2057, %v2056, 0
        %2061 = vmatprep.subr.bf16.mxu0 0
        %2062 = vmatpush1.bf16.msra.mxu0 0
        %2063 = vmatprep.subr.bf16.mxu0 0
        %2064 = vmatpush1.bf16.msra.mxu0 0
        %2065 = vmatprep.subr.bf16.mxu0 0
        %2066 = vmatpush1.bf16.msra.mxu0 0
        %2067 = vmatprep.subr.bf16.mxu0 0
        %2068 = vmatpush1.bf16.msra.mxu0 0
        %2069 = vmatprep.subr.bf16.mxu0 0
        %2070 = vmatpush1.bf16.msra.mxu0 0
        %2071 = vmatprep.subr.bf16.mxu0 0
        %2072 = vmatpush1.bf16.msra.mxu0 0
        %2073 = vmatprep.subr.bf16.mxu0 0
        %2074 = vmatpush1.bf16.msra.mxu0 0
        %2075 = vmatprep.subr.bf16.mxu0 %v2048
        %2076 = vmatpush1.bf16.msra.mxu0 %v2047
        %2077 = vmatprep.subr.bf16.mxu0 0
        %2078 = vmatpush2.bf16.msra.mxu0 0
        %2079 = vmatprep.subr.bf16.mxu0 0
        %2080 = vmatpush2.bf16.msra.mxu0 0
        %2081 = vmatprep.subr.bf16.mxu0 0
        %2082 = vmatpush2.bf16.msra.mxu0 0
        %2083 = vmatprep.subr.bf16.mxu0 0
        %2084 = vmatpush2.bf16.msra.mxu0 0
        %2085 = vmatprep.subr.bf16.mxu0 0
        %2086 = vmatpush2.bf16.msra.mxu0 0
        %2087 = vmatprep.subr.bf16.mxu0 0
        %2088 = vmatpush2.bf16.msra.mxu0 0
        %2089 = vmatprep.subr.bf16.mxu0 0
        %2090 = vmatpush2.bf16.msra.mxu0 0
        %2091 = vmatprep.subr.bf16.mxu0 0
        %2092 = vmatpush2.bf16.msra.mxu0 0
        %2093 = vmatprep.mubr.bf16.mxu0 0
        %2094 = vmatmul.mubr.bf16.gmra.mxu0 %v2059
        %v2095 = vpop.f32.mrf.mxu0
        %v2096 = vadd.f32 0.0, %v2095
        %v2097 = vpop.f32.mrf.mxu0
        %v2098 = vadd.f32 0.0, %v2097
        %v2099 = vpop.f32.mrf.mxu0
        %v2100 = vadd.f32 0.0, %v2099
        %v2101 = vpop.f32.mrf.mxu0
        %v2102 = vadd.f32 0.0, %v2101
        %2103 = vdwg.mxu0
        %v2106 = vunpack.c.l.b16 %v2033
        %v2107 = vunpack.c.l.b16 %v2034
        %v2108 = vpack.c.b16 %v2107, %v2106
        %v2110 = vsel %vm2057, %v2108, 0
        %2112 = vmatprep.subr.bf16.mxu0 0
        %2113 = vmatpush1.bf16.msra.mxu0 0
        %2114 = vmatprep.subr.bf16.mxu0 0
        %2115 = vmatpush1.bf16.msra.mxu0 0
        %2116 = vmatprep.subr.bf16.mxu0 0
        %2117 = vmatpush1.bf16.msra.mxu0 0
        %2118 = vmatprep.subr.bf16.mxu0 0
        %2119 = vmatpush1.bf16.msra.mxu0 0
        %2120 = vmatprep.subr.bf16.mxu0 0
        %2121 = vmatpush1.bf16.msra.mxu0 0
        %2122 = vmatprep.subr.bf16.mxu0 0
        %2123 = vmatpush1.bf16.msra.mxu0 0
        %2124 = vmatprep.subr.bf16.mxu0 0
        %2125 = vmatpush1.bf16.msra.mxu0 0
        %2126 = vmatprep.subr.bf16.mxu0 %v2031
        %2127 = vmatpush1.bf16.msra.mxu0 %v2030
        %2128 = vmatprep.subr.bf16.mxu0 0
        %2129 = vmatpush2.bf16.msra.mxu0 0
        %2130 = vmatprep.subr.bf16.mxu0 0
        %2131 = vmatpush2.bf16.msra.mxu0 0
        %2132 = vmatprep.subr.bf16.mxu0 0
        %2133 = vmatpush2.bf16.msra.mxu0 0
        %2134 = vmatprep.subr.bf16.mxu0 0
        %2135 = vmatpush2.bf16.msra.mxu0 0
        %2136 = vmatprep.subr.bf16.mxu0 0
        %2137 = vmatpush2.bf16.msra.mxu0 0
        %2138 = vmatprep.subr.bf16.mxu0 0
        %2139 = vmatpush2.bf16.msra.mxu0 0
        %2140 = vmatprep.subr.bf16.mxu0 0
        %2141 = vmatpush2.bf16.msra.mxu0 0
        %2142 = vmatprep.subr.bf16.mxu0 0
        %2143 = vmatpush2.bf16.msra.mxu0 0
        %2144 = vmatprep.mubr.bf16.mxu0 0
        %2145 = vmatmul.mubr.bf16.gmra.mxu0 %v2110
        %v2146 = vpop.f32.mrf.mxu0
        %v2147 = vadd.f32 %v2096, %v2146
        %v2148 = vpop.f32.mrf.mxu0
        %v2149 = vadd.f32 %v2098, %v2148
        %v2150 = vpop.f32.mrf.mxu0
        %v2151 = vadd.f32 %v2100, %v2150
        %v2152 = vpop.f32.mrf.mxu0
        %v2153 = vadd.f32 %v2102, %v2152
        %2154 = vdwg.mxu0
        %2155 = vrot.lane.b32.xlu0 %v2026, 124
        %v2156 = vpop.permute.xlu0 %2155
        %2157 = vrot.lane.b32.xlu0 %v2028, 124
        %v2158 = vpop.permute.xlu0 %2157
        %2159 = vrot.lane.b32.xlu0 %v2027, 124
        %v2160 = vpop.permute.xlu0 %2159
        %2161 = vrot.lane.b32.xlu0 %v2029, 124
        %v2162 = vpop.permute.xlu0 %2161
        %v2163 = vsel %vm1504, %v2156, %v2160
        %v2164 = vsel %vm1504, %v2158, %v2162
        %v2165 = vsel %vm1504, %v2160, %v2156
        %v2166 = vsel %vm1504, %v2162, %v2158
        %v2167 = vpack.c.bf16 %v2164, %v2163
        %v2168 = vpack.c.bf16 %v2166, %v2165
        %s2169 = scalar_lea.vmem %s1, 232
        %v2170 = vld [vmem:[%s2169] sm:$0xf]
        %v2171 = vld [vmem:[%s2169 + $0x4] sm:$0xf]
        %v2174 = vunpack.c.l.b16 %v2170
        %v2175 = vunpack.c.l.b16 %v2171
        %v2176 = vpack.c.b16 %v2175, %v2174
        %v2178 = vsel %vm2057, %v2176, 0
        %2180 = vmatprep.subr.bf16.mxu0 0
        %2181 = vmatpush1.bf16.msra.mxu0 0
        %2182 = vmatprep.subr.bf16.mxu0 0
        %2183 = vmatpush1.bf16.msra.mxu0 0
        %2184 = vmatprep.subr.bf16.mxu0 0
        %2185 = vmatpush1.bf16.msra.mxu0 0
        %2186 = vmatprep.subr.bf16.mxu0 0
        %2187 = vmatpush1.bf16.msra.mxu0 0
        %2188 = vmatprep.subr.bf16.mxu0 0
        %2189 = vmatpush1.bf16.msra.mxu0 0
        %2190 = vmatprep.subr.bf16.mxu0 0
        %2191 = vmatpush1.bf16.msra.mxu0 0
        %2192 = vmatprep.subr.bf16.mxu0 0
        %2193 = vmatpush1.bf16.msra.mxu0 0
        %2194 = vmatprep.subr.bf16.mxu0 %v2168
        %2195 = vmatpush1.bf16.msra.mxu0 %v2167
        %2196 = vmatprep.subr.bf16.mxu0 0
        %2197 = vmatpush2.bf16.msra.mxu0 0
        %2198 = vmatprep.subr.bf16.mxu0 0
        %2199 = vmatpush2.bf16.msra.mxu0 0
        %2200 = vmatprep.subr.bf16.mxu0 0
        %2201 = vmatpush2.bf16.msra.mxu0 0
        %2202 = vmatprep.subr.bf16.mxu0 0
        %2203 = vmatpush2.bf16.msra.mxu0 0
        %2204 = vmatprep.subr.bf16.mxu0 0
        %2205 = vmatpush2.bf16.msra.mxu0 0
        %2206 = vmatprep.subr.bf16.mxu0 0
        %2207 = vmatpush2.bf16.msra.mxu0 0
        %2208 = vmatprep.subr.bf16.mxu0 0
        %2209 = vmatpush2.bf16.msra.mxu0 0
        %2210 = vmatprep.subr.bf16.mxu0 0
        %2211 = vmatpush2.bf16.msra.mxu0 0
        %2212 = vmatprep.mubr.bf16.mxu0 0
        %2213 = vmatmul.mubr.bf16.gmra.mxu0 %v2178
        %v2214 = vpop.f32.mrf.mxu0
        %v2215 = vadd.f32 0.0, %v2214
        %v2216 = vpop.f32.mrf.mxu0
        %v2217 = vadd.f32 0.0, %v2216
        %v2218 = vpop.f32.mrf.mxu0
        %v2219 = vadd.f32 0.0, %v2218
        %v2220 = vpop.f32.mrf.mxu0
        %v2221 = vadd.f32 0.0, %v2220
        %2222 = vdwg.mxu0
        %v2223 = vadd.f32 %v2147, %v2215
        %v2224 = vadd.f32 %v2149, %v2217
        %v2225 = vadd.f32 %v2151, %v2219
        %v2226 = vadd.f32 %v2153, %v2221
        %2227 = vrot.lane.b32.xlu0 %v2026, 96
        %v2228 = vpop.permute.xlu0 %2227
        %2229 = vrot.lane.b32.xlu0 %v2028, 96
        %v2230 = vpop.permute.xlu0 %2229
        %2231 = vrot.lane.b32.xlu0 %v2027, 96
        %v2232 = vpop.permute.xlu0 %2231
        %2233 = vrot.lane.b32.xlu0 %v2029, 96
        %v2234 = vpop.permute.xlu0 %2233
        %v2235 = vsel %vm590, %v2228, %v2232
        %v2236 = vsel %vm590, %v2230, %v2234
        %v2237 = vsel %vm590, %v2232, %v2228
        %v2238 = vsel %vm590, %v2234, %v2230
        %v2239 = vpack.c.bf16 %v2236, %v2235
        %v2240 = vpack.c.bf16 %v2238, %v2237
        %s2241 = scalar_lea.vmem %s1, 240
        %v2242 = vld [vmem:[%s2241] sm:$0xf]
        %v2243 = vld [vmem:[%s2241 + $0x4] sm:$0xf]
        %v2246 = vunpack.c.l.b16 %v2242
        %v2247 = vunpack.c.l.b16 %v2243
        %v2248 = vpack.c.b16 %v2247, %v2246
        %v2250 = vsel %vm2057, %v2248, 0
        %2252 = vmatprep.subr.bf16.mxu0 0
        %2253 = vmatpush1.bf16.msra.mxu0 0
        %2254 = vmatprep.subr.bf16.mxu0 0
        %2255 = vmatpush1.bf16.msra.mxu0 0
        %2256 = vmatprep.subr.bf16.mxu0 0
        %2257 = vmatpush1.bf16.msra.mxu0 0
        %2258 = vmatprep.subr.bf16.mxu0 0
        %2259 = vmatpush1.bf16.msra.mxu0 0
        %2260 = vmatprep.subr.bf16.mxu0 0
        %2261 = vmatpush1.bf16.msra.mxu0 0
        %2262 = vmatprep.subr.bf16.mxu0 0
        %2263 = vmatpush1.bf16.msra.mxu0 0
        %2264 = vmatprep.subr.bf16.mxu0 0
        %2265 = vmatpush1.bf16.msra.mxu0 0
        %2266 = vmatprep.subr.bf16.mxu0 %v2240
        %2267 = vmatpush1.bf16.msra.mxu0 %v2239
        %2268 = vmatprep.subr.bf16.mxu0 0
        %2269 = vmatpush2.bf16.msra.mxu0 0
        %2270 = vmatprep.subr.bf16.mxu0 0
        %2271 = vmatpush2.bf16.msra.mxu0 0
        %2272 = vmatprep.subr.bf16.mxu0 0
        %2273 = vmatpush2.bf16.msra.mxu0 0
        %2274 = vmatprep.subr.bf16.mxu0 0
        %2275 = vmatpush2.bf16.msra.mxu0 0
        %2276 = vmatprep.subr.bf16.mxu0 0
        %2277 = vmatpush2.bf16.msra.mxu0 0
        %2278 = vmatprep.subr.bf16.mxu0 0
        %2279 = vmatpush2.bf16.msra.mxu0 0
        %2280 = vmatprep.subr.bf16.mxu0 0
        %2281 = vmatpush2.bf16.msra.mxu0 0
        %2282 = vmatprep.subr.bf16.mxu0 0
        %2283 = vmatpush2.bf16.msra.mxu0 0
        %2284 = vmatprep.mubr.bf16.mxu0 0
        %2285 = vmatmul.mubr.bf16.gmra.mxu0 %v2250
        %v2286 = vpop.f32.mrf.mxu0
        %v2287 = vadd.f32 0.0, %v2286
        %v2288 = vpop.f32.mrf.mxu0
        %v2289 = vadd.f32 0.0, %v2288
        %v2290 = vpop.f32.mrf.mxu0
        %v2291 = vadd.f32 0.0, %v2290
        %v2292 = vpop.f32.mrf.mxu0
        %v2293 = vadd.f32 0.0, %v2292
        %2294 = vdwg.mxu0
        %v2295 = vadd.f32 %v2223, %v2287
        %v2296 = vadd.f32 %v2224, %v2289
        %v2297 = vadd.f32 %v2225, %v2291
        %v2298 = vadd.f32 %v2226, %v2293
        %2299 = vrot.lane.b32.xlu0 %v2026, 94
        %v2300 = vpop.permute.xlu0 %2299
        %2301 = vrot.lane.b32.xlu0 %v2028, 94
        %v2302 = vpop.permute.xlu0 %2301
        %2303 = vrot.lane.b32.xlu0 %v2027, 94
        %v2304 = vpop.permute.xlu0 %2303
        %2305 = vrot.lane.b32.xlu0 %v2029, 94
        %v2306 = vpop.permute.xlu0 %2305
        %v2307 = vsel %vm716, %v2300, %v2304
        %v2308 = vsel %vm716, %v2302, %v2306
        %v2309 = vsel %vm716, %v2304, %v2300
        %v2310 = vsel %vm716, %v2306, %v2302
        %v2311 = vpack.c.bf16 %v2308, %v2307
        %v2312 = vpack.c.bf16 %v2310, %v2309
        %s2313 = scalar_lea.vmem %s1, 248
        %v2314 = vld [vmem:[%s2313] sm:$0xf]
        %v2315 = vld [vmem:[%s2313 + $0x4] sm:$0xf]
        %v2318 = vunpack.c.l.b16 %v2314
        %v2319 = vunpack.c.l.b16 %v2315
        %v2320 = vpack.c.b16 %v2319, %v2318
        %v2322 = vsel %vm2057, %v2320, 0
        %2324 = vmatprep.subr.bf16.mxu0 0
        %2325 = vmatpush1.bf16.msra.mxu0 0
        %2326 = vmatprep.subr.bf16.mxu0 0
        %2327 = vmatpush1.bf16.msra.mxu0 0
        %2328 = vmatprep.subr.bf16.mxu0 0
        %2329 = vmatpush1.bf16.msra.mxu0 0
        %2330 = vmatprep.subr.bf16.mxu0 0
        %2331 = vmatpush1.bf16.msra.mxu0 0
        %2332 = vmatprep.subr.bf16.mxu0 0
        %2333 = vmatpush1.bf16.msra.mxu0 0
        %2334 = vmatprep.subr.bf16.mxu0 0
        %2335 = vmatpush1.bf16.msra.mxu0 0
        %2336 = vmatprep.subr.bf16.mxu0 0
        %2337 = vmatpush1.bf16.msra.mxu0 0
        %2338 = vmatprep.subr.bf16.mxu0 %v2312
        %2339 = vmatpush1.bf16.msra.mxu0 %v2311
        %2340 = vmatprep.subr.bf16.mxu0 0
        %2341 = vmatpush2.bf16.msra.mxu0 0
        %2342 = vmatprep.subr.bf16.mxu0 0
        %2343 = vmatpush2.bf16.msra.mxu0 0
        %2344 = vmatprep.subr.bf16.mxu0 0
        %2345 = vmatpush2.bf16.msra.mxu0 0
        %2346 = vmatprep.subr.bf16.mxu0 0
        %2347 = vmatpush2.bf16.msra.mxu0 0
        %2348 = vmatprep.subr.bf16.mxu0 0
        %2349 = vmatpush2.bf16.msra.mxu0 0
        %2350 = vmatprep.subr.bf16.mxu0 0
        %2351 = vmatpush2.bf16.msra.mxu0 0
        %2352 = vmatprep.subr.bf16.mxu0 0
        %2353 = vmatpush2.bf16.msra.mxu0 0
        %2354 = vmatprep.subr.bf16.mxu0 0
        %2355 = vmatpush2.bf16.msra.mxu0 0
        %2356 = vmatprep.mubr.bf16.mxu0 0
        %2357 = vmatmul.mubr.bf16.gmra.mxu0 %v2322
        %v2358 = vpop.f32.mrf.mxu0
        %v2359 = vadd.f32 0.0, %v2358
        %v2360 = vpop.f32.mrf.mxu0
        %v2361 = vadd.f32 0.0, %v2360
        %v2362 = vpop.f32.mrf.mxu0
        %v2363 = vadd.f32 0.0, %v2362
        %v2364 = vpop.f32.mrf.mxu0
        %v2365 = vadd.f32 0.0, %v2364
        %2366 = vdwg.mxu0
        %v2367 = vadd.f32 %v2295, %v2359
        %v2368 = vadd.f32 %v2296, %v2361
        %v2369 = vadd.f32 %v2297, %v2363
        %v2370 = vadd.f32 %v2298, %v2365
        %2371 = vrot.lane.b32.xlu0 %v2026, 92
        %v2372 = vpop.permute.xlu0 %2371
        %2373 = vrot.lane.b32.xlu0 %v2028, 92
        %v2374 = vpop.permute.xlu0 %2373
        %2375 = vrot.lane.b32.xlu0 %v2027, 92
        %v2376 = vpop.permute.xlu0 %2375
        %2377 = vrot.lane.b32.xlu0 %v2029, 92
        %v2378 = vpop.permute.xlu0 %2377
        %v2379 = vsel %vm1721, %v2372, %v2376
        %v2380 = vsel %vm1721, %v2374, %v2378
        %v2381 = vsel %vm1721, %v2376, %v2372
        %v2382 = vsel %vm1721, %v2378, %v2374
        %v2383 = vpack.c.bf16 %v2380, %v2379
        %v2384 = vpack.c.bf16 %v2382, %v2381
        %s2385 = scalar_lea.vmem %s1, 256
        %v2386 = vld [vmem:[%s2385] sm:$0xf]
        %v2387 = vld [vmem:[%s2385 + $0x4] sm:$0xf]
        %v2390 = vunpack.c.l.b16 %v2386
        %v2391 = vunpack.c.l.b16 %v2387
        %v2392 = vpack.c.b16 %v2391, %v2390
        %v2394 = vsel %vm2057, %v2392, 0
        %2396 = vmatprep.subr.bf16.mxu0 0
        %2397 = vmatpush1.bf16.msra.mxu0 0
        %2398 = vmatprep.subr.bf16.mxu0 0
        %2399 = vmatpush1.bf16.msra.mxu0 0
        %2400 = vmatprep.subr.bf16.mxu0 0
        %2401 = vmatpush1.bf16.msra.mxu0 0
        %2402 = vmatprep.subr.bf16.mxu0 0
        %2403 = vmatpush1.bf16.msra.mxu0 0
        %2404 = vmatprep.subr.bf16.mxu0 0
        %2405 = vmatpush1.bf16.msra.mxu0 0
        %2406 = vmatprep.subr.bf16.mxu0 0
        %2407 = vmatpush1.bf16.msra.mxu0 0
        %2408 = vmatprep.subr.bf16.mxu0 0
        %2409 = vmatpush1.bf16.msra.mxu0 0
        %2410 = vmatprep.subr.bf16.mxu0 %v2384
        %2411 = vmatpush1.bf16.msra.mxu0 %v2383
        %2412 = vmatprep.subr.bf16.mxu0 0
        %2413 = vmatpush2.bf16.msra.mxu0 0
        %2414 = vmatprep.subr.bf16.mxu0 0
        %2415 = vmatpush2.bf16.msra.mxu0 0
        %2416 = vmatprep.subr.bf16.mxu0 0
        %2417 = vmatpush2.bf16.msra.mxu0 0
        %2418 = vmatprep.subr.bf16.mxu0 0
        %2419 = vmatpush2.bf16.msra.mxu0 0
        %2420 = vmatprep.subr.bf16.mxu0 0
        %2421 = vmatpush2.bf16.msra.mxu0 0
        %2422 = vmatprep.subr.bf16.mxu0 0
        %2423 = vmatpush2.bf16.msra.mxu0 0
        %2424 = vmatprep.subr.bf16.mxu0 0
        %2425 = vmatpush2.bf16.msra.mxu0 0
        %2426 = vmatprep.subr.bf16.mxu0 0
        %2427 = vmatpush2.bf16.msra.mxu0 0
        %2428 = vmatprep.mubr.bf16.mxu0 0
        %2429 = vmatmul.mubr.bf16.gmra.mxu0 %v2394
        %v2430 = vpop.f32.mrf.mxu0
        %v2431 = vadd.f32 0.0, %v2430
        %v2432 = vpop.f32.mrf.mxu0
        %v2433 = vadd.f32 0.0, %v2432
        %v2434 = vpop.f32.mrf.mxu0
        %v2435 = vadd.f32 0.0, %v2434
        %v2436 = vpop.f32.mrf.mxu0
        %v2437 = vadd.f32 0.0, %v2436
        %2438 = vdwg.mxu0
        %v2439 = vadd.f32 %v2367, %v2431
        %v2440 = vadd.f32 %v2368, %v2433
        %v2441 = vadd.f32 %v2369, %v2435
        %v2442 = vadd.f32 %v2370, %v2437
        %2443 = vrot.lane.b32.xlu0 %v2026, 64
        %v2444 = vpop.permute.xlu0 %2443
        %2445 = vrot.lane.b32.xlu0 %v2028, 64
        %v2446 = vpop.permute.xlu0 %2445
        %2447 = vrot.lane.b32.xlu0 %v2027, 64
        %v2448 = vpop.permute.xlu0 %2447
        %2449 = vrot.lane.b32.xlu0 %v2029, 64
        %v2450 = vpop.permute.xlu0 %2449
        %v2451 = vsel %vm1794, %v2444, %v2448
        %v2452 = vsel %vm1794, %v2446, %v2450
        %v2453 = vsel %vm1794, %v2448, %v2444
        %v2454 = vsel %vm1794, %v2450, %v2446
        %v2455 = vpack.c.bf16 %v2452, %v2451
        %v2456 = vpack.c.bf16 %v2454, %v2453
        %s2457 = scalar_lea.vmem %s1, 264
        %v2458 = vld [vmem:[%s2457] sm:$0xf]
        %v2459 = vld [vmem:[%s2457 + $0x4] sm:$0xf]
        %v2462 = vunpack.c.l.b16 %v2458
        %v2463 = vunpack.c.l.b16 %v2459
        %v2464 = vpack.c.b16 %v2463, %v2462
        %v2466 = vsel %vm2057, %v2464, 0
        %2468 = vmatprep.subr.bf16.mxu0 0
        %2469 = vmatpush1.bf16.msra.mxu0 0
        %2470 = vmatprep.subr.bf16.mxu0 0
        %2471 = vmatpush1.bf16.msra.mxu0 0
        %2472 = vmatprep.subr.bf16.mxu0 0
        %2473 = vmatpush1.bf16.msra.mxu0 0
        %2474 = vmatprep.subr.bf16.mxu0 0
        %2475 = vmatpush1.bf16.msra.mxu0 0
        %2476 = vmatprep.subr.bf16.mxu0 0
        %2477 = vmatpush1.bf16.msra.mxu0 0
        %2478 = vmatprep.subr.bf16.mxu0 0
        %2479 = vmatpush1.bf16.msra.mxu0 0
        %2480 = vmatprep.subr.bf16.mxu0 0
        %2481 = vmatpush1.bf16.msra.mxu0 0
        %2482 = vmatprep.subr.bf16.mxu0 %v2456
        %2483 = vmatpush1.bf16.msra.mxu0 %v2455
        %2484 = vmatprep.subr.bf16.mxu0 0
        %2485 = vmatpush2.bf16.msra.mxu0 0
        %2486 = vmatprep.subr.bf16.mxu0 0
        %2487 = vmatpush2.bf16.msra.mxu0 0
        %2488 = vmatprep.subr.bf16.mxu0 0
        %2489 = vmatpush2.bf16.msra.mxu0 0
        %2490 = vmatprep.subr.bf16.mxu0 0
        %2491 = vmatpush2.bf16.msra.mxu0 0
        %2492 = vmatprep.subr.bf16.mxu0 0
        %2493 = vmatpush2.bf16.msra.mxu0 0
        %2494 = vmatprep.subr.bf16.mxu0 0
        %2495 = vmatpush2.bf16.msra.mxu0 0
        %2496 = vmatprep.subr.bf16.mxu0 0
        %2497 = vmatpush2.bf16.msra.mxu0 0
        %2498 = vmatprep.subr.bf16.mxu0 0
        %2499 = vmatpush2.bf16.msra.mxu0 0
        %2500 = vmatprep.mubr.bf16.mxu0 0
        %2501 = vmatmul.mubr.bf16.gmra.mxu0 %v2466
        %v2502 = vpop.f32.mrf.mxu0
        %v2503 = vadd.f32 0.0, %v2502
        %v2504 = vpop.f32.mrf.mxu0
        %v2505 = vadd.f32 0.0, %v2504
        %v2506 = vpop.f32.mrf.mxu0
        %v2507 = vadd.f32 0.0, %v2506
        %v2508 = vpop.f32.mrf.mxu0
        %v2509 = vadd.f32 0.0, %v2508
        %2510 = vdwg.mxu0
        %v2511 = vadd.f32 %v2439, %v2503
        %v2512 = vadd.f32 %v2440, %v2505
        %v2513 = vadd.f32 %v2441, %v2507
        %v2514 = vadd.f32 %v2442, %v2509
        %2515 = vrot.lane.b32.xlu0 %v2026, 62
        %v2516 = vpop.permute.xlu0 %2515
        %2517 = vrot.lane.b32.xlu0 %v2028, 62
        %v2518 = vpop.permute.xlu0 %2517
        %2519 = vrot.lane.b32.xlu0 %v2027, 62
        %v2520 = vpop.permute.xlu0 %2519
        %2521 = vrot.lane.b32.xlu0 %v2029, 62
        %v2522 = vpop.permute.xlu0 %2521
        %v2523 = vsel %vm1867, %v2516, %v2520
        %v2524 = vsel %vm1867, %v2518, %v2522
        %v2525 = vsel %vm1867, %v2520, %v2516
        %v2526 = vsel %vm1867, %v2522, %v2518
        %v2527 = vpack.c.bf16 %v2524, %v2523
        %v2528 = vpack.c.bf16 %v2526, %v2525
        %s2529 = scalar_lea.vmem %s1, 272
        %v2530 = vld [vmem:[%s2529] sm:$0xf]
        %v2531 = vld [vmem:[%s2529 + $0x4] sm:$0xf]
        %v2534 = vunpack.c.l.b16 %v2530
        %v2535 = vunpack.c.l.b16 %v2531
        %v2536 = vpack.c.b16 %v2535, %v2534
        %v2538 = vsel %vm2057, %v2536, 0
        %2540 = vmatprep.subr.bf16.mxu0 0
        %2541 = vmatpush1.bf16.msra.mxu0 0
        %2542 = vmatprep.subr.bf16.mxu0 0
        %2543 = vmatpush1.bf16.msra.mxu0 0
        %2544 = vmatprep.subr.bf16.mxu0 0
        %2545 = vmatpush1.bf16.msra.mxu0 0
        %2546 = vmatprep.subr.bf16.mxu0 0
        %2547 = vmatpush1.bf16.msra.mxu0 0
        %2548 = vmatprep.subr.bf16.mxu0 0
        %2549 = vmatpush1.bf16.msra.mxu0 0
        %2550 = vmatprep.subr.bf16.mxu0 0
        %2551 = vmatpush1.bf16.msra.mxu0 0
        %2552 = vmatprep.subr.bf16.mxu0 0
        %2553 = vmatpush1.bf16.msra.mxu0 0
        %2554 = vmatprep.subr.bf16.mxu0 %v2528
        %2555 = vmatpush1.bf16.msra.mxu0 %v2527
        %2556 = vmatprep.subr.bf16.mxu0 0
        %2557 = vmatpush2.bf16.msra.mxu0 0
        %2558 = vmatprep.subr.bf16.mxu0 0
        %2559 = vmatpush2.bf16.msra.mxu0 0
        %2560 = vmatprep.subr.bf16.mxu0 0
        %2561 = vmatpush2.bf16.msra.mxu0 0
        %2562 = vmatprep.subr.bf16.mxu0 0
        %2563 = vmatpush2.bf16.msra.mxu0 0
        %2564 = vmatprep.subr.bf16.mxu0 0
        %2565 = vmatpush2.bf16.msra.mxu0 0
        %2566 = vmatprep.subr.bf16.mxu0 0
        %2567 = vmatpush2.bf16.msra.mxu0 0
        %2568 = vmatprep.subr.bf16.mxu0 0
        %2569 = vmatpush2.bf16.msra.mxu0 0
        %2570 = vmatprep.subr.bf16.mxu0 0
        %2571 = vmatpush2.bf16.msra.mxu0 0
        %2572 = vmatprep.mubr.bf16.mxu0 0
        %2573 = vmatmul.mubr.bf16.gmra.mxu0 %v2538
        %v2574 = vpop.f32.mrf.mxu0
        %v2575 = vadd.f32 0.0, %v2574
        %v2576 = vpop.f32.mrf.mxu0
        %v2577 = vadd.f32 0.0, %v2576
        %v2578 = vpop.f32.mrf.mxu0
        %v2579 = vadd.f32 0.0, %v2578
        %v2580 = vpop.f32.mrf.mxu0
        %v2581 = vadd.f32 0.0, %v2580
        %2582 = vdwg.mxu0
        %v2583 = vadd.f32 %v2511, %v2575
        %v2584 = vadd.f32 %v2512, %v2577
        %v2585 = vadd.f32 %v2513, %v2579
        %v2586 = vadd.f32 %v2514, %v2581
        %2587 = vrot.lane.b32.xlu0 %v2026, 60
        %v2588 = vpop.permute.xlu0 %2587
        %2589 = vrot.lane.b32.xlu0 %v2028, 60
        %v2590 = vpop.permute.xlu0 %2589
        %2591 = vrot.lane.b32.xlu0 %v2027, 60
        %v2592 = vpop.permute.xlu0 %2591
        %2593 = vrot.lane.b32.xlu0 %v2029, 60
        %v2594 = vpop.permute.xlu0 %2593
        %v2595 = vsel %vm1940, %v2588, %v2592
        %v2596 = vsel %vm1940, %v2590, %v2594
        %v2597 = vsel %vm1940, %v2592, %v2588
        %v2598 = vsel %vm1940, %v2594, %v2590
        %v2599 = vpack.c.bf16 %v2596, %v2595
        %v2600 = vpack.c.bf16 %v2598, %v2597
        %s2601 = scalar_lea.vmem %s1, 280
        %v2602 = vld [vmem:[%s2601] sm:$0xf]
        %v2603 = vld [vmem:[%s2601 + $0x4] sm:$0xf]
        %v2606 = vunpack.c.l.b16 %v2602
        %v2607 = vunpack.c.l.b16 %v2603
        %v2608 = vpack.c.b16 %v2607, %v2606
        %v2610 = vsel %vm2057, %v2608, 0
        %2612 = vmatprep.subr.bf16.mxu0 0
        %2613 = vmatpush1.bf16.msra.mxu0 0
        %2614 = vmatprep.subr.bf16.mxu0 0
        %2615 = vmatpush1.bf16.msra.mxu0 0
        %2616 = vmatprep.subr.bf16.mxu0 0
        %2617 = vmatpush1.bf16.msra.mxu0 0
        %2618 = vmatprep.subr.bf16.mxu0 0
        %2619 = vmatpush1.bf16.msra.mxu0 0
        %2620 = vmatprep.subr.bf16.mxu0 0
        %2621 = vmatpush1.bf16.msra.mxu0 0
        %2622 = vmatprep.subr.bf16.mxu0 0
        %2623 = vmatpush1.bf16.msra.mxu0 0
        %2624 = vmatprep.subr.bf16.mxu0 0
        %2625 = vmatpush1.bf16.msra.mxu0 0
        %2626 = vmatprep.subr.bf16.mxu0 %v2600
        %2627 = vmatpush1.bf16.msra.mxu0 %v2599
        %2628 = vmatprep.subr.bf16.mxu0 0
        %2629 = vmatpush2.bf16.msra.mxu0 0
        %2630 = vmatprep.subr.bf16.mxu0 0
        %2631 = vmatpush2.bf16.msra.mxu0 0
        %2632 = vmatprep.subr.bf16.mxu0 0
        %2633 = vmatpush2.bf16.msra.mxu0 0
        %2634 = vmatprep.subr.bf16.mxu0 0
        %2635 = vmatpush2.bf16.msra.mxu0 0
        %2636 = vmatprep.subr.bf16.mxu0 0
        %2637 = vmatpush2.bf16.msra.mxu0 0
        %2638 = vmatprep.subr.bf16.mxu0 0
        %2639 = vmatpush2.bf16.msra.mxu0 0
        %2640 = vmatprep.subr.bf16.mxu0 0
        %2641 = vmatpush2.bf16.msra.mxu0 0
        %2642 = vmatprep.subr.bf16.mxu0 0
        %2643 = vmatpush2.bf16.msra.mxu0 0
        %2644 = vmatprep.mubr.bf16.mxu0 0
        %2645 = vmatmul.mubr.bf16.gmra.mxu0 %v2610
        %v2646 = vpop.f32.mrf.mxu0
        %v2647 = vadd.f32 0.0, %v2646
        %v2648 = vpop.f32.mrf.mxu0
        %v2649 = vadd.f32 0.0, %v2648
        %v2650 = vpop.f32.mrf.mxu0
        %v2651 = vadd.f32 0.0, %v2650
        %v2652 = vpop.f32.mrf.mxu0
        %v2653 = vadd.f32 0.0, %v2652
        %2654 = vdwg.mxu0
        %v2655 = vadd.f32 %v2583, %v2647
        %v2656 = vadd.f32 %v2584, %v2649
        %v2657 = vadd.f32 %v2585, %v2651
        %v2658 = vadd.f32 %v2586, %v2653
        %s2659 = scalar_lea.vmem %s2, 48
        %v2660 = vld [vmem:[%s2659] sm:$0xff]
        %v2661 = vld [vmem:[%s2659 + $0x8] sm:$0xff]
        %2663 = vset.pattern.permute.xlu0 0
        %2664 = vperm.xlu0 %2663, %v2660
        %v2665 = vpop.permute.xlu0 %2664
        %2668 = vset.pattern.permute.xlu0 0
        %2669 = vperm.xlu0 %2668, %v2661
        %v2670 = vpop.permute.xlu0 %2669
        %v2672 = vadd.f32 %v2655, %v2665
        %v2673 = vadd.f32 %v2656, %v2665
        %v2674 = vadd.f32 %v2657, %v2670
        %v2675 = vadd.f32 %v2658, %v2670
        %2676 = vst [vmem:[%s202] sm:$0xff] %v2672
        %2677 = vst [vmem:[%s202 + $0x8] sm:$0xff] %v2673
        %2678 = vst [vmem:[%s202 + $0x10] sm:$0xff] %v2674
        %2679 = vst [vmem:[%s202 + $0x18] sm:$0xff] %v2675
        %s2680 = sand.u32 %s98, 1
        %s2681 = scalar_lea.sflag [#allocation3], %s2680
        %s2682 = sand.u32 %s98, 1
        %s2683 = smul.addr %s2682, 16
        %s2684 = scalar_lea.vmem [#allocation2], %s2683
        %s2685 = sand.u32 %s124, 1
        %s2686 = scalar_lea.sflag [#allocation5], %s2685
        %s2687 = sand.u32 %s124, 1
        %s2688 = smul.addr %s2687, 32
        %s2689 = scalar_lea.vmem [#allocation4], %s2688
        // Predicated region
        $region33: #{tpu_custom_call.1} parent=31 // pred_check
          %p2690 = pneg %p108
        $region34: #{tpu_custom_call.1} parent=31 // pred_check_branch
          %2692 = sbr.rel (%p2690) target = $region36
        $region35: #{tpu_custom_call.1} parent=31 // pred_region
          %s2693 = smul.u32 2, %s22
          %s2695 = ssub.s32 256, 256
          %2696 = vsyncadd %s2681, %s2695
          %s2697 = smul.addr %s2693, 128
          %s2698 = scalar_lea.hbm %s3, %s2697
          %s2700 = sshll.u32 %s2684, 4
          %s2701 = int_to_ptr.vmem [resolvable:$true] %s2700
          %2703 = dma.vmem_to_hbm [thread:$0]  %s2701, 256, %s2698, %s2681
        $region36: #{tpu_custom_call.1} parent=31 // pred_fallthru
          _
        // Predicated region
        $region37: #{tpu_custom_call.1} parent=31 // pred_check
          %p2704 = pneg %p134
        $region38: #{tpu_custom_call.1} parent=31 // pred_check_branch
          %2706 = sbr.rel (%p2704) target = $region40
        $region39: #{tpu_custom_call.1} parent=31 // pred_region
          %s2707 = smul.u32 2, %s22
          %s2709 = ssub.s32 512, 512
          %2710 = vsyncadd %s2686, %s2709
          %s2711 = smul.addr %s2707, 128
          %s2712 = scalar_lea.hbm %s4, %s2711
          %s2713 = sshll.u32 %s2689, 4
          %s2714 = int_to_ptr.vmem [resolvable:$true] %s2713
          %2719 = dma.vmem_to_hbm [thread:$0]  %s2714, 512, %s2712, %s2686, 256, 512, 16
        $region40: #{tpu_custom_call.1} parent=31 // pred_fallthru
          _
      $region32: #{tpu_custom_call.1} parent=5 // pred_fallthru
        _
      %p2720 = scmp.le.s32.totalorder 2, %s17
      // Predicated region
      $region41: #{tpu_custom_call.1} parent=5 // pred_check
        %p2721 = pneg %p2720
      $region42: #{tpu_custom_call.1} parent=5 // pred_check_branch
        %2723 = sbr.rel (%p2721) target = $region44
      $region43: #{tpu_custom_call.1} parent=5 // pred_region
        %s2724 = ssub.s32 %s17, 2
        // Predicated region
        $region45: #{tpu_custom_call.1} parent=43 // pred_check
          %p2725 = pneg %p114
        $region46: #{tpu_custom_call.1} parent=43 // pred_check_branch
          %2727 = sbr.rel (%p2725) target = $region48
        $region47: #{tpu_custom_call.1} parent=43 // pred_region
          %s2728 = sand.u32 %s99, 1
          %s2729 = scalar_lea.sflag [#allocation3], %s2728
          %s2730 = sand.u32 %s99, 1
          %s2731 = smul.addr %s2730, 16
          %s2732 = scalar_lea.vmem [#allocation2], %s2731
          %2733 = dma.done %s2729, 256
        $region48: #{tpu_custom_call.1} parent=43 // pred_fallthru
          _
        // Predicated region
        $region49: #{tpu_custom_call.1} parent=43 // pred_check
          %p2734 = pneg %p140
        $region50: #{tpu_custom_call.1} parent=43 // pred_check_branch
          %2736 = sbr.rel (%p2734) target = $region52
        $region51: #{tpu_custom_call.1} parent=43 // pred_region
          %s2737 = sand.u32 %s125, 1
          %s2738 = scalar_lea.sflag [#allocation5], %s2737
          %s2739 = sand.u32 %s125, 1
          %s2740 = smul.addr %s2739, 32
          %s2741 = scalar_lea.vmem [#allocation4], %s2740
          %2742 = dma.done %s2738, 512
        $region52: #{tpu_custom_call.1} parent=43 // pred_fallthru
          _
      $region44: #{tpu_custom_call.1} parent=5 // pred_fallthru
        _
    $region6: #{tpu_custom_call.1} parent=1 // loop_footer
      %s21 = sadd.s32 1, %s17
    $region7: #{tpu_custom_call.1} parent=1 // loop_footer_branch
      %16 = sbr.rel target = $region3
    $region8: #{tpu_custom_call.1} parent=1 // loop_exit
      _
    %2743 = vsyncpa [#allocation3], 1
    %s2744 = scalar_lea.sflag [#allocation3], 1
    %2745 = vsyncpa %s2744, 1
    %2746 = vsyncpa [#allocation5], 1
    %s2747 = scalar_lea.sflag [#allocation5], 1
    %2748 = vsyncpa %s2747, 1

</llo_original>
